<compile_context>
chip_gen: v7x
topology: tpu7x:2x2x1
jax: 0.10.0
libtpu: 0.0.40
codegen_flags: <defaults>
</compile_context>

<pallas_src>
import functools

import jax
import jax.numpy as jnp
from jax.experimental import pallas as pl
from jax.experimental.pallas import tpu as pltpu

# Logical MLP dimensions from the PyTorch module.
D_IN, D_H1, D_H2, D_H3, D_OUT = 10, 500, 1000, 100, 1
# Lane-padded feature dims used inside the kernel (zero padding => exact math).
D_IN_PAD, D_H3_PAD = 128, 128


def _round_up(n, m):
    return (n + m - 1) // m * m


def mlp_kernel(x_ref, w1_ref, b1_ref, w2_ref, b2_ref, w3_ref, b3_ref,
               w4_ref, b4_ref, o_ref):
    # Layer 1: Linear(10->500, input padded to 128) + tanh.
    # bf16 matmul operands, f32 accumulation; bias add + tanh kept in f32.
    h = jnp.dot(x_ref[...].astype(jnp.bfloat16), w1_ref[...],
                preferred_element_type=jnp.float32) + b1_ref[...]
    h = jnp.tanh(h)
    # Layer 2: Linear(500 -> 1000) + tanh.
    h = jnp.dot(h.astype(jnp.bfloat16), w2_ref[...],
                preferred_element_type=jnp.float32) + b2_ref[...]
    h = jnp.tanh(h)
    # Layer 3: Linear(1000 -> 100, padded to 128) + tanh.
    # Padded lanes have 0-weight and 0-bias -> tanh(0) = 0, so they contribute
    # nothing to layer 4.
    h = jnp.dot(h.astype(jnp.bfloat16), w3_ref[...],
                preferred_element_type=jnp.float32) + b3_ref[...]
    h = jnp.tanh(h)
    # Layer 4: Linear(100 -> 1) as a VPU multiply + lane reduction (an N=1
    # matmul would waste a full MXU pass for one output column).
    o_ref[...] = jnp.sum(h * w4_ref[...], axis=-1, keepdims=True) + b4_ref[...]


def mlp_forward(x, params, *, tile_b=256, single_buffer_weights=True):
    """x: [B, 10] float32. params: padded/bf16 dict from pack_params()."""
    B = x.shape[0]
    # Large batch tiles keep the MXU full; don't over-pad tiny batches.
    eff_tile = min(tile_b, _round_up(B, 8))
    B_pad = _round_up(B, eff_tile)

    # Pad batch to a tile multiple and features 10 -> 128 (zeros).
    x_pad = jnp.zeros((B_pad, D_IN_PAD), jnp.float32)
    x_pad = x_pad.at[:B, :D_IN].set(x.astype(jnp.float32))

    w1, b1 = params["w1"], params["b1"]
    w2, b2 = params["w2"], params["b2"]
    w3, b3 = params["w3"], params["b3"]
    w4, b4 = params["w4"], params["b4"]

    def const_spec(shape):
        # Whole (constant-index) block at every grid step; single-buffer it so
        # the ~1 MB w2 tile is not pointlessly double-buffered.
        if single_buffer_weights:
            return pl.BlockSpec(shape, lambda i: (0, 0),
                                pipeline_mode=pl.Buffered(1))
        return pl.BlockSpec(shape, lambda i: (0, 0))

    grid = (B_pad // eff_tile,)

    flops = 2 * B_pad * (D_IN_PAD * D_H1 + D_H1 * D_H2 + D_H2 * D_H3_PAD
                         + D_H3_PAD)
    transcendentals = B_pad * (D_H1 + D_H2 + D_H3_PAD)
    bytes_accessed = (
        2 * (D_IN_PAD * D_H1 + D_H1 * D_H2 + D_H2 * D_H3_PAD)    # bf16 weights
        + 4 * (D_H1 + D_H2 + 2 * D_H3_PAD + D_OUT)               # f32 biases + w4 row
        + B_pad * D_IN_PAD * 4 + B_pad * D_OUT * 4)              # input + output

    out = pl.pallas_call(
        mlp_kernel,
        out_shape=jax.ShapeDtypeStruct((B_pad, D_OUT), jnp.float32),
        grid_spec=pltpu.PrefetchScalarGridSpec(
            num_scalar_prefetch=0,
            grid=grid,
            in_specs=[
                pl.BlockSpec((eff_tile, D_IN_PAD), lambda i: (i, 0)),    # x
                const_spec((D_IN_PAD, D_H1)), const_spec((1, D_H1)),     # w1, b1
                const_spec((D_H1, D_H2)), const_spec((1, D_H2)),         # w2, b2
                const_spec((D_H2, D_H3_PAD)), const_spec((1, D_H3_PAD)), # w3, b3
                const_spec((1, D_H3_PAD)), const_spec((1, D_OUT)),       # w4, b4
            ],
            out_specs=pl.BlockSpec((eff_tile, D_OUT), lambda i: (i, 0)),
        ),
        compiler_params=pltpu.CompilerParams(
            dimension_semantics=("parallel",)),
        cost_estimate=pl.CostEstimate(
            flops=flops, transcendentals=transcendentals,
            bytes_accessed=bytes_accessed),
    )(x_pad, w1, b1, w2, b2, w3, b3, w4, b4)
    return out[:B]


def init_params(key):
    """Unpadded f32 params mimicking nn.Linear's U(-1/sqrt(fan_in), ...).

    Weights are stored transposed relative to PyTorch: (in_features, out_features).
    """
    dims = [(D_IN, D_H1), (D_H1, D_H2), (D_H2, D_H3), (D_H3, D_OUT)]
    raw = {}
    for idx, (fan_in, fan_out) in enumerate(dims, start=1):
        key, kw, kb = jax.random.split(key, 3)
        bound = fan_in ** -0.5
        raw[f"w{idx}"] = jax.random.uniform(
            kw, (fan_in, fan_out), jnp.float32, -bound, bound)
        raw[f"b{idx}"] = jax.random.uniform(
            kb, (1, fan_out), jnp.float32, -bound, bound)
    return raw


def pack_params(raw):
    """Pad awkward feature dims to 128 and cast matmul weights to bf16."""
    w1 = jnp.zeros((D_IN_PAD, D_H1), jnp.float32).at[:D_IN].set(raw["w1"])
    w3 = jnp.zeros((D_H2, D_H3_PAD), jnp.float32).at[:, :D_H3].set(raw["w3"])
    b3 = jnp.zeros((1, D_H3_PAD), jnp.float32).at[:, :D_H3].set(raw["b3"])
    # w4 stored as a (1, 128) f32 row for the VPU multiply + lane reduction.
    w4 = jnp.zeros((1, D_H3_PAD), jnp.float32).at[:, :D_H3].set(
        raw["w4"][:, 0][None, :])
    return dict(
        w1=w1.astype(jnp.bfloat16), b1=raw["b1"],
        w2=raw["w2"].astype(jnp.bfloat16), b2=raw["b2"],
        w3=w3.astype(jnp.bfloat16), b3=b3,
        w4=w4, b4=raw["b4"],
    )


def mlp_reference_f32(x, raw):
    """Exact f32 forward of the original PyTorch module."""
    h = jnp.tanh(x @ raw["w1"] + raw["b1"])
    h = jnp.tanh(h @ raw["w2"] + raw["b2"])
    h = jnp.tanh(h @ raw["w3"] + raw["b3"])
    return h @ raw["w4"] + raw["b4"]


def mlp_reference_bf16(x, packed):
    """Same math as the kernel (padded, bf16 matmul operands), in plain XLA."""
    xp = jnp.zeros((x.shape[0], D_IN_PAD), jnp.float32).at[:, :D_IN].set(x)
    h = jnp.tanh(jnp.dot(xp.astype(jnp.bfloat16), packed["w1"],
                         preferred_element_type=jnp.float32) + packed["b1"])
    h = jnp.tanh(jnp.dot(h.astype(jnp.bfloat16), packed["w2"],
                         preferred_element_type=jnp.float32) + packed["b2"])
    h = jnp.tanh(jnp.dot(h.astype(jnp.bfloat16), packed["w3"],
                         preferred_element_type=jnp.float32) + packed["b3"])
    return jnp.sum(h * packed["w4"], axis=-1, keepdims=True) + packed["b4"]


if __name__ == "__main__":
    key = jax.random.PRNGKey(0)
    key, kx = jax.random.split(key)

    B = 16  # small smoke-test batch; real workloads should use B >= 256
    x = jax.random.normal(kx, (B, D_IN), jnp.float32)

    raw = init_params(key)
    params = pack_params(raw)

    fwd = jax.jit(functools.partial(mlp_forward, tile_b=256))
    try:
        out = jax.block_until_ready(fwd(x, params))
    except Exception:
        # Older Pallas without pipeline_mode=pl.Buffered: fall back to the
        # default (double-buffered) constant-weight specs.
        fwd = jax.jit(functools.partial(mlp_forward, tile_b=256,
                                        single_buffer_weights=False))
        out = jax.block_until_ready(fwd(x, params))

    ref_same_math = jax.block_until_ready(mlp_reference_bf16(x, params))
    ref_f32 = jax.block_until_ready(mlp_reference_f32(x, raw))

    assert out.shape == (B, D_OUT)
    assert jnp.allclose(out, ref_same_math, rtol=1e-2, atol=1e-3), (
        f"kernel vs XLA(bf16) mismatch: max abs diff "
        f"{jnp.max(jnp.abs(out - ref_same_math))}")
    assert jnp.allclose(out, ref_f32, rtol=1e-1, atol=5e-2), (
        f"kernel vs f32 reference mismatch: max abs diff "
        f"{jnp.max(jnp.abs(out - ref_f32))}")

    print("KERNEL_OK")
</pallas_src>

<mosaic_0001>
module attributes {stable_mosaic.version = 11 : i64} {
  func.func @mlp_kernel(%arg0: i32, %arg1: memref<16x128xf32, #tpu.memory_space<vmem>>, %arg2: memref<128x500xbf16, #tpu.memory_space<vmem>>, %arg3: memref<1x500xf32, #tpu.memory_space<vmem>>, %arg4: memref<500x1000xbf16, #tpu.memory_space<vmem>>, %arg5: memref<1x1000xf32, #tpu.memory_space<vmem>>, %arg6: memref<1000x128xbf16, #tpu.memory_space<vmem>>, %arg7: memref<1x128xf32, #tpu.memory_space<vmem>>, %arg8: memref<1x128xf32, #tpu.memory_space<vmem>>, %arg9: memref<1x1xf32, #tpu.memory_space<vmem>>, %arg10: memref<16x1xf32, #tpu.memory_space<vmem>>) attributes {dimension_semantics = [#tpu.dimension_semantics<parallel>], iteration_bounds = array<i64: 1>, scalar_prefetch = 0 : i64, scratch_operands = 0 : i64, tpu.core_type = #tpu.core_type<tc>, window_params = [{transform_indices = @transform_0, window_bounds = array<i64: 16, 128>}, {pipeline_mode = #tpu.pipeline_mode<synchronous>, transform_indices = @transform_1, window_bounds = array<i64: 128, 500>}, {pipeline_mode = #tpu.pipeline_mode<synchronous>, transform_indices = @transform_2, window_bounds = array<i64: 1, 500>}, {pipeline_mode = #tpu.pipeline_mode<synchronous>, transform_indices = @transform_3, window_bounds = array<i64: 500, 1000>}, {pipeline_mode = #tpu.pipeline_mode<synchronous>, transform_indices = @transform_4, window_bounds = array<i64: 1, 1000>}, {pipeline_mode = #tpu.pipeline_mode<synchronous>, transform_indices = @transform_5, window_bounds = array<i64: 1000, 128>}, {pipeline_mode = #tpu.pipeline_mode<synchronous>, transform_indices = @transform_6, window_bounds = array<i64: 1, 128>}, {pipeline_mode = #tpu.pipeline_mode<synchronous>, transform_indices = @transform_7, window_bounds = array<i64: 1, 128>}, {pipeline_mode = #tpu.pipeline_mode<synchronous>, transform_indices = @transform_8, window_bounds = array<i64: 1, 1>}, {transform_indices = @transform_9, window_bounds = array<i64: 16, 1>}]} {
    %c0 = arith.constant 0 : index
    %c0_0 = arith.constant 0 : index
    %0 = vector.load %arg1[%c0, %c0_0] : memref<16x128xf32, #tpu.memory_space<vmem>>, vector<16x128xf32>
    %1 = arith.truncf %0 : vector<16x128xf32> to vector<16x128xbf16>
    %c0_1 = arith.constant 0 : index
    %c0_2 = arith.constant 0 : index
    %2 = vector.load %arg2[%c0_1, %c0_2] : memref<128x500xbf16, #tpu.memory_space<vmem>>, vector<128x500xbf16>
    %cst = arith.constant dense<0.000000e+00> : vector<16x500xf32>
    %3 = tpu.matmul %1, %2, %cst {dimension_numbers = #tpu.dot_dimension_numbers<[1], [0], [0], [1], [0, 0, 1, 1], [], []>} : vector<16x128xbf16>, vector<128x500xbf16>, vector<16x500xf32> -> vector<16x500xf32>
    %c0_3 = arith.constant 0 : index
    %c0_4 = arith.constant 0 : index
    %4 = vector.load %arg3[%c0_3, %c0_4] : memref<1x500xf32, #tpu.memory_space<vmem>>, vector<1x500xf32>
    %5 = vector.broadcast %4 : vector<1x500xf32> to vector<16x500xf32>
    %6 = arith.addf %3, %5 : vector<16x500xf32>
    %7 = math.tanh %6 : vector<16x500xf32>
    %8 = arith.truncf %7 : vector<16x500xf32> to vector<16x500xbf16>
    %c0_5 = arith.constant 0 : index
    %c0_6 = arith.constant 0 : index
    %9 = vector.load %arg4[%c0_5, %c0_6] : memref<500x1000xbf16, #tpu.memory_space<vmem>>, vector<500x1000xbf16>
    %cst_7 = arith.constant dense<0.000000e+00> : vector<16x1000xf32>
    %10 = tpu.matmul %8, %9, %cst_7 {dimension_numbers = #tpu.dot_dimension_numbers<[1], [0], [0], [1], [0, 0, 1, 1], [], []>} : vector<16x500xbf16>, vector<500x1000xbf16>, vector<16x1000xf32> -> vector<16x1000xf32>
    %c0_8 = arith.constant 0 : index
    %c0_9 = arith.constant 0 : index
    %11 = vector.load %arg5[%c0_8, %c0_9] : memref<1x1000xf32, #tpu.memory_space<vmem>>, vector<1x1000xf32>
    %12 = vector.broadcast %11 : vector<1x1000xf32> to vector<16x1000xf32>
    %13 = arith.addf %10, %12 : vector<16x1000xf32>
    %14 = math.tanh %13 : vector<16x1000xf32>
    %15 = arith.truncf %14 : vector<16x1000xf32> to vector<16x1000xbf16>
    %c0_10 = arith.constant 0 : index
    %c0_11 = arith.constant 0 : index
    %16 = vector.load %arg6[%c0_10, %c0_11] : memref<1000x128xbf16, #tpu.memory_space<vmem>>, vector<1000x128xbf16>
    %cst_12 = arith.constant dense<0.000000e+00> : vector<16x128xf32>
    %17 = tpu.matmul %15, %16, %cst_12 {dimension_numbers = #tpu.dot_dimension_numbers<[1], [0], [0], [1], [0, 0, 1, 1], [], []>} : vector<16x1000xbf16>, vector<1000x128xbf16>, vector<16x128xf32> -> vector<16x128xf32>
    %c0_13 = arith.constant 0 : index
    %c0_14 = arith.constant 0 : index
    %18 = vector.load %arg7[%c0_13, %c0_14] : memref<1x128xf32, #tpu.memory_space<vmem>>, vector<1x128xf32>
    %19 = vector.broadcast %18 : vector<1x128xf32> to vector<16x128xf32>
    %20 = arith.addf %17, %19 : vector<16x128xf32>
    %21 = math.tanh %20 : vector<16x128xf32>
    %c0_15 = arith.constant 0 : index
    %c0_16 = arith.constant 0 : index
    %22 = vector.load %arg8[%c0_15, %c0_16] : memref<1x128xf32, #tpu.memory_space<vmem>>, vector<1x128xf32>
    %23 = vector.broadcast %22 : vector<1x128xf32> to vector<16x128xf32>
    %24 = arith.mulf %21, %23 : vector<16x128xf32>
    %cst_17 = arith.constant dense<0.000000e+00> : vector<16xf32>
    %25 = vector.multi_reduction <add>, %24, %cst_17 [1] : vector<16x128xf32> to vector<16xf32>
    %26 = vector.shape_cast %25 : vector<16xf32> to vector<16x1xf32>
    %c0_18 = arith.constant 0 : index
    %c0_19 = arith.constant 0 : index
    %27 = vector.load %arg9[%c0_18, %c0_19] : memref<1x1xf32, #tpu.memory_space<vmem>>, vector<1x1xf32>
    %28 = vector.broadcast %27 : vector<1x1xf32> to vector<16x1xf32>
    %29 = arith.addf %26, %28 : vector<16x1xf32>
    %c0_20 = arith.constant 0 : index
    %c0_21 = arith.constant 0 : index
    %30 = vector.load %arg10[%c0_20, %c0_21] : memref<16x1xf32, #tpu.memory_space<vmem>>, vector<16x1xf32>
    tpu.vector_store %arg10[%c0_20, %c0_21], %29 {strides = array<i32>} : memref<16x1xf32, #tpu.memory_space<vmem>>, vector<16x1xf32>,
    return
  }
  func.func @transform_0(%arg0: i32) -> (i32, i32) {
    %c0_i32 = arith.constant 0 : i32
    %c0_i32_0 = arith.constant 0 : i32
    return %arg0, %c0_i32 : i32, i32
  }
  func.func @transform_1(%arg0: i32) -> (i32, i32) {
    %c0_i32 = arith.constant 0 : i32
    %c0_i32_0 = arith.constant 0 : i32
    %c0_i32_1 = arith.constant 0 : i32
    return %c0_i32, %c0_i32_0 : i32, i32
  }
  func.func @transform_2(%arg0: i32) -> (i32, i32) {
    %c0_i32 = arith.constant 0 : i32
    %c0_i32_0 = arith.constant 0 : i32
    %c0_i32_1 = arith.constant 0 : i32
    return %c0_i32, %c0_i32_0 : i32, i32
  }
  func.func @transform_3(%arg0: i32) -> (i32, i32) {
    %c0_i32 = arith.constant 0 : i32
    %c0_i32_0 = arith.constant 0 : i32
    %c0_i32_1 = arith.constant 0 : i32
    return %c0_i32, %c0_i32_0 : i32, i32
  }
  func.func @transform_4(%arg0: i32) -> (i32, i32) {
    %c0_i32 = arith.constant 0 : i32
    %c0_i32_0 = arith.constant 0 : i32
    %c0_i32_1 = arith.constant 0 : i32
    return %c0_i32, %c0_i32_0 : i32, i32
  }
  func.func @transform_5(%arg0: i32) -> (i32, i32) {
    %c0_i32 = arith.constant 0 : i32
    %c0_i32_0 = arith.constant 0 : i32
    %c0_i32_1 = arith.constant 0 : i32
    return %c0_i32, %c0_i32_0 : i32, i32
  }
  func.func @transform_6(%arg0: i32) -> (i32, i32) {
    %c0_i32 = arith.constant 0 : i32
    %c0_i32_0 = arith.constant 0 : i32
    %c0_i32_1 = arith.constant 0 : i32
    return %c0_i32, %c0_i32_0 : i32, i32
  }
  func.func @transform_7(%arg0: i32) -> (i32, i32) {
    %c0_i32 = arith.constant 0 : i32
    %c0_i32_0 = arith.constant 0 : i32
    %c0_i32_1 = arith.constant 0 : i32
    return %c0_i32, %c0_i32_0 : i32, i32
  }
  func.func @transform_8(%arg0: i32) -> (i32, i32) {
    %c0_i32 = arith.constant 0 : i32
    %c0_i32_0 = arith.constant 0 : i32
    %c0_i32_1 = arith.constant 0 : i32
    return %c0_i32, %c0_i32_0 : i32, i32
  }
  func.func @transform_9(%arg0: i32) -> (i32, i32) {
    %c0_i32 = arith.constant 0 : i32
    %c0_i32_0 = arith.constant 0 : i32
    return %arg0, %c0_i32 : i32, i32
  }
}

module attributes {stable_mosaic.version = 11 : i64} {
  func.func @mlp_kernel(%arg0: i32, %arg1: memref<16x128xf32, #tpu.memory_space<vmem>>, %arg2: memref<128x500xbf16, #tpu.memory_space<vmem>>, %arg3: memref<1x500xf32, #tpu.memory_space<vmem>>, %arg4: memref<500x1000xbf16, #tpu.memory_space<vmem>>, %arg5: memref<1x1000xf32, #tpu.memory_space<vmem>>, %arg6: memref<1000x128xbf16, #tpu.memory_space<vmem>>, %arg7: memref<1x128xf32, #tpu.memory_space<vmem>>, %arg8: memref<1x128xf32, #tpu.memory_space<vmem>>, %arg9: memref<1x1xf32, #tpu.memory_space<vmem>>, %arg10: memref<16x1xf32, #tpu.memory_space<vmem>>) attributes {dimension_semantics = [#tpu.dimension_semantics<parallel>], iteration_bounds = array<i64: 1>, scalar_prefetch = 0 : i64, scratch_operands = 0 : i64, tpu.core_type = #tpu.core_type<tc>, window_params = [{transform_indices = @transform_0, window_bounds = array<i64: 16, 128>}, {pipeline_mode = #tpu.pipeline_mode<synchronous>, transform_indices = @transform_1, window_bounds = array<i64: 128, 500>}, {pipeline_mode = #tpu.pipeline_mode<synchronous>, transform_indices = @transform_2, window_bounds = array<i64: 1, 500>}, {pipeline_mode = #tpu.pipeline_mode<synchronous>, transform_indices = @transform_3, window_bounds = array<i64: 500, 1000>}, {pipeline_mode = #tpu.pipeline_mode<synchronous>, transform_indices = @transform_4, window_bounds = array<i64: 1, 1000>}, {pipeline_mode = #tpu.pipeline_mode<synchronous>, transform_indices = @transform_5, window_bounds = array<i64: 1000, 128>}, {pipeline_mode = #tpu.pipeline_mode<synchronous>, transform_indices = @transform_6, window_bounds = array<i64: 1, 128>}, {pipeline_mode = #tpu.pipeline_mode<synchronous>, transform_indices = @transform_7, window_bounds = array<i64: 1, 128>}, {pipeline_mode = #tpu.pipeline_mode<synchronous>, transform_indices = @transform_8, window_bounds = array<i64: 1, 1>}, {transform_indices = @transform_9, window_bounds = array<i64: 16, 1>}]} {
    %c0 = arith.constant 0 : index
    %c0_0 = arith.constant 0 : index
    %0 = vector.load %arg1[%c0, %c0_0] : memref<16x128xf32, #tpu.memory_space<vmem>>, vector<16x128xf32>
    %1 = arith.truncf %0 : vector<16x128xf32> to vector<16x128xbf16>
    %c0_1 = arith.constant 0 : index
    %c0_2 = arith.constant 0 : index
    %2 = vector.load %arg2[%c0_1, %c0_2] : memref<128x500xbf16, #tpu.memory_space<vmem>>, vector<128x500xbf16>
    %cst = arith.constant dense<0.000000e+00> : vector<16x500xf32>
    %3 = tpu.matmul %1, %2, %cst {dimension_numbers = #tpu.dot_dimension_numbers<[1], [0], [0], [1], [0, 0, 1, 1], [], []>} : vector<16x128xbf16>, vector<128x500xbf16>, vector<16x500xf32> -> vector<16x500xf32>
    %c0_3 = arith.constant 0 : index
    %c0_4 = arith.constant 0 : index
    %4 = vector.load %arg3[%c0_3, %c0_4] : memref<1x500xf32, #tpu.memory_space<vmem>>, vector<1x500xf32>
    %5 = vector.broadcast %4 : vector<1x500xf32> to vector<16x500xf32>
    %6 = arith.addf %3, %5 : vector<16x500xf32>
    %7 = math.tanh %6 : vector<16x500xf32>
    %8 = arith.truncf %7 : vector<16x500xf32> to vector<16x500xbf16>
    %c0_5 = arith.constant 0 : index
    %c0_6 = arith.constant 0 : index
    %9 = vector.load %arg4[%c0_5, %c0_6] : memref<500x1000xbf16, #tpu.memory_space<vmem>>, vector<500x1000xbf16>
    %cst_7 = arith.constant dense<0.000000e+00> : vector<16x1000xf32>
    %10 = tpu.matmul %8, %9, %cst_7 {dimension_numbers = #tpu.dot_dimension_numbers<[1], [0], [0], [1], [0, 0, 1, 1], [], []>} : vector<16x500xbf16>, vector<500x1000xbf16>, vector<16x1000xf32> -> vector<16x1000xf32>
    %c0_8 = arith.constant 0 : index
    %c0_9 = arith.constant 0 : index
    %11 = vector.load %arg5[%c0_8, %c0_9] : memref<1x1000xf32, #tpu.memory_space<vmem>>, vector<1x1000xf32>
    %12 = vector.broadcast %11 : vector<1x1000xf32> to vector<16x1000xf32>
    %13 = arith.addf %10, %12 : vector<16x1000xf32>
    %14 = math.tanh %13 : vector<16x1000xf32>
    %15 = arith.truncf %14 : vector<16x1000xf32> to vector<16x1000xbf16>
    %c0_10 = arith.constant 0 : index
    %c0_11 = arith.constant 0 : index
    %16 = vector.load %arg6[%c0_10, %c0_11] : memref<1000x128xbf16, #tpu.memory_space<vmem>>, vector<1000x128xbf16>
    %cst_12 = arith.constant dense<0.000000e+00> : vector<16x128xf32>
    %17 = tpu.matmul %15, %16, %cst_12 {dimension_numbers = #tpu.dot_dimension_numbers<[1], [0], [0], [1], [0, 0, 1, 1], [], []>} : vector<16x1000xbf16>, vector<1000x128xbf16>, vector<16x128xf32> -> vector<16x128xf32>
    %c0_13 = arith.constant 0 : index
    %c0_14 = arith.constant 0 : index
    %18 = vector.load %arg7[%c0_13, %c0_14] : memref<1x128xf32, #tpu.memory_space<vmem>>, vector<1x128xf32>
    %19 = vector.broadcast %18 : vector<1x128xf32> to vector<16x128xf32>
    %20 = arith.addf %17, %19 : vector<16x128xf32>
    %21 = math.tanh %20 : vector<16x128xf32>
    %c0_15 = arith.constant 0 : index
    %c0_16 = arith.constant 0 : index
    %22 = vector.load %arg8[%c0_15, %c0_16] : memref<1x128xf32, #tpu.memory_space<vmem>>, vector<1x128xf32>
    %23 = vector.broadcast %22 : vector<1x128xf32> to vector<16x128xf32>
    %24 = arith.mulf %21, %23 : vector<16x128xf32>
    %cst_17 = arith.constant dense<0.000000e+00> : vector<16xf32>
    %25 = vector.multi_reduction <add>, %24, %cst_17 [1] : vector<16x128xf32> to vector<16xf32>
    %26 = vector.shape_cast %25 : vector<16xf32> to vector<16x1xf32>
    %c0_18 = arith.constant 0 : index
    %c0_19 = arith.constant 0 : index
    %27 = vector.load %arg9[%c0_18, %c0_19] : memref<1x1xf32, #tpu.memory_space<vmem>>, vector<1x1xf32>
    %28 = vector.broadcast %27 : vector<1x1xf32> to vector<16x1xf32>
    %29 = arith.addf %26, %28 : vector<16x1xf32>
    %c0_20 = arith.constant 0 : index
    %c0_21 = arith.constant 0 : index
    %30 = vector.load %arg10[%c0_20, %c0_21] : memref<16x1xf32, #tpu.memory_space<vmem>>, vector<16x1xf32>
    tpu.vector_store %arg10[%c0_20, %c0_21], %29 {strides = array<i32>} : memref<16x1xf32, #tpu.memory_space<vmem>>, vector<16x1xf32>,
    return
  }
  func.func @transform_0(%arg0: i32) -> (i32, i32) {
    %c0_i32 = arith.constant 0 : i32
    %c0_i32_0 = arith.constant 0 : i32
    return %arg0, %c0_i32 : i32, i32
  }
  func.func @transform_1(%arg0: i32) -> (i32, i32) {
    %c0_i32 = arith.constant 0 : i32
    %c0_i32_0 = arith.constant 0 : i32
    %c0_i32_1 = arith.constant 0 : i32
    return %c0_i32, %c0_i32_0 : i32, i32
  }
  func.func @transform_2(%arg0: i32) -> (i32, i32) {
    %c0_i32 = arith.constant 0 : i32
    %c0_i32_0 = arith.constant 0 : i32
    %c0_i32_1 = arith.constant 0 : i32
    return %c0_i32, %c0_i32_0 : i32, i32
  }
  func.func @transform_3(%arg0: i32) -> (i32, i32) {
    %c0_i32 = arith.constant 0 : i32
    %c0_i32_0 = arith.constant 0 : i32
    %c0_i32_1 = arith.constant 0 : i32
    return %c0_i32, %c0_i32_0 : i32, i32
  }
  func.func @transform_4(%arg0: i32) -> (i32, i32) {
    %c0_i32 = arith.constant 0 : i32
    %c0_i32_0 = arith.constant 0 : i32
    %c0_i32_1 = arith.constant 0 : i32
    return %c0_i32, %c0_i32_0 : i32, i32
  }
  func.func @transform_5(%arg0: i32) -> (i32, i32) {
    %c0_i32 = arith.constant 0 : i32
    %c0_i32_0 = arith.constant 0 : i32
    %c0_i32_1 = arith.constant 0 : i32
    return %c0_i32, %c0_i32_0 : i32, i32
  }
  func.func @transform_6(%arg0: i32) -> (i32, i32) {
    %c0_i32 = arith.constant 0 : i32
    %c0_i32_0 = arith.constant 0 : i32
    %c0_i32_1 = arith.constant 0 : i32
    return %c0_i32, %c0_i32_0 : i32, i32
  }
  func.func @transform_7(%arg0: i32) -> (i32, i32) {
    %c0_i32 = arith.constant 0 : i32
    %c0_i32_0 = arith.constant 0 : i32
    %c0_i32_1 = arith.constant 0 : i32
    return %c0_i32, %c0_i32_0 : i32, i32
  }
  func.func @transform_8(%arg0: i32) -> (i32, i32) {
    %c0_i32 = arith.constant 0 : i32
    %c0_i32_0 = arith.constant 0 : i32
    %c0_i32_1 = arith.constant 0 : i32
    return %c0_i32, %c0_i32_0 : i32, i32
  }
  func.func @transform_9(%arg0: i32) -> (i32, i32) {
    %c0_i32 = arith.constant 0 : i32
    %c0_i32_0 = arith.constant 0 : i32
    return %arg0, %c0_i32 : i32, i32
  }
}

</mosaic_0001>

<llo_original>
// kernel: mlp_forward.1
$region0: #{mlp_forward.1}
  #allocation0 [shape = 'u32[]', space=smem, size = 0x4, offset = 0x4, fixed_abs, tag = 'smem constant byte address 0x4 - core index']
  #allocation1 [shape = 'u32[144,128]{1,0:T(1,128)}', space=vmem, size = 0x12000, scoped, tag = 'internal scratch']
  #allocation2 [shape = 'f32[1,1]{1,0:T(1,128)S(1)}', space=vmem, size = 0x200, scoped, tag = 'scoped memory for mlp_forward.1']
  %s0 = inlined_call_operand.vmem [shape: f32[16,128], index: 0, kind: input, shape index: {}]
  %s1 = inlined_call_operand.vmem [shape: bf16[128,500], index: 1, kind: input, shape index: {}]
  %s2 = inlined_call_operand.vmem [shape: f32[1,500], index: 2, kind: input, shape index: {}]
  %s3 = inlined_call_operand.vmem [shape: bf16[500,1000], index: 3, kind: input, shape index: {}]
  %s4 = inlined_call_operand.vmem [shape: f32[1,1000], index: 4, kind: input, shape index: {}]
  %s5 = inlined_call_operand.vmem [shape: bf16[1000,128], index: 5, kind: input, shape index: {}]
  %s6 = inlined_call_operand.vmem [shape: f32[1,128], index: 6, kind: input, shape index: {}]
  %s7 = inlined_call_operand.vmem [shape: f32[1,128], index: 7, kind: input, shape index: {}]
  %s8 = inlined_call_operand.<no memory space> [shape: f32[1,1], index: 8, kind: input, shape index: {}]
  %s9 = inlined_call_operand.vmem [shape: f32[16,1], index: 9, kind: output, shape index: {}]
  %s10 = sld [smem:[#allocation0]]
  $region46: #{mlp_forward.1} parent=0
    _
  %s12 = ssub.s32 1, %s10
  %s13 = scalar_select 0, %s12, %s10
  %v14 = vstv %s8
  %15 = vst [vmem:[#allocation2] sm:$0x1] %v14
  // Predicated region
  $region2: #{mlp_forward.1} parent=0 // pred_check
    _
  $region3: #{mlp_forward.1} parent=0 // pred_check_branch
    %17 = sbr.rel (0) target = $region5
  $region4: #{mlp_forward.1} parent=0 // pred_region
    _
  $region5: #{mlp_forward.1} parent=0 // pred_fallthru
    _
  // Predicated region
  $region6: #{mlp_forward.1} parent=0 // pred_check
    _
  $region7: #{mlp_forward.1} parent=0 // pred_check_branch
    %19 = sbr.rel (0) target = $region9
  $region8: #{mlp_forward.1} parent=0 // pred_region
    _
  $region9: #{mlp_forward.1} parent=0 // pred_fallthru
    _
  // Predicated region
  $region10: #{mlp_forward.1} parent=0 // pred_check
    _
  $region11: #{mlp_forward.1} parent=0 // pred_check_branch
    %21 = sbr.rel (0) target = $region13
  $region12: #{mlp_forward.1} parent=0 // pred_region
    _
  $region13: #{mlp_forward.1} parent=0 // pred_fallthru
    _
  // Predicated region
  $region14: #{mlp_forward.1} parent=0 // pred_check
    _
  $region15: #{mlp_forward.1} parent=0 // pred_check_branch
    %23 = sbr.rel (0) target = $region17
  $region16: #{mlp_forward.1} parent=0 // pred_region
    _
  $region17: #{mlp_forward.1} parent=0 // pred_fallthru
    _
  // Predicated region
  $region18: #{mlp_forward.1} parent=0 // pred_check
    _
  $region19: #{mlp_forward.1} parent=0 // pred_check_branch
    %25 = sbr.rel (0) target = $region21
  $region20: #{mlp_forward.1} parent=0 // pred_region
    _
  $region21: #{mlp_forward.1} parent=0 // pred_fallthru
    _
  // Predicated region
  $region22: #{mlp_forward.1} parent=0 // pred_check
    _
  $region23: #{mlp_forward.1} parent=0 // pred_check_branch
    %27 = sbr.rel (0) target = $region25
  $region24: #{mlp_forward.1} parent=0 // pred_region
    _
  $region25: #{mlp_forward.1} parent=0 // pred_fallthru
    _
  // Predicated region
  $region26: #{mlp_forward.1} parent=0 // pred_check
    _
  $region27: #{mlp_forward.1} parent=0 // pred_check_branch
    %29 = sbr.rel (0) target = $region29
  $region28: #{mlp_forward.1} parent=0 // pred_region
    _
  $region29: #{mlp_forward.1} parent=0 // pred_fallthru
    _
  // Predicated region
  $region30: #{mlp_forward.1} parent=0 // pred_check
    _
  $region31: #{mlp_forward.1} parent=0 // pred_check_branch
    %31 = sbr.rel (0) target = $region33
  $region32: #{mlp_forward.1} parent=0 // pred_region
    _
  $region33: #{mlp_forward.1} parent=0 // pred_fallthru
    _
  // Predicated region
  $region34: #{mlp_forward.1} parent=0 // pred_check
    _
  $region35: #{mlp_forward.1} parent=0 // pred_check_branch
    %33 = sbr.rel (0) target = $region37
  $region36: #{mlp_forward.1} parent=0 // pred_region
    _
  $region37: #{mlp_forward.1} parent=0 // pred_fallthru
    _
  %v35 = vld [vmem:[%s0] sm:$0xff]
  %v36 = vld [vmem:[%s0 + $0x8] sm:$0xff]
  %v37 = vpack.c.bf16 %v36, %v35
  %v38 = vld [vmem:[%s1] sm:$0xff]
  %v39 = vld [vmem:[%s1 + $0x8] sm:$0xff]
  %v40 = vld [vmem:[%s1 + $0x10] sm:$0xff]
  %v41 = vld [vmem:[%s1 + $0x18] sm:$0xff]
  %v42 = vld [vmem:[%s1 + $0x20] sm:$0xff]
  %v43 = vld [vmem:[%s1 + $0x28] sm:$0xff]
  %v44 = vld [vmem:[%s1 + $0x30] sm:$0xff]
  %v45 = vld [vmem:[%s1 + $0x38] sm:$0xff]
  %v46 = vld [vmem:[%s1 + $0x40] sm:$0xff]
  %v47 = vld [vmem:[%s1 + $0x48] sm:$0xff]
  %v48 = vld [vmem:[%s1 + $0x50] sm:$0xff]
  %v49 = vld [vmem:[%s1 + $0x58] sm:$0xff]
  %v50 = vld [vmem:[%s1 + $0x60] sm:$0xff]
  %v51 = vld [vmem:[%s1 + $0x68] sm:$0xff]
  %v52 = vld [vmem:[%s1 + $0x70] sm:$0xff]
  %v53 = vld [vmem:[%s1 + $0x78] sm:$0xff]
  %v54 = vld [vmem:[%s1 + $0x80] sm:$0xff]
  %v55 = vld [vmem:[%s1 + $0x88] sm:$0xff]
  %v56 = vld [vmem:[%s1 + $0x90] sm:$0xff]
  %v57 = vld [vmem:[%s1 + $0x98] sm:$0xff]
  %v58 = vld [vmem:[%s1 + $0xa0] sm:$0xff]
  %v59 = vld [vmem:[%s1 + $0xa8] sm:$0xff]
  %v60 = vld [vmem:[%s1 + $0xb0] sm:$0xff]
  %v61 = vld [vmem:[%s1 + $0xb8] sm:$0xff]
  %v62 = vld [vmem:[%s1 + $0xc0] sm:$0xff]
  %v63 = vld [vmem:[%s1 + $0xc8] sm:$0xff]
  %v64 = vld [vmem:[%s1 + $0xd0] sm:$0xff]
  %v65 = vld [vmem:[%s1 + $0xd8] sm:$0xff]
  %v66 = vld [vmem:[%s1 + $0xe0] sm:$0xff]
  %v67 = vld [vmem:[%s1 + $0xe8] sm:$0xff]
  %v68 = vld [vmem:[%s1 + $0xf0] sm:$0xff]
  %v69 = vld [vmem:[%s1 + $0xf8] sm:$0xff]
  %v70 = vld [vmem:[%s2] sm:$0xf]
  %v72 = vlaneseq
  %v73 = vshrl.u32 %v72, 7
  %v74 = vsub.s32 0, %v73
  %v75 = vrot.slane %v70, %v74
  %v76 = vlaneseq
  %v77 = vshrl.u32 %v76, 7
  %v78 = vsub.s32 1, %v77
  %v79 = vrot.slane %v70, %v78
  %v80 = vlaneseq
  %v81 = vshrl.u32 %v80, 7
  %v82 = vsub.s32 2, %v81
  %v83 = vrot.slane %v70, %v82
  %v84 = vlaneseq
  %v85 = vshrl.u32 %v84, 7
  %v86 = vsub.s32 3, %v85
  %v87 = vrot.slane %v70, %v86
  %v124 = vunpack.c.l.b16 %v38
  %v125 = vunpack.c.h.b16 %v38
  %v126 = vunpack.c.l.b16 %v39
  %v127 = vunpack.c.h.b16 %v39
  %v128 = vunpack.c.l.b16 %v40
  %v129 = vunpack.c.h.b16 %v40
  %v130 = vunpack.c.l.b16 %v41
  %v131 = vunpack.c.h.b16 %v41
  %v132 = vunpack.c.l.b16 %v42
  %v133 = vunpack.c.h.b16 %v42
  %v134 = vunpack.c.l.b16 %v43
  %v135 = vunpack.c.h.b16 %v43
  %v136 = vunpack.c.l.b16 %v44
  %v137 = vunpack.c.h.b16 %v44
  %v138 = vunpack.c.l.b16 %v45
  %v139 = vunpack.c.h.b16 %v45
  %v140 = vunpack.c.l.b16 %v46
  %v141 = vunpack.c.h.b16 %v46
  %v142 = vunpack.c.l.b16 %v47
  %v143 = vunpack.c.h.b16 %v47
  %v144 = vunpack.c.l.b16 %v48
  %v145 = vunpack.c.h.b16 %v48
  %v146 = vunpack.c.l.b16 %v49
  %v147 = vunpack.c.h.b16 %v49
  %v148 = vunpack.c.l.b16 %v50
  %v149 = vunpack.c.h.b16 %v50
  %v150 = vunpack.c.l.b16 %v51
  %v151 = vunpack.c.h.b16 %v51
  %v152 = vunpack.c.l.b16 %v52
  %v153 = vunpack.c.h.b16 %v52
  %v154 = vunpack.c.l.b16 %v53
  %v155 = vunpack.c.h.b16 %v53
  %v156 = vunpack.c.l.b16 %v54
  %v157 = vunpack.c.h.b16 %v54
  %v158 = vunpack.c.l.b16 %v55
  %v159 = vunpack.c.h.b16 %v55
  %v160 = vunpack.c.l.b16 %v56
  %v161 = vunpack.c.h.b16 %v56
  %v162 = vunpack.c.l.b16 %v57
  %v163 = vunpack.c.h.b16 %v57
  %v164 = vunpack.c.l.b16 %v58
  %v165 = vunpack.c.h.b16 %v58
  %v166 = vunpack.c.l.b16 %v59
  %v167 = vunpack.c.h.b16 %v59
  %v168 = vunpack.c.l.b16 %v60
  %v169 = vunpack.c.h.b16 %v60
  %v170 = vunpack.c.l.b16 %v61
  %v171 = vunpack.c.h.b16 %v61
  %v172 = vunpack.c.l.b16 %v62
  %v173 = vunpack.c.h.b16 %v62
  %v174 = vunpack.c.l.b16 %v63
  %v175 = vunpack.c.h.b16 %v63
  %v176 = vunpack.c.l.b16 %v64
  %v177 = vunpack.c.h.b16 %v64
  %v178 = vunpack.c.l.b16 %v65
  %v179 = vunpack.c.h.b16 %v65
  %v180 = vunpack.c.l.b16 %v66
  %v181 = vunpack.c.h.b16 %v66
  %v182 = vunpack.c.l.b16 %v67
  %v183 = vunpack.c.h.b16 %v67
  %v184 = vunpack.c.l.b16 %v68
  %v185 = vunpack.c.h.b16 %v68
  %v186 = vunpack.c.l.b16 %v69
  %v187 = vunpack.c.h.b16 %v69
  %v188 = vpack.c.b16 %v128, %v124
  %v189 = vpack.c.b16 %v129, %v125
  %v190 = vpack.c.b16 %v130, %v126
  %v191 = vpack.c.b16 %v131, %v127
  %v192 = vpack.c.b16 %v136, %v132
  %v193 = vpack.c.b16 %v137, %v133
  %v194 = vpack.c.b16 %v138, %v134
  %v195 = vpack.c.b16 %v139, %v135
  %v196 = vpack.c.b16 %v144, %v140
  %v197 = vpack.c.b16 %v145, %v141
  %v198 = vpack.c.b16 %v146, %v142
  %v199 = vpack.c.b16 %v147, %v143
  %v200 = vpack.c.b16 %v152, %v148
  %v201 = vpack.c.b16 %v153, %v149
  %v202 = vpack.c.b16 %v154, %v150
  %v203 = vpack.c.b16 %v155, %v151
  %v204 = vpack.c.b16 %v160, %v156
  %v205 = vpack.c.b16 %v161, %v157
  %v206 = vpack.c.b16 %v162, %v158
  %v207 = vpack.c.b16 %v163, %v159
  %v208 = vpack.c.b16 %v168, %v164
  %v209 = vpack.c.b16 %v169, %v165
  %v210 = vpack.c.b16 %v170, %v166
  %v211 = vpack.c.b16 %v171, %v167
  %v212 = vpack.c.b16 %v176, %v172
  %v213 = vpack.c.b16 %v177, %v173
  %v214 = vpack.c.b16 %v178, %v174
  %v215 = vpack.c.b16 %v179, %v175
  %v216 = vpack.c.b16 %v184, %v180
  %v217 = vpack.c.b16 %v185, %v181
  %v218 = vpack.c.b16 %v186, %v182
  %v219 = vpack.c.b16 %v187, %v183
  %252 = vmatprep.subr.bf16.mxu0 %v189
  %253 = vmatpush1.bf16.msra.mxu0 %v188
  %254 = vmatprep.subr.bf16.mxu0 %v193
  %255 = vmatpush1.bf16.msra.mxu0 %v192
  %256 = vmatprep.subr.bf16.mxu0 %v197
  %257 = vmatpush1.bf16.msra.mxu0 %v196
  %258 = vmatprep.subr.bf16.mxu0 %v201
  %259 = vmatpush1.bf16.msra.mxu0 %v200
  %260 = vmatprep.subr.bf16.mxu0 %v205
  %261 = vmatpush1.bf16.msra.mxu0 %v204
  %262 = vmatprep.subr.bf16.mxu0 %v209
  %263 = vmatpush1.bf16.msra.mxu0 %v208
  %264 = vmatprep.subr.bf16.mxu0 %v213
  %265 = vmatpush1.bf16.msra.mxu0 %v212
  %266 = vmatprep.subr.bf16.mxu0 %v217
  %267 = vmatpush1.bf16.msra.mxu0 %v216
  %268 = vmatprep.subr.bf16.mxu0 0
  %269 = vmatpush1.bf16.msra.mxu0 0
  %270 = vmatprep.subr.bf16.mxu0 0
  %271 = vmatpush1.bf16.msra.mxu0 0
  %272 = vmatprep.subr.bf16.mxu0 0
  %273 = vmatpush1.bf16.msra.mxu0 0
  %274 = vmatprep.subr.bf16.mxu0 0
  %275 = vmatpush1.bf16.msra.mxu0 0
  %276 = vmatprep.subr.bf16.mxu0 0
  %277 = vmatpush1.bf16.msra.mxu0 0
  %278 = vmatprep.subr.bf16.mxu0 0
  %279 = vmatpush1.bf16.msra.mxu0 0
  %280 = vmatprep.subr.bf16.mxu0 0
  %281 = vmatpush1.bf16.msra.mxu0 0
  %282 = vmatprep.subr.bf16.mxu0 0
  %283 = vmatpush1.bf16.msra.mxu0 0
  %284 = vmatprep.mubr.bf16.mxu0 0
  %285 = vmatmul.mubr.bf16.gmra.mrb[0].mxu0 %v37
  %v286 = vpop.f32.mrb[0].mxu0
  %v287 = vadd.f32 %v75, %v286
  %v288 = vpop.f32.mrb[0].mxu0
  %v289 = vadd.f32 %v79, %v288
  %v290 = vpop.f32.mrb[0].mxu0
  %v291 = vadd.f32 %v75, %v290
  %v292 = vpop.f32.mrb[0].mxu0
  %v293 = vadd.f32 %v79, %v292
  %294 = vdwg.mxu0
  %295 = vmatprep.subr.bf16.mxu0 %v191
  %296 = vmatpush1.bf16.msra.mxu0 %v190
  %297 = vmatprep.subr.bf16.mxu0 %v195
  %298 = vmatpush1.bf16.msra.mxu0 %v194
  %299 = vmatprep.subr.bf16.mxu0 %v199
  %300 = vmatpush1.bf16.msra.mxu0 %v198
  %301 = vmatprep.subr.bf16.mxu0 %v203
  %302 = vmatpush1.bf16.msra.mxu0 %v202
  %303 = vmatprep.subr.bf16.mxu0 %v207
  %304 = vmatpush1.bf16.msra.mxu0 %v206
  %305 = vmatprep.subr.bf16.mxu0 %v211
  %306 = vmatpush1.bf16.msra.mxu0 %v210
  %307 = vmatprep.subr.bf16.mxu0 %v215
  %308 = vmatpush1.bf16.msra.mxu0 %v214
  %309 = vmatprep.subr.bf16.mxu0 %v219
  %310 = vmatpush1.bf16.msra.mxu0 %v218
  %311 = vmatprep.subr.bf16.mxu0 0
  %312 = vmatpush1.bf16.msra.mxu0 0
  %313 = vmatprep.subr.bf16.mxu0 0
  %314 = vmatpush1.bf16.msra.mxu0 0
  %315 = vmatprep.subr.bf16.mxu0 0
  %316 = vmatpush1.bf16.msra.mxu0 0
  %317 = vmatprep.subr.bf16.mxu0 0
  %318 = vmatpush1.bf16.msra.mxu0 0
  %319 = vmatprep.subr.bf16.mxu0 0
  %320 = vmatpush1.bf16.msra.mxu0 0
  %321 = vmatprep.subr.bf16.mxu0 0
  %322 = vmatpush1.bf16.msra.mxu0 0
  %323 = vmatprep.subr.bf16.mxu0 0
  %324 = vmatpush1.bf16.msra.mxu0 0
  %325 = vmatprep.subr.bf16.mxu0 0
  %326 = vmatpush1.bf16.msra.mxu0 0
  %327 = vmatprep.mubr.bf16.mxu0 0
  %328 = vmatmul.mubr.bf16.gmra.mrb[0].mxu0 %v37
  %v329 = vpop.f32.mrb[0].mxu0
  %v330 = vadd.f32 %v83, %v329
  %v331 = vpop.f32.mrb[0].mxu0
  %v332 = vadd.f32 %v87, %v331
  %v333 = vpop.f32.mrb[0].mxu0
  %v334 = vadd.f32 %v83, %v333
  %v335 = vpop.f32.mrb[0].mxu0
  %v336 = vadd.f32 %v87, %v335
  %337 = vdwg.mxu0
  %v338 = vtanh.pop %v287
  %v339 = vtanh.pop %v289
  %v340 = vtanh.pop %v330
  %v341 = vtanh.pop %v332
  %v342 = vtanh.pop %v291
  %v343 = vtanh.pop %v293
  %v344 = vtanh.pop %v334
  %v345 = vtanh.pop %v336
  %v346 = vpack.c.bf16 %v342, %v338
  %v347 = vpack.c.bf16 %v343, %v339
  %v348 = vpack.c.bf16 %v344, %v340
  %v349 = vpack.c.bf16 %v345, %v341
  %v350 = vld [vmem:[%s3] sm:$0xff]
  %v351 = vld [vmem:[%s3 + $0x8] sm:$0xff]
  %v352 = vld [vmem:[%s3 + $0x10] sm:$0xff]
  %v353 = vld [vmem:[%s3 + $0x18] sm:$0xff]
  %v354 = vld [vmem:[%s3 + $0x20] sm:$0xff]
  %v355 = vld [vmem:[%s3 + $0x28] sm:$0xff]
  %v356 = vld [vmem:[%s3 + $0x30] sm:$0xff]
  %v357 = vld [vmem:[%s3 + $0x38] sm:$0xff]
  %v358 = vld [vmem:[%s3 + $0x40] sm:$0xff]
  %v359 = vld [vmem:[%s3 + $0x48] sm:$0xff]
  %v360 = vld [vmem:[%s3 + $0x50] sm:$0xff]
  %v361 = vld [vmem:[%s3 + $0x58] sm:$0xff]
  %v362 = vld [vmem:[%s3 + $0x60] sm:$0xff]
  %v363 = vld [vmem:[%s3 + $0x68] sm:$0xff]
  %v364 = vld [vmem:[%s3 + $0x70] sm:$0xff]
  %v365 = vld [vmem:[%s3 + $0x78] sm:$0xff]
  %v366 = vld [vmem:[%s3 + $0x80] sm:$0xff]
  %v367 = vld [vmem:[%s3 + $0x88] sm:$0xff]
  %v368 = vld [vmem:[%s3 + $0x90] sm:$0xff]
  %v369 = vld [vmem:[%s3 + $0x98] sm:$0xff]
  %v370 = vld [vmem:[%s3 + $0xa0] sm:$0xff]
  %v371 = vld [vmem:[%s3 + $0xa8] sm:$0xff]
  %v372 = vld [vmem:[%s3 + $0xb0] sm:$0xff]
  %v373 = vld [vmem:[%s3 + $0xb8] sm:$0xff]
  %v374 = vld [vmem:[%s3 + $0xc0] sm:$0xff]
  %v375 = vld [vmem:[%s3 + $0xc8] sm:$0xff]
  %v376 = vld [vmem:[%s3 + $0xd0] sm:$0xff]
  %v377 = vld [vmem:[%s3 + $0xd8] sm:$0xff]
  %v378 = vld [vmem:[%s3 + $0xe0] sm:$0xff]
  %v379 = vld [vmem:[%s3 + $0xe8] sm:$0xff]
  %v380 = vld [vmem:[%s3 + $0xf0] sm:$0xff]
  %v381 = vld [vmem:[%s3 + $0xf8] sm:$0xff]
  %v382 = vld [vmem:[%s3 + $0x100] sm:$0xff]
  %v383 = vld [vmem:[%s3 + $0x108] sm:$0xff]
  %v384 = vld [vmem:[%s3 + $0x110] sm:$0xff]
  %v385 = vld [vmem:[%s3 + $0x118] sm:$0xff]
  %v386 = vld [vmem:[%s3 + $0x120] sm:$0xff]
  %v387 = vld [vmem:[%s3 + $0x128] sm:$0xff]
  %v388 = vld [vmem:[%s3 + $0x130] sm:$0xff]
  %v389 = vld [vmem:[%s3 + $0x138] sm:$0xff]
  %v390 = vld [vmem:[%s3 + $0x140] sm:$0xff]
  %v391 = vld [vmem:[%s3 + $0x148] sm:$0xff]
  %v392 = vld [vmem:[%s3 + $0x150] sm:$0xff]
  %v393 = vld [vmem:[%s3 + $0x158] sm:$0xff]
  %v394 = vld [vmem:[%s3 + $0x160] sm:$0xff]
  %v395 = vld [vmem:[%s3 + $0x168] sm:$0xff]
  %v396 = vld [vmem:[%s3 + $0x170] sm:$0xff]
  %v397 = vld [vmem:[%s3 + $0x178] sm:$0xff]
  %v398 = vld [vmem:[%s3 + $0x180] sm:$0xff]
  %v399 = vld [vmem:[%s3 + $0x188] sm:$0xff]
  %v400 = vld [vmem:[%s3 + $0x190] sm:$0xff]
  %v401 = vld [vmem:[%s3 + $0x198] sm:$0xff]
  %v402 = vld [vmem:[%s3 + $0x1a0] sm:$0xff]
  %v403 = vld [vmem:[%s3 + $0x1a8] sm:$0xff]
  %v404 = vld [vmem:[%s3 + $0x1b0] sm:$0xff]
  %v405 = vld [vmem:[%s3 + $0x1b8] sm:$0xff]
  %v406 = vld [vmem:[%s3 + $0x1c0] sm:$0xff]
  %v407 = vld [vmem:[%s3 + $0x1c8] sm:$0xff]
  %v408 = vld [vmem:[%s3 + $0x1d0] sm:$0xff]
  %v409 = vld [vmem:[%s3 + $0x1d8] sm:$0xff]
  %v410 = vld [vmem:[%s3 + $0x1e0] sm:$0xff]
  %v411 = vld [vmem:[%s3 + $0x1e8] sm:$0xff]
  %v412 = vld [vmem:[%s3 + $0x1f0] sm:$0xff]
  %v413 = vld [vmem:[%s3 + $0x1f8] sm:$0xff]
  %v414 = vld [vmem:[%s3 + $0x200] sm:$0xff]
  %v415 = vld [vmem:[%s3 + $0x208] sm:$0xff]
  %v416 = vld [vmem:[%s3 + $0x210] sm:$0xff]
  %v417 = vld [vmem:[%s3 + $0x218] sm:$0xff]
  %v418 = vld [vmem:[%s3 + $0x220] sm:$0xff]
  %v419 = vld [vmem:[%s3 + $0x228] sm:$0xff]
  %v420 = vld [vmem:[%s3 + $0x230] sm:$0xff]
  %v421 = vld [vmem:[%s3 + $0x238] sm:$0xff]
  %v422 = vld [vmem:[%s3 + $0x240] sm:$0xff]
  %v423 = vld [vmem:[%s3 + $0x248] sm:$0xff]
  %v424 = vld [vmem:[%s3 + $0x250] sm:$0xff]
  %v425 = vld [vmem:[%s3 + $0x258] sm:$0xff]
  %v426 = vld [vmem:[%s3 + $0x260] sm:$0xff]
  %v427 = vld [vmem:[%s3 + $0x268] sm:$0xff]
  %v428 = vld [vmem:[%s3 + $0x270] sm:$0xff]
  %v429 = vld [vmem:[%s3 + $0x278] sm:$0xff]
  %v430 = vld [vmem:[%s3 + $0x280] sm:$0xff]
  %v431 = vld [vmem:[%s3 + $0x288] sm:$0xff]
  %v432 = vld [vmem:[%s3 + $0x290] sm:$0xff]
  %v433 = vld [vmem:[%s3 + $0x298] sm:$0xff]
  %v434 = vld [vmem:[%s3 + $0x2a0] sm:$0xff]
  %v435 = vld [vmem:[%s3 + $0x2a8] sm:$0xff]
  %v436 = vld [vmem:[%s3 + $0x2b0] sm:$0xff]
  %v437 = vld [vmem:[%s3 + $0x2b8] sm:$0xff]
  %v438 = vld [vmem:[%s3 + $0x2c0] sm:$0xff]
  %v439 = vld [vmem:[%s3 + $0x2c8] sm:$0xff]
  %v440 = vld [vmem:[%s3 + $0x2d0] sm:$0xff]
  %v441 = vld [vmem:[%s3 + $0x2d8] sm:$0xff]
  %v442 = vld [vmem:[%s3 + $0x2e0] sm:$0xff]
  %v443 = vld [vmem:[%s3 + $0x2e8] sm:$0xff]
  %v444 = vld [vmem:[%s3 + $0x2f0] sm:$0xff]
  %v445 = vld [vmem:[%s3 + $0x2f8] sm:$0xff]
  %v446 = vld [vmem:[%s3 + $0x300] sm:$0xff]
  %v447 = vld [vmem:[%s3 + $0x308] sm:$0xff]
  %v448 = vld [vmem:[%s3 + $0x310] sm:$0xff]
  %v449 = vld [vmem:[%s3 + $0x318] sm:$0xff]
  %v450 = vld [vmem:[%s3 + $0x320] sm:$0xff]
  %v451 = vld [vmem:[%s3 + $0x328] sm:$0xff]
  %v452 = vld [vmem:[%s3 + $0x330] sm:$0xff]
  %v453 = vld [vmem:[%s3 + $0x338] sm:$0xff]
  %v454 = vld [vmem:[%s3 + $0x340] sm:$0xff]
  %v455 = vld [vmem:[%s3 + $0x348] sm:$0xff]
  %v456 = vld [vmem:[%s3 + $0x350] sm:$0xff]
  %v457 = vld [vmem:[%s3 + $0x358] sm:$0xff]
  %v458 = vld [vmem:[%s3 + $0x360] sm:$0xff]
  %v459 = vld [vmem:[%s3 + $0x368] sm:$0xff]
  %v460 = vld [vmem:[%s3 + $0x370] sm:$0xff]
  %v461 = vld [vmem:[%s3 + $0x378] sm:$0xff]
  %v462 = vld [vmem:[%s3 + $0x380] sm:$0xff]
  %v463 = vld [vmem:[%s3 + $0x388] sm:$0xff]
  %v464 = vld [vmem:[%s3 + $0x390] sm:$0xff]
  %v465 = vld [vmem:[%s3 + $0x398] sm:$0xff]
  %v466 = vld [vmem:[%s3 + $0x3a0] sm:$0xff]
  %v467 = vld [vmem:[%s3 + $0x3a8] sm:$0xff]
  %v468 = vld [vmem:[%s3 + $0x3b0] sm:$0xff]
  %v469 = vld [vmem:[%s3 + $0x3b8] sm:$0xff]
  %v470 = vld [vmem:[%s3 + $0x3c0] sm:$0xff]
  %v471 = vld [vmem:[%s3 + $0x3c8] sm:$0xff]
  %v472 = vld [vmem:[%s3 + $0x3d0] sm:$0xff]
  %v473 = vld [vmem:[%s3 + $0x3d8] sm:$0xff]
  %v474 = vld [vmem:[%s3 + $0x3e0] sm:$0xff]
  %v475 = vld [vmem:[%s3 + $0x3e8] sm:$0xff]
  %v476 = vld [vmem:[%s3 + $0x3f0] sm:$0xff]
  %v477 = vld [vmem:[%s3 + $0x3f8] sm:$0xff]
  %v478 = vld [vmem:[%s3 + $0x400] sm:$0xff]
  %v479 = vld [vmem:[%s3 + $0x408] sm:$0xff]
  %v480 = vld [vmem:[%s3 + $0x410] sm:$0xff]
  %v481 = vld [vmem:[%s3 + $0x418] sm:$0xff]
  %v482 = vld [vmem:[%s3 + $0x420] sm:$0xff]
  %v483 = vld [vmem:[%s3 + $0x428] sm:$0xff]
  %v484 = vld [vmem:[%s3 + $0x430] sm:$0xff]
  %v485 = vld [vmem:[%s3 + $0x438] sm:$0xff]
  %v486 = vld [vmem:[%s3 + $0x440] sm:$0xff]
  %v487 = vld [vmem:[%s3 + $0x448] sm:$0xff]
  %v488 = vld [vmem:[%s3 + $0x450] sm:$0xff]
  %v489 = vld [vmem:[%s3 + $0x458] sm:$0xff]
  %v490 = vld [vmem:[%s3 + $0x460] sm:$0xff]
  %v491 = vld [vmem:[%s3 + $0x468] sm:$0xff]
  %v492 = vld [vmem:[%s3 + $0x470] sm:$0xff]
  %v493 = vld [vmem:[%s3 + $0x478] sm:$0xff]
  %v494 = vld [vmem:[%s3 + $0x480] sm:$0xff]
  %v495 = vld [vmem:[%s3 + $0x488] sm:$0xff]
  %v496 = vld [vmem:[%s3 + $0x490] sm:$0xff]
  %v497 = vld [vmem:[%s3 + $0x498] sm:$0xff]
  %v498 = vld [vmem:[%s3 + $0x4a0] sm:$0xff]
  %v499 = vld [vmem:[%s3 + $0x4a8] sm:$0xff]
  %v500 = vld [vmem:[%s3 + $0x4b0] sm:$0xff]
  %v501 = vld [vmem:[%s3 + $0x4b8] sm:$0xff]
  %v502 = vld [vmem:[%s3 + $0x4c0] sm:$0xff]
  %v503 = vld [vmem:[%s3 + $0x4c8] sm:$0xff]
  %v504 = vld [vmem:[%s3 + $0x4d0] sm:$0xff]
  %v505 = vld [vmem:[%s3 + $0x4d8] sm:$0xff]
  %v506 = vld [vmem:[%s3 + $0x4e0] sm:$0xff]
  %v507 = vld [vmem:[%s3 + $0x4e8] sm:$0xff]
  %v508 = vld [vmem:[%s3 + $0x4f0] sm:$0xff]
  %v509 = vld [vmem:[%s3 + $0x4f8] sm:$0xff]
  %v510 = vld [vmem:[%s3 + $0x500] sm:$0xff]
  %v511 = vld [vmem:[%s3 + $0x508] sm:$0xff]
  %v512 = vld [vmem:[%s3 + $0x510] sm:$0xff]
  %v513 = vld [vmem:[%s3 + $0x518] sm:$0xff]
  %v514 = vld [vmem:[%s3 + $0x520] sm:$0xff]
  %v515 = vld [vmem:[%s3 + $0x528] sm:$0xff]
  %v516 = vld [vmem:[%s3 + $0x530] sm:$0xff]
  %v517 = vld [vmem:[%s3 + $0x538] sm:$0xff]
  %v518 = vld [vmem:[%s3 + $0x540] sm:$0xff]
  %v519 = vld [vmem:[%s3 + $0x548] sm:$0xff]
  %v520 = vld [vmem:[%s3 + $0x550] sm:$0xff]
  %v521 = vld [vmem:[%s3 + $0x558] sm:$0xff]
  %v522 = vld [vmem:[%s3 + $0x560] sm:$0xff]
  %v523 = vld [vmem:[%s3 + $0x568] sm:$0xff]
  %v524 = vld [vmem:[%s3 + $0x570] sm:$0xff]
  %v525 = vld [vmem:[%s3 + $0x578] sm:$0xff]
  %v526 = vld [vmem:[%s3 + $0x580] sm:$0xff]
  %v527 = vld [vmem:[%s3 + $0x588] sm:$0xff]
  %v528 = vld [vmem:[%s3 + $0x590] sm:$0xff]
  %v529 = vld [vmem:[%s3 + $0x598] sm:$0xff]
  %v530 = vld [vmem:[%s3 + $0x5a0] sm:$0xff]
  %v531 = vld [vmem:[%s3 + $0x5a8] sm:$0xff]
  %v532 = vld [vmem:[%s3 + $0x5b0] sm:$0xff]
  %v533 = vld [vmem:[%s3 + $0x5b8] sm:$0xff]
  %v534 = vld [vmem:[%s3 + $0x5c0] sm:$0xff]
  %v535 = vld [vmem:[%s3 + $0x5c8] sm:$0xff]
  %v536 = vld [vmem:[%s3 + $0x5d0] sm:$0xff]
  %v537 = vld [vmem:[%s3 + $0x5d8] sm:$0xff]
  %v538 = vld [vmem:[%s3 + $0x5e0] sm:$0xff]
  %v539 = vld [vmem:[%s3 + $0x5e8] sm:$0xff]
  %v540 = vld [vmem:[%s3 + $0x5f0] sm:$0xff]
  %v541 = vld [vmem:[%s3 + $0x5f8] sm:$0xff]
  %v542 = vld [vmem:[%s3 + $0x600] sm:$0xff]
  %v543 = vld [vmem:[%s3 + $0x608] sm:$0xff]
  %v544 = vld [vmem:[%s3 + $0x610] sm:$0xff]
  %v545 = vld [vmem:[%s3 + $0x618] sm:$0xff]
  %v546 = vld [vmem:[%s3 + $0x620] sm:$0xff]
  %v547 = vld [vmem:[%s3 + $0x628] sm:$0xff]
  %v548 = vld [vmem:[%s3 + $0x630] sm:$0xff]
  %v549 = vld [vmem:[%s3 + $0x638] sm:$0xff]
  %v550 = vld [vmem:[%s3 + $0x640] sm:$0xff]
  %v551 = vld [vmem:[%s3 + $0x648] sm:$0xff]
  %v552 = vld [vmem:[%s3 + $0x650] sm:$0xff]
  %v553 = vld [vmem:[%s3 + $0x658] sm:$0xff]
  %v554 = vld [vmem:[%s3 + $0x660] sm:$0xff]
  %v555 = vld [vmem:[%s3 + $0x668] sm:$0xff]
  %v556 = vld [vmem:[%s3 + $0x670] sm:$0xff]
  %v557 = vld [vmem:[%s3 + $0x678] sm:$0xff]
  %v558 = vld [vmem:[%s3 + $0x680] sm:$0xff]
  %v559 = vld [vmem:[%s3 + $0x688] sm:$0xff]
  %v560 = vld [vmem:[%s3 + $0x690] sm:$0xff]
  %v561 = vld [vmem:[%s3 + $0x698] sm:$0xff]
  %v562 = vld [vmem:[%s3 + $0x6a0] sm:$0xff]
  %v563 = vld [vmem:[%s3 + $0x6a8] sm:$0xff]
  %v564 = vld [vmem:[%s3 + $0x6b0] sm:$0xff]
  %v565 = vld [vmem:[%s3 + $0x6b8] sm:$0xff]
  %v566 = vld [vmem:[%s3 + $0x6c0] sm:$0xff]
  %v567 = vld [vmem:[%s3 + $0x6c8] sm:$0xff]
  %v568 = vld [vmem:[%s3 + $0x6d0] sm:$0xff]
  %v569 = vld [vmem:[%s3 + $0x6d8] sm:$0xff]
  %v570 = vld [vmem:[%s3 + $0x6e0] sm:$0xff]
  %v571 = vld [vmem:[%s3 + $0x6e8] sm:$0xff]
  %v572 = vld [vmem:[%s3 + $0x6f0] sm:$0xff]
  %v573 = vld [vmem:[%s3 + $0x6f8] sm:$0xff]
  %v574 = vld [vmem:[%s3 + $0x700] sm:$0xff]
  %v575 = vld [vmem:[%s3 + $0x708] sm:$0xff]
  %v576 = vld [vmem:[%s3 + $0x710] sm:$0xff]
  %v577 = vld [vmem:[%s3 + $0x718] sm:$0xff]
  %v578 = vld [vmem:[%s3 + $0x720] sm:$0xff]
  %v579 = vld [vmem:[%s3 + $0x728] sm:$0xff]
  %v580 = vld [vmem:[%s3 + $0x730] sm:$0xff]
  %v581 = vld [vmem:[%s3 + $0x738] sm:$0xff]
  %v582 = vld [vmem:[%s3 + $0x740] sm:$0xff]
  %v583 = vld [vmem:[%s3 + $0x748] sm:$0xff]
  %v584 = vld [vmem:[%s3 + $0x750] sm:$0xff]
  %v585 = vld [vmem:[%s3 + $0x758] sm:$0xff]
  %v586 = vld [vmem:[%s3 + $0x760] sm:$0xff]
  %v587 = vld [vmem:[%s3 + $0x768] sm:$0xff]
  %v588 = vld [vmem:[%s3 + $0x770] sm:$0xff]
  %v589 = vld [vmem:[%s3 + $0x778] sm:$0xff]
  %v590 = vld [vmem:[%s3 + $0x780] sm:$0xff]
  %v591 = vld [vmem:[%s3 + $0x788] sm:$0xff]
  %v592 = vld [vmem:[%s3 + $0x790] sm:$0xff]
  %v593 = vld [vmem:[%s3 + $0x798] sm:$0xff]
  %v594 = vld [vmem:[%s3 + $0x7a0] sm:$0xff]
  %v595 = vld [vmem:[%s3 + $0x7a8] sm:$0xff]
  %v596 = vld [vmem:[%s3 + $0x7b0] sm:$0xff]
  %v597 = vld [vmem:[%s3 + $0x7b8] sm:$0xff]
  %v598 = vld [vmem:[%s3 + $0x7c0] sm:$0x33]
  %v599 = vld [vmem:[%s3 + $0x7c8] sm:$0x33]
  %v600 = vld [vmem:[%s3 + $0x7d0] sm:$0x33]
  %v601 = vld [vmem:[%s3 + $0x7d8] sm:$0x33]
  %v602 = vld [vmem:[%s4] sm:$0xff]
  %v604 = vlaneseq
  %v605 = vshrl.u32 %v604, 7
  %v606 = vsub.s32 0, %v605
  %v607 = vrot.slane %v602, %v606
  %v608 = vlaneseq
  %v609 = vshrl.u32 %v608, 7
  %v610 = vsub.s32 1, %v609
  %v611 = vrot.slane %v602, %v610
  %v612 = vlaneseq
  %v613 = vshrl.u32 %v612, 7
  %v614 = vsub.s32 2, %v613
  %v615 = vrot.slane %v602, %v614
  %v616 = vlaneseq
  %v617 = vshrl.u32 %v616, 7
  %v618 = vsub.s32 3, %v617
  %v619 = vrot.slane %v602, %v618
  %v620 = vlaneseq
  %v621 = vshrl.u32 %v620, 7
  %v622 = vsub.s32 4, %v621
  %v623 = vrot.slane %v602, %v622
  %v624 = vlaneseq
  %v625 = vshrl.u32 %v624, 7
  %v626 = vsub.s32 5, %v625
  %v627 = vrot.slane %v602, %v626
  %v628 = vlaneseq
  %v629 = vshrl.u32 %v628, 7
  %v630 = vsub.s32 6, %v629
  %v631 = vrot.slane %v602, %v630
  %v632 = vlaneseq
  %v633 = vshrl.u32 %v632, 7
  %v634 = vsub.s32 7, %v633
  %v635 = vrot.slane %v602, %v634
  %v896 = vunpack.c.l.b16 %v350
  %v897 = vunpack.c.h.b16 %v350
  %v898 = vunpack.c.l.b16 %v351
  %v899 = vunpack.c.h.b16 %v351
  %v900 = vunpack.c.l.b16 %v352
  %v901 = vunpack.c.h.b16 %v352
  %v902 = vunpack.c.l.b16 %v353
  %v903 = vunpack.c.h.b16 %v353
  %v904 = vunpack.c.l.b16 %v354
  %v905 = vunpack.c.h.b16 %v354
  %v906 = vunpack.c.l.b16 %v355
  %v907 = vunpack.c.h.b16 %v355
  %v908 = vunpack.c.l.b16 %v356
  %v909 = vunpack.c.h.b16 %v356
  %v910 = vunpack.c.l.b16 %v357
  %v911 = vunpack.c.h.b16 %v357
  %v912 = vunpack.c.l.b16 %v358
  %v913 = vunpack.c.h.b16 %v358
  %v914 = vunpack.c.l.b16 %v359
  %v915 = vunpack.c.h.b16 %v359
  %v916 = vunpack.c.l.b16 %v360
  %v917 = vunpack.c.h.b16 %v360
  %v918 = vunpack.c.l.b16 %v361
  %v919 = vunpack.c.h.b16 %v361
  %v920 = vunpack.c.l.b16 %v362
  %v921 = vunpack.c.h.b16 %v362
  %v922 = vunpack.c.l.b16 %v363
  %v923 = vunpack.c.h.b16 %v363
  %v924 = vunpack.c.l.b16 %v364
  %v925 = vunpack.c.h.b16 %v364
  %v926 = vunpack.c.l.b16 %v365
  %v927 = vunpack.c.h.b16 %v365
  %v928 = vunpack.c.l.b16 %v366
  %v929 = vunpack.c.h.b16 %v366
  %v930 = vunpack.c.l.b16 %v367
  %v931 = vunpack.c.h.b16 %v367
  %v932 = vunpack.c.l.b16 %v368
  %v933 = vunpack.c.h.b16 %v368
  %v934 = vunpack.c.l.b16 %v369
  %v935 = vunpack.c.h.b16 %v369
  %v936 = vunpack.c.l.b16 %v370
  %v937 = vunpack.c.h.b16 %v370
  %v938 = vunpack.c.l.b16 %v371
  %v939 = vunpack.c.h.b16 %v371
  %v940 = vunpack.c.l.b16 %v372
  %v941 = vunpack.c.h.b16 %v372
  %v942 = vunpack.c.l.b16 %v373
  %v943 = vunpack.c.h.b16 %v373
  %v944 = vunpack.c.l.b16 %v374
  %v945 = vunpack.c.h.b16 %v374
  %v946 = vunpack.c.l.b16 %v375
  %v947 = vunpack.c.h.b16 %v375
  %v948 = vunpack.c.l.b16 %v376
  %v949 = vunpack.c.h.b16 %v376
  %v950 = vunpack.c.l.b16 %v377
  %v951 = vunpack.c.h.b16 %v377
  %v952 = vunpack.c.l.b16 %v378
  %v953 = vunpack.c.h.b16 %v378
  %v954 = vunpack.c.l.b16 %v379
  %v955 = vunpack.c.h.b16 %v379
  %v956 = vunpack.c.l.b16 %v380
  %v957 = vunpack.c.h.b16 %v380
  %v958 = vunpack.c.l.b16 %v381
  %v959 = vunpack.c.h.b16 %v381
  %v960 = vunpack.c.l.b16 %v382
  %v961 = vunpack.c.h.b16 %v382
  %v962 = vunpack.c.l.b16 %v383
  %v963 = vunpack.c.h.b16 %v383
  %v964 = vunpack.c.l.b16 %v384
  %v965 = vunpack.c.h.b16 %v384
  %v966 = vunpack.c.l.b16 %v385
  %v967 = vunpack.c.h.b16 %v385
  %v968 = vunpack.c.l.b16 %v386
  %v969 = vunpack.c.h.b16 %v386
  %v970 = vunpack.c.l.b16 %v387
  %v971 = vunpack.c.h.b16 %v387
  %v972 = vunpack.c.l.b16 %v388
  %v973 = vunpack.c.h.b16 %v388
  %v974 = vunpack.c.l.b16 %v389
  %v975 = vunpack.c.h.b16 %v389
  %v976 = vunpack.c.l.b16 %v390
  %v977 = vunpack.c.h.b16 %v390
  %v978 = vunpack.c.l.b16 %v391
  %v979 = vunpack.c.h.b16 %v391
  %v980 = vunpack.c.l.b16 %v392
  %v981 = vunpack.c.h.b16 %v392
  %v982 = vunpack.c.l.b16 %v393
  %v983 = vunpack.c.h.b16 %v393
  %v984 = vunpack.c.l.b16 %v394
  %v985 = vunpack.c.h.b16 %v394
  %v986 = vunpack.c.l.b16 %v395
  %v987 = vunpack.c.h.b16 %v395
  %v988 = vunpack.c.l.b16 %v396
  %v989 = vunpack.c.h.b16 %v396
  %v990 = vunpack.c.l.b16 %v397
  %v991 = vunpack.c.h.b16 %v397
  %v992 = vunpack.c.l.b16 %v398
  %v993 = vunpack.c.h.b16 %v398
  %v994 = vunpack.c.l.b16 %v399
  %v995 = vunpack.c.h.b16 %v399
  %v996 = vunpack.c.l.b16 %v400
  %v997 = vunpack.c.h.b16 %v400
  %v998 = vunpack.c.l.b16 %v401
  %v999 = vunpack.c.h.b16 %v401
  %v1000 = vunpack.c.l.b16 %v402
  %v1001 = vunpack.c.h.b16 %v402
  %v1002 = vunpack.c.l.b16 %v403
  %v1003 = vunpack.c.h.b16 %v403
  %v1004 = vunpack.c.l.b16 %v404
  %v1005 = vunpack.c.h.b16 %v404
  %v1006 = vunpack.c.l.b16 %v405
  %v1007 = vunpack.c.h.b16 %v405
  %v1008 = vunpack.c.l.b16 %v406
  %v1009 = vunpack.c.h.b16 %v406
  %v1010 = vunpack.c.l.b16 %v407
  %v1011 = vunpack.c.h.b16 %v407
  %v1012 = vunpack.c.l.b16 %v408
  %v1013 = vunpack.c.h.b16 %v408
  %v1014 = vunpack.c.l.b16 %v409
  %v1015 = vunpack.c.h.b16 %v409
  %v1016 = vunpack.c.l.b16 %v410
  %v1017 = vunpack.c.h.b16 %v410
  %v1018 = vunpack.c.l.b16 %v411
  %v1019 = vunpack.c.h.b16 %v411
  %v1020 = vunpack.c.l.b16 %v412
  %v1021 = vunpack.c.h.b16 %v412
  %v1022 = vunpack.c.l.b16 %v413
  %v1023 = vunpack.c.h.b16 %v413
  %v1024 = vunpack.c.l.b16 %v414
  %v1025 = vunpack.c.h.b16 %v414
  %v1026 = vunpack.c.l.b16 %v415
  %v1027 = vunpack.c.h.b16 %v415
  %v1028 = vunpack.c.l.b16 %v416
  %v1029 = vunpack.c.h.b16 %v416
  %v1030 = vunpack.c.l.b16 %v417
  %v1031 = vunpack.c.h.b16 %v417
  %v1032 = vunpack.c.l.b16 %v418
  %v1033 = vunpack.c.h.b16 %v418
  %v1034 = vunpack.c.l.b16 %v419
  %v1035 = vunpack.c.h.b16 %v419
  %v1036 = vunpack.c.l.b16 %v420
  %v1037 = vunpack.c.h.b16 %v420
  %v1038 = vunpack.c.l.b16 %v421
  %v1039 = vunpack.c.h.b16 %v421
  %v1040 = vunpack.c.l.b16 %v422
  %v1041 = vunpack.c.h.b16 %v422
  %v1042 = vunpack.c.l.b16 %v423
  %v1043 = vunpack.c.h.b16 %v423
  %v1044 = vunpack.c.l.b16 %v424
  %v1045 = vunpack.c.h.b16 %v424
  %v1046 = vunpack.c.l.b16 %v425
  %v1047 = vunpack.c.h.b16 %v425
  %v1048 = vunpack.c.l.b16 %v426
  %v1049 = vunpack.c.h.b16 %v426
  %v1050 = vunpack.c.l.b16 %v427
  %v1051 = vunpack.c.h.b16 %v427
  %v1052 = vunpack.c.l.b16 %v428
  %v1053 = vunpack.c.h.b16 %v428
  %v1054 = vunpack.c.l.b16 %v429
  %v1055 = vunpack.c.h.b16 %v429
  %v1056 = vunpack.c.l.b16 %v430
  %v1057 = vunpack.c.h.b16 %v430
  %v1058 = vunpack.c.l.b16 %v431
  %v1059 = vunpack.c.h.b16 %v431
  %v1060 = vunpack.c.l.b16 %v432
  %v1061 = vunpack.c.h.b16 %v432
  %v1062 = vunpack.c.l.b16 %v433
  %v1063 = vunpack.c.h.b16 %v433
  %v1064 = vunpack.c.l.b16 %v434
  %v1065 = vunpack.c.h.b16 %v434
  %v1066 = vunpack.c.l.b16 %v435
  %v1067 = vunpack.c.h.b16 %v435
  %v1068 = vunpack.c.l.b16 %v436
  %v1069 = vunpack.c.h.b16 %v436
  %v1070 = vunpack.c.l.b16 %v437
  %v1071 = vunpack.c.h.b16 %v437
  %v1072 = vunpack.c.l.b16 %v438
  %v1073 = vunpack.c.h.b16 %v438
  %v1074 = vunpack.c.l.b16 %v439
  %v1075 = vunpack.c.h.b16 %v439
  %v1076 = vunpack.c.l.b16 %v440
  %v1077 = vunpack.c.h.b16 %v440
  %v1078 = vunpack.c.l.b16 %v441
  %v1079 = vunpack.c.h.b16 %v441
  %v1080 = vunpack.c.l.b16 %v442
  %v1081 = vunpack.c.h.b16 %v442
  %v1082 = vunpack.c.l.b16 %v443
  %v1083 = vunpack.c.h.b16 %v443
  %v1084 = vunpack.c.l.b16 %v444
  %v1085 = vunpack.c.h.b16 %v444
  %v1086 = vunpack.c.l.b16 %v445
  %v1087 = vunpack.c.h.b16 %v445
  %v1088 = vunpack.c.l.b16 %v446
  %v1089 = vunpack.c.h.b16 %v446
  %v1090 = vunpack.c.l.b16 %v447
  %v1091 = vunpack.c.h.b16 %v447
  %v1092 = vunpack.c.l.b16 %v448
  %v1093 = vunpack.c.h.b16 %v448
  %v1094 = vunpack.c.l.b16 %v449
  %v1095 = vunpack.c.h.b16 %v449
  %v1096 = vunpack.c.l.b16 %v450
  %v1097 = vunpack.c.h.b16 %v450
  %v1098 = vunpack.c.l.b16 %v451
  %v1099 = vunpack.c.h.b16 %v451
  %v1100 = vunpack.c.l.b16 %v452
  %v1101 = vunpack.c.h.b16 %v452
  %v1102 = vunpack.c.l.b16 %v453
  %v1103 = vunpack.c.h.b16 %v453
  %v1104 = vunpack.c.l.b16 %v454
  %v1105 = vunpack.c.h.b16 %v454
  %v1106 = vunpack.c.l.b16 %v455
  %v1107 = vunpack.c.h.b16 %v455
  %v1108 = vunpack.c.l.b16 %v456
  %v1109 = vunpack.c.h.b16 %v456
  %v1110 = vunpack.c.l.b16 %v457
  %v1111 = vunpack.c.h.b16 %v457
  %v1112 = vunpack.c.l.b16 %v458
  %v1113 = vunpack.c.h.b16 %v458
  %v1114 = vunpack.c.l.b16 %v459
  %v1115 = vunpack.c.h.b16 %v459
  %v1116 = vunpack.c.l.b16 %v460
  %v1117 = vunpack.c.h.b16 %v460
  %v1118 = vunpack.c.l.b16 %v461
  %v1119 = vunpack.c.h.b16 %v461
  %v1120 = vunpack.c.l.b16 %v462
  %v1121 = vunpack.c.h.b16 %v462
  %v1122 = vunpack.c.l.b16 %v463
  %v1123 = vunpack.c.h.b16 %v463
  %v1124 = vunpack.c.l.b16 %v464
  %v1125 = vunpack.c.h.b16 %v464
  %v1126 = vunpack.c.l.b16 %v465
  %v1127 = vunpack.c.h.b16 %v465
  %v1128 = vunpack.c.l.b16 %v466
  %v1129 = vunpack.c.h.b16 %v466
  %v1130 = vunpack.c.l.b16 %v467
  %v1131 = vunpack.c.h.b16 %v467
  %v1132 = vunpack.c.l.b16 %v468
  %v1133 = vunpack.c.h.b16 %v468
  %v1134 = vunpack.c.l.b16 %v469
  %v1135 = vunpack.c.h.b16 %v469
  %v1136 = vunpack.c.l.b16 %v470
  %v1137 = vunpack.c.h.b16 %v470
  %v1138 = vunpack.c.l.b16 %v471
  %v1139 = vunpack.c.h.b16 %v471
  %v1140 = vunpack.c.l.b16 %v472
  %v1141 = vunpack.c.h.b16 %v472
  %v1142 = vunpack.c.l.b16 %v473
  %v1143 = vunpack.c.h.b16 %v473
  %v1144 = vunpack.c.l.b16 %v474
  %v1145 = vunpack.c.h.b16 %v474
  %v1146 = vunpack.c.l.b16 %v475
  %v1147 = vunpack.c.h.b16 %v475
  %v1148 = vunpack.c.l.b16 %v476
  %v1149 = vunpack.c.h.b16 %v476
  %v1150 = vunpack.c.l.b16 %v477
  %v1151 = vunpack.c.h.b16 %v477
  %v1152 = vunpack.c.l.b16 %v478
  %v1153 = vunpack.c.h.b16 %v478
  %v1154 = vunpack.c.l.b16 %v479
  %v1155 = vunpack.c.h.b16 %v479
  %v1156 = vunpack.c.l.b16 %v480
  %v1157 = vunpack.c.h.b16 %v480
  %v1158 = vunpack.c.l.b16 %v481
  %v1159 = vunpack.c.h.b16 %v481
  %v1160 = vunpack.c.l.b16 %v482
  %v1161 = vunpack.c.h.b16 %v482
  %v1162 = vunpack.c.l.b16 %v483
  %v1163 = vunpack.c.h.b16 %v483
  %v1164 = vunpack.c.l.b16 %v484
  %v1165 = vunpack.c.h.b16 %v484
  %v1166 = vunpack.c.l.b16 %v485
  %v1167 = vunpack.c.h.b16 %v485
  %v1168 = vunpack.c.l.b16 %v486
  %v1169 = vunpack.c.h.b16 %v486
  %v1170 = vunpack.c.l.b16 %v487
  %v1171 = vunpack.c.h.b16 %v487
  %v1172 = vunpack.c.l.b16 %v488
  %v1173 = vunpack.c.h.b16 %v488
  %v1174 = vunpack.c.l.b16 %v489
  %v1175 = vunpack.c.h.b16 %v489
  %v1176 = vunpack.c.l.b16 %v490
  %v1177 = vunpack.c.h.b16 %v490
  %v1178 = vunpack.c.l.b16 %v491
  %v1179 = vunpack.c.h.b16 %v491
  %v1180 = vunpack.c.l.b16 %v492
  %v1181 = vunpack.c.h.b16 %v492
  %v1182 = vunpack.c.l.b16 %v493
  %v1183 = vunpack.c.h.b16 %v493
  %v1184 = vunpack.c.l.b16 %v494
  %v1185 = vunpack.c.h.b16 %v494
  %v1186 = vunpack.c.l.b16 %v495
  %v1187 = vunpack.c.h.b16 %v495
  %v1188 = vunpack.c.l.b16 %v496
  %v1189 = vunpack.c.h.b16 %v496
  %v1190 = vunpack.c.l.b16 %v497
  %v1191 = vunpack.c.h.b16 %v497
  %v1192 = vunpack.c.l.b16 %v498
  %v1193 = vunpack.c.h.b16 %v498
  %v1194 = vunpack.c.l.b16 %v499
  %v1195 = vunpack.c.h.b16 %v499
  %v1196 = vunpack.c.l.b16 %v500
  %v1197 = vunpack.c.h.b16 %v500
  %v1198 = vunpack.c.l.b16 %v501
  %v1199 = vunpack.c.h.b16 %v501
  %v1200 = vunpack.c.l.b16 %v502
  %v1201 = vunpack.c.h.b16 %v502
  %v1202 = vunpack.c.l.b16 %v503
  %v1203 = vunpack.c.h.b16 %v503
  %v1204 = vunpack.c.l.b16 %v504
  %v1205 = vunpack.c.h.b16 %v504
  %v1206 = vunpack.c.l.b16 %v505
  %v1207 = vunpack.c.h.b16 %v505
  %v1208 = vunpack.c.l.b16 %v506
  %v1209 = vunpack.c.h.b16 %v506
  %v1210 = vunpack.c.l.b16 %v507
  %v1211 = vunpack.c.h.b16 %v507
  %v1212 = vunpack.c.l.b16 %v508
  %v1213 = vunpack.c.h.b16 %v508
  %v1214 = vunpack.c.l.b16 %v509
  %v1215 = vunpack.c.h.b16 %v509
  %v1216 = vunpack.c.l.b16 %v510
  %v1217 = vunpack.c.h.b16 %v510
  %v1218 = vunpack.c.l.b16 %v511
  %v1219 = vunpack.c.h.b16 %v511
  %v1220 = vunpack.c.l.b16 %v512
  %v1221 = vunpack.c.h.b16 %v512
  %v1222 = vunpack.c.l.b16 %v513
  %v1223 = vunpack.c.h.b16 %v513
  %v1224 = vunpack.c.l.b16 %v514
  %v1225 = vunpack.c.h.b16 %v514
  %v1226 = vunpack.c.l.b16 %v515
  %v1227 = vunpack.c.h.b16 %v515
  %v1228 = vunpack.c.l.b16 %v516
  %v1229 = vunpack.c.h.b16 %v516
  %v1230 = vunpack.c.l.b16 %v517
  %v1231 = vunpack.c.h.b16 %v517
  %v1232 = vunpack.c.l.b16 %v518
  %v1233 = vunpack.c.h.b16 %v518
  %v1234 = vunpack.c.l.b16 %v519
  %v1235 = vunpack.c.h.b16 %v519
  %v1236 = vunpack.c.l.b16 %v520
  %v1237 = vunpack.c.h.b16 %v520
  %v1238 = vunpack.c.l.b16 %v521
  %v1239 = vunpack.c.h.b16 %v521
  %v1240 = vunpack.c.l.b16 %v522
  %v1241 = vunpack.c.h.b16 %v522
  %v1242 = vunpack.c.l.b16 %v523
  %v1243 = vunpack.c.h.b16 %v523
  %v1244 = vunpack.c.l.b16 %v524
  %v1245 = vunpack.c.h.b16 %v524
  %v1246 = vunpack.c.l.b16 %v525
  %v1247 = vunpack.c.h.b16 %v525
  %v1248 = vunpack.c.l.b16 %v526
  %v1249 = vunpack.c.h.b16 %v526
  %v1250 = vunpack.c.l.b16 %v527
  %v1251 = vunpack.c.h.b16 %v527
  %v1252 = vunpack.c.l.b16 %v528
  %v1253 = vunpack.c.h.b16 %v528
  %v1254 = vunpack.c.l.b16 %v529
  %v1255 = vunpack.c.h.b16 %v529
  %v1256 = vunpack.c.l.b16 %v530
  %v1257 = vunpack.c.h.b16 %v530
  %v1258 = vunpack.c.l.b16 %v531
  %v1259 = vunpack.c.h.b16 %v531
  %v1260 = vunpack.c.l.b16 %v532
  %v1261 = vunpack.c.h.b16 %v532
  %v1262 = vunpack.c.l.b16 %v533
  %v1263 = vunpack.c.h.b16 %v533
  %v1264 = vunpack.c.l.b16 %v534
  %v1265 = vunpack.c.h.b16 %v534
  %v1266 = vunpack.c.l.b16 %v535
  %v1267 = vunpack.c.h.b16 %v535
  %v1268 = vunpack.c.l.b16 %v536
  %v1269 = vunpack.c.h.b16 %v536
  %v1270 = vunpack.c.l.b16 %v537
  %v1271 = vunpack.c.h.b16 %v537
  %v1272 = vunpack.c.l.b16 %v538
  %v1273 = vunpack.c.h.b16 %v538
  %v1274 = vunpack.c.l.b16 %v539
  %v1275 = vunpack.c.h.b16 %v539
  %v1276 = vunpack.c.l.b16 %v540
  %v1277 = vunpack.c.h.b16 %v540
  %v1278 = vunpack.c.l.b16 %v541
  %v1279 = vunpack.c.h.b16 %v541
  %v1280 = vunpack.c.l.b16 %v542
  %v1281 = vunpack.c.h.b16 %v542
  %v1282 = vunpack.c.l.b16 %v543
  %v1283 = vunpack.c.h.b16 %v543
  %v1284 = vunpack.c.l.b16 %v544
  %v1285 = vunpack.c.h.b16 %v544
  %v1286 = vunpack.c.l.b16 %v545
  %v1287 = vunpack.c.h.b16 %v545
  %v1288 = vunpack.c.l.b16 %v546
  %v1289 = vunpack.c.h.b16 %v546
  %v1290 = vunpack.c.l.b16 %v547
  %v1291 = vunpack.c.h.b16 %v547
  %v1292 = vunpack.c.l.b16 %v548
  %v1293 = vunpack.c.h.b16 %v548
  %v1294 = vunpack.c.l.b16 %v549
  %v1295 = vunpack.c.h.b16 %v549
  %v1296 = vunpack.c.l.b16 %v550
  %v1297 = vunpack.c.h.b16 %v550
  %v1298 = vunpack.c.l.b16 %v551
  %v1299 = vunpack.c.h.b16 %v551
  %v1300 = vunpack.c.l.b16 %v552
  %v1301 = vunpack.c.h.b16 %v552
  %v1302 = vunpack.c.l.b16 %v553
  %v1303 = vunpack.c.h.b16 %v553
  %v1304 = vunpack.c.l.b16 %v554
  %v1305 = vunpack.c.h.b16 %v554
  %v1306 = vunpack.c.l.b16 %v555
  %v1307 = vunpack.c.h.b16 %v555
  %v1308 = vunpack.c.l.b16 %v556
  %v1309 = vunpack.c.h.b16 %v556
  %v1310 = vunpack.c.l.b16 %v557
  %v1311 = vunpack.c.h.b16 %v557
  %v1312 = vunpack.c.l.b16 %v558
  %v1313 = vunpack.c.h.b16 %v558
  %v1314 = vunpack.c.l.b16 %v559
  %v1315 = vunpack.c.h.b16 %v559
  %v1316 = vunpack.c.l.b16 %v560
  %v1317 = vunpack.c.h.b16 %v560
  %v1318 = vunpack.c.l.b16 %v561
  %v1319 = vunpack.c.h.b16 %v561
  %v1320 = vunpack.c.l.b16 %v562
  %v1321 = vunpack.c.h.b16 %v562
  %v1322 = vunpack.c.l.b16 %v563
  %v1323 = vunpack.c.h.b16 %v563
  %v1324 = vunpack.c.l.b16 %v564
  %v1325 = vunpack.c.h.b16 %v564
  %v1326 = vunpack.c.l.b16 %v565
  %v1327 = vunpack.c.h.b16 %v565
  %v1328 = vunpack.c.l.b16 %v566
  %v1329 = vunpack.c.h.b16 %v566
  %v1330 = vunpack.c.l.b16 %v567
  %v1331 = vunpack.c.h.b16 %v567
  %v1332 = vunpack.c.l.b16 %v568
  %v1333 = vunpack.c.h.b16 %v568
  %v1334 = vunpack.c.l.b16 %v569
  %v1335 = vunpack.c.h.b16 %v569
  %v1336 = vunpack.c.l.b16 %v570
  %v1337 = vunpack.c.h.b16 %v570
  %v1338 = vunpack.c.l.b16 %v571
  %v1339 = vunpack.c.h.b16 %v571
  %v1340 = vunpack.c.l.b16 %v572
  %v1341 = vunpack.c.h.b16 %v572
  %v1342 = vunpack.c.l.b16 %v573
  %v1343 = vunpack.c.h.b16 %v573
  %v1344 = vunpack.c.l.b16 %v574
  %v1345 = vunpack.c.h.b16 %v574
  %v1346 = vunpack.c.l.b16 %v575
  %v1347 = vunpack.c.h.b16 %v575
  %v1348 = vunpack.c.l.b16 %v576
  %v1349 = vunpack.c.h.b16 %v576
  %v1350 = vunpack.c.l.b16 %v577
  %v1351 = vunpack.c.h.b16 %v577
  %v1352 = vunpack.c.l.b16 %v578
  %v1353 = vunpack.c.h.b16 %v578
  %v1354 = vunpack.c.l.b16 %v579
  %v1355 = vunpack.c.h.b16 %v579
  %v1356 = vunpack.c.l.b16 %v580
  %v1357 = vunpack.c.h.b16 %v580
  %v1358 = vunpack.c.l.b16 %v581
  %v1359 = vunpack.c.h.b16 %v581
  %v1360 = vunpack.c.l.b16 %v582
  %v1361 = vunpack.c.h.b16 %v582
  %v1362 = vunpack.c.l.b16 %v583
  %v1363 = vunpack.c.h.b16 %v583
  %v1364 = vunpack.c.l.b16 %v584
  %v1365 = vunpack.c.h.b16 %v584
  %v1366 = vunpack.c.l.b16 %v585
  %v1367 = vunpack.c.h.b16 %v585
  %v1368 = vunpack.c.l.b16 %v586
  %v1369 = vunpack.c.h.b16 %v586
  %v1370 = vunpack.c.l.b16 %v587
  %v1371 = vunpack.c.h.b16 %v587
  %v1372 = vunpack.c.l.b16 %v588
  %v1373 = vunpack.c.h.b16 %v588
  %v1374 = vunpack.c.l.b16 %v589
  %v1375 = vunpack.c.h.b16 %v589
  %v1376 = vunpack.c.l.b16 %v590
  %v1377 = vunpack.c.h.b16 %v590
  %v1378 = vunpack.c.l.b16 %v591
  %v1379 = vunpack.c.h.b16 %v591
  %v1380 = vunpack.c.l.b16 %v592
  %v1381 = vunpack.c.h.b16 %v592
  %v1382 = vunpack.c.l.b16 %v593
  %v1383 = vunpack.c.h.b16 %v593
  %v1384 = vunpack.c.l.b16 %v594
  %v1385 = vunpack.c.h.b16 %v594
  %v1386 = vunpack.c.l.b16 %v595
  %v1387 = vunpack.c.h.b16 %v595
  %v1388 = vunpack.c.l.b16 %v596
  %v1389 = vunpack.c.h.b16 %v596
  %v1390 = vunpack.c.l.b16 %v597
  %v1391 = vunpack.c.h.b16 %v597
  %v1392 = vunpack.c.l.b16 %v598
  %v1393 = vunpack.c.h.b16 %v598
  %v1394 = vunpack.c.l.b16 %v599
  %v1395 = vunpack.c.h.b16 %v599
  %v1396 = vunpack.c.l.b16 %v600
  %v1397 = vunpack.c.h.b16 %v600
  %v1398 = vunpack.c.l.b16 %v601
  %v1399 = vunpack.c.h.b16 %v601
  %v1400 = vpack.c.b16 %v904, %v896
  %v1401 = vpack.c.b16 %v905, %v897
  %v1402 = vpack.c.b16 %v906, %v898
  %v1403 = vpack.c.b16 %v907, %v899
  %v1404 = vpack.c.b16 %v908, %v900
  %v1405 = vpack.c.b16 %v909, %v901
  %v1406 = vpack.c.b16 %v910, %v902
  %v1407 = vpack.c.b16 %v911, %v903
  %v1408 = vpack.c.b16 %v920, %v912
  %v1409 = vpack.c.b16 %v921, %v913
  %v1410 = vpack.c.b16 %v922, %v914
  %v1411 = vpack.c.b16 %v923, %v915
  %v1412 = vpack.c.b16 %v924, %v916
  %v1413 = vpack.c.b16 %v925, %v917
  %v1414 = vpack.c.b16 %v926, %v918
  %v1415 = vpack.c.b16 %v927, %v919
  %v1416 = vpack.c.b16 %v936, %v928
  %v1417 = vpack.c.b16 %v937, %v929
  %v1418 = vpack.c.b16 %v938, %v930
  %v1419 = vpack.c.b16 %v939, %v931
  %v1420 = vpack.c.b16 %v940, %v932
  %v1421 = vpack.c.b16 %v941, %v933
  %v1422 = vpack.c.b16 %v942, %v934
  %v1423 = vpack.c.b16 %v943, %v935
  %v1424 = vpack.c.b16 %v952, %v944
  %v1425 = vpack.c.b16 %v953, %v945
  %v1426 = vpack.c.b16 %v954, %v946
  %v1427 = vpack.c.b16 %v955, %v947
  %v1428 = vpack.c.b16 %v956, %v948
  %v1429 = vpack.c.b16 %v957, %v949
  %v1430 = vpack.c.b16 %v958, %v950
  %v1431 = vpack.c.b16 %v959, %v951
  %v1432 = vpack.c.b16 %v968, %v960
  %v1433 = vpack.c.b16 %v969, %v961
  %v1434 = vpack.c.b16 %v970, %v962
  %v1435 = vpack.c.b16 %v971, %v963
  %v1436 = vpack.c.b16 %v972, %v964
  %v1437 = vpack.c.b16 %v973, %v965
  %v1438 = vpack.c.b16 %v974, %v966
  %v1439 = vpack.c.b16 %v975, %v967
  %v1440 = vpack.c.b16 %v984, %v976
  %v1441 = vpack.c.b16 %v985, %v977
  %v1442 = vpack.c.b16 %v986, %v978
  %v1443 = vpack.c.b16 %v987, %v979
  %v1444 = vpack.c.b16 %v988, %v980
  %v1445 = vpack.c.b16 %v989, %v981
  %v1446 = vpack.c.b16 %v990, %v982
  %v1447 = vpack.c.b16 %v991, %v983
  %v1448 = vpack.c.b16 %v1000, %v992
  %v1449 = vpack.c.b16 %v1001, %v993
  %v1450 = vpack.c.b16 %v1002, %v994
  %v1451 = vpack.c.b16 %v1003, %v995
  %v1452 = vpack.c.b16 %v1004, %v996
  %v1453 = vpack.c.b16 %v1005, %v997
  %v1454 = vpack.c.b16 %v1006, %v998
  %v1455 = vpack.c.b16 %v1007, %v999
  %v1456 = vpack.c.b16 %v1016, %v1008
  %v1457 = vpack.c.b16 %v1017, %v1009
  %v1458 = vpack.c.b16 %v1018, %v1010
  %v1459 = vpack.c.b16 %v1019, %v1011
  %v1460 = vpack.c.b16 %v1020, %v1012
  %v1461 = vpack.c.b16 %v1021, %v1013
  %v1462 = vpack.c.b16 %v1022, %v1014
  %v1463 = vpack.c.b16 %v1023, %v1015
  %v1464 = vpack.c.b16 %v1032, %v1024
  %v1465 = vpack.c.b16 %v1033, %v1025
  %v1466 = vpack.c.b16 %v1034, %v1026
  %v1467 = vpack.c.b16 %v1035, %v1027
  %v1468 = vpack.c.b16 %v1036, %v1028
  %v1469 = vpack.c.b16 %v1037, %v1029
  %v1470 = vpack.c.b16 %v1038, %v1030
  %v1471 = vpack.c.b16 %v1039, %v1031
  %v1472 = vpack.c.b16 %v1048, %v1040
  %v1473 = vpack.c.b16 %v1049, %v1041
  %v1474 = vpack.c.b16 %v1050, %v1042
  %v1475 = vpack.c.b16 %v1051, %v1043
  %v1476 = vpack.c.b16 %v1052, %v1044
  %v1477 = vpack.c.b16 %v1053, %v1045
  %v1478 = vpack.c.b16 %v1054, %v1046
  %v1479 = vpack.c.b16 %v1055, %v1047
  %v1480 = vpack.c.b16 %v1064, %v1056
  %v1481 = vpack.c.b16 %v1065, %v1057
  %v1482 = vpack.c.b16 %v1066, %v1058
  %v1483 = vpack.c.b16 %v1067, %v1059
  %v1484 = vpack.c.b16 %v1068, %v1060
  %v1485 = vpack.c.b16 %v1069, %v1061
  %v1486 = vpack.c.b16 %v1070, %v1062
  %v1487 = vpack.c.b16 %v1071, %v1063
  %v1488 = vpack.c.b16 %v1080, %v1072
  %v1489 = vpack.c.b16 %v1081, %v1073
  %v1490 = vpack.c.b16 %v1082, %v1074
  %v1491 = vpack.c.b16 %v1083, %v1075
  %v1492 = vpack.c.b16 %v1084, %v1076
  %v1493 = vpack.c.b16 %v1085, %v1077
  %v1494 = vpack.c.b16 %v1086, %v1078
  %v1495 = vpack.c.b16 %v1087, %v1079
  %v1496 = vpack.c.b16 %v1096, %v1088
  %v1497 = vpack.c.b16 %v1097, %v1089
  %v1498 = vpack.c.b16 %v1098, %v1090
  %v1499 = vpack.c.b16 %v1099, %v1091
  %v1500 = vpack.c.b16 %v1100, %v1092
  %v1501 = vpack.c.b16 %v1101, %v1093
  %v1502 = vpack.c.b16 %v1102, %v1094
  %v1503 = vpack.c.b16 %v1103, %v1095
  %v1504 = vpack.c.b16 %v1112, %v1104
  %v1505 = vpack.c.b16 %v1113, %v1105
  %v1506 = vpack.c.b16 %v1114, %v1106
  %v1507 = vpack.c.b16 %v1115, %v1107
  %v1508 = vpack.c.b16 %v1116, %v1108
  %v1509 = vpack.c.b16 %v1117, %v1109
  %v1510 = vpack.c.b16 %v1118, %v1110
  %v1511 = vpack.c.b16 %v1119, %v1111
  %v1512 = vpack.c.b16 %v1128, %v1120
  %v1513 = vpack.c.b16 %v1129, %v1121
  %v1514 = vpack.c.b16 %v1130, %v1122
  %v1515 = vpack.c.b16 %v1131, %v1123
  %v1516 = vpack.c.b16 %v1132, %v1124
  %v1517 = vpack.c.b16 %v1133, %v1125
  %v1518 = vpack.c.b16 %v1134, %v1126
  %v1519 = vpack.c.b16 %v1135, %v1127
  %v1520 = vpack.c.b16 %v1144, %v1136
  %v1521 = vpack.c.b16 %v1145, %v1137
  %v1522 = vpack.c.b16 %v1146, %v1138
  %v1523 = vpack.c.b16 %v1147, %v1139
  %v1524 = vpack.c.b16 %v1148, %v1140
  %v1525 = vpack.c.b16 %v1149, %v1141
  %v1526 = vpack.c.b16 %v1150, %v1142
  %v1527 = vpack.c.b16 %v1151, %v1143
  %v1528 = vpack.c.b16 %v1160, %v1152
  %v1529 = vpack.c.b16 %v1161, %v1153
  %v1530 = vpack.c.b16 %v1162, %v1154
  %v1531 = vpack.c.b16 %v1163, %v1155
  %v1532 = vpack.c.b16 %v1164, %v1156
  %v1533 = vpack.c.b16 %v1165, %v1157
  %v1534 = vpack.c.b16 %v1166, %v1158
  %v1535 = vpack.c.b16 %v1167, %v1159
  %v1536 = vpack.c.b16 %v1176, %v1168
  %v1537 = vpack.c.b16 %v1177, %v1169
  %v1538 = vpack.c.b16 %v1178, %v1170
  %v1539 = vpack.c.b16 %v1179, %v1171
  %v1540 = vpack.c.b16 %v1180, %v1172
  %v1541 = vpack.c.b16 %v1181, %v1173
  %v1542 = vpack.c.b16 %v1182, %v1174
  %v1543 = vpack.c.b16 %v1183, %v1175
  %v1544 = vpack.c.b16 %v1192, %v1184
  %v1545 = vpack.c.b16 %v1193, %v1185
  %v1546 = vpack.c.b16 %v1194, %v1186
  %v1547 = vpack.c.b16 %v1195, %v1187
  %v1548 = vpack.c.b16 %v1196, %v1188
  %v1549 = vpack.c.b16 %v1197, %v1189
  %v1550 = vpack.c.b16 %v1198, %v1190
  %v1551 = vpack.c.b16 %v1199, %v1191
  %v1552 = vpack.c.b16 %v1208, %v1200
  %v1553 = vpack.c.b16 %v1209, %v1201
  %v1554 = vpack.c.b16 %v1210, %v1202
  %v1555 = vpack.c.b16 %v1211, %v1203
  %v1556 = vpack.c.b16 %v1212, %v1204
  %v1557 = vpack.c.b16 %v1213, %v1205
  %v1558 = vpack.c.b16 %v1214, %v1206
  %v1559 = vpack.c.b16 %v1215, %v1207
  %v1560 = vpack.c.b16 %v1224, %v1216
  %v1561 = vpack.c.b16 %v1225, %v1217
  %v1562 = vpack.c.b16 %v1226, %v1218
  %v1563 = vpack.c.b16 %v1227, %v1219
  %v1564 = vpack.c.b16 %v1228, %v1220
  %v1565 = vpack.c.b16 %v1229, %v1221
  %v1566 = vpack.c.b16 %v1230, %v1222
  %v1567 = vpack.c.b16 %v1231, %v1223
  %v1568 = vpack.c.b16 %v1240, %v1232
  %v1569 = vpack.c.b16 %v1241, %v1233
  %v1570 = vpack.c.b16 %v1242, %v1234
  %v1571 = vpack.c.b16 %v1243, %v1235
  %v1572 = vpack.c.b16 %v1244, %v1236
  %v1573 = vpack.c.b16 %v1245, %v1237
  %v1574 = vpack.c.b16 %v1246, %v1238
  %v1575 = vpack.c.b16 %v1247, %v1239
  %v1576 = vpack.c.b16 %v1256, %v1248
  %v1577 = vpack.c.b16 %v1257, %v1249
  %v1578 = vpack.c.b16 %v1258, %v1250
  %v1579 = vpack.c.b16 %v1259, %v1251
  %v1580 = vpack.c.b16 %v1260, %v1252
  %v1581 = vpack.c.b16 %v1261, %v1253
  %v1582 = vpack.c.b16 %v1262, %v1254
  %v1583 = vpack.c.b16 %v1263, %v1255
  %v1584 = vpack.c.b16 %v1272, %v1264
  %v1585 = vpack.c.b16 %v1273, %v1265
  %v1586 = vpack.c.b16 %v1274, %v1266
  %v1587 = vpack.c.b16 %v1275, %v1267
  %v1588 = vpack.c.b16 %v1276, %v1268
  %v1589 = vpack.c.b16 %v1277, %v1269
  %v1590 = vpack.c.b16 %v1278, %v1270
  %v1591 = vpack.c.b16 %v1279, %v1271
  %v1592 = vpack.c.b16 %v1288, %v1280
  %v1593 = vpack.c.b16 %v1289, %v1281
  %v1594 = vpack.c.b16 %v1290, %v1282
  %v1595 = vpack.c.b16 %v1291, %v1283
  %v1596 = vpack.c.b16 %v1292, %v1284
  %v1597 = vpack.c.b16 %v1293, %v1285
  %v1598 = vpack.c.b16 %v1294, %v1286
  %v1599 = vpack.c.b16 %v1295, %v1287
  %v1600 = vpack.c.b16 %v1304, %v1296
  %v1601 = vpack.c.b16 %v1305, %v1297
  %v1602 = vpack.c.b16 %v1306, %v1298
  %v1603 = vpack.c.b16 %v1307, %v1299
  %v1604 = vpack.c.b16 %v1308, %v1300
  %v1605 = vpack.c.b16 %v1309, %v1301
  %v1606 = vpack.c.b16 %v1310, %v1302
  %v1607 = vpack.c.b16 %v1311, %v1303
  %v1608 = vpack.c.b16 %v1320, %v1312
  %v1609 = vpack.c.b16 %v1321, %v1313
  %v1610 = vpack.c.b16 %v1322, %v1314
  %v1611 = vpack.c.b16 %v1323, %v1315
  %v1612 = vpack.c.b16 %v1324, %v1316
  %v1613 = vpack.c.b16 %v1325, %v1317
  %v1614 = vpack.c.b16 %v1326, %v1318
  %v1615 = vpack.c.b16 %v1327, %v1319
  %v1616 = vpack.c.b16 %v1336, %v1328
  %v1617 = vpack.c.b16 %v1337, %v1329
  %v1618 = vpack.c.b16 %v1338, %v1330
  %v1619 = vpack.c.b16 %v1339, %v1331
  %v1620 = vpack.c.b16 %v1340, %v1332
  %v1621 = vpack.c.b16 %v1341, %v1333
  %v1622 = vpack.c.b16 %v1342, %v1334
  %v1623 = vpack.c.b16 %v1343, %v1335
  %v1624 = vpack.c.b16 %v1352, %v1344
  %v1625 = vpack.c.b16 %v1353, %v1345
  %v1626 = vpack.c.b16 %v1354, %v1346
  %v1627 = vpack.c.b16 %v1355, %v1347
  %v1628 = vpack.c.b16 %v1356, %v1348
  %v1629 = vpack.c.b16 %v1357, %v1349
  %v1630 = vpack.c.b16 %v1358, %v1350
  %v1631 = vpack.c.b16 %v1359, %v1351
  %v1632 = vpack.c.b16 %v1368, %v1360
  %v1633 = vpack.c.b16 %v1369, %v1361
  %v1634 = vpack.c.b16 %v1370, %v1362
  %v1635 = vpack.c.b16 %v1371, %v1363
  %v1636 = vpack.c.b16 %v1372, %v1364
  %v1637 = vpack.c.b16 %v1373, %v1365
  %v1638 = vpack.c.b16 %v1374, %v1366
  %v1639 = vpack.c.b16 %v1375, %v1367
  %v1640 = vpack.c.b16 %v1384, %v1376
  %v1641 = vpack.c.b16 %v1385, %v1377
  %v1642 = vpack.c.b16 %v1386, %v1378
  %v1643 = vpack.c.b16 %v1387, %v1379
  %v1644 = vpack.c.b16 %v1388, %v1380
  %v1645 = vpack.c.b16 %v1389, %v1381
  %v1646 = vpack.c.b16 %v1390, %v1382
  %v1647 = vpack.c.b16 %v1391, %v1383
  %v1648 = vpack.c.b16 %v1392, %v1392
  %v1649 = vpack.c.b16 %v1393, %v1393
  %v1650 = vpack.c.b16 %v1394, %v1394
  %v1651 = vpack.c.b16 %v1395, %v1395
  %v1652 = vpack.c.b16 %v1396, %v1396
  %v1653 = vpack.c.b16 %v1397, %v1397
  %v1654 = vpack.c.b16 %v1398, %v1398
  %v1655 = vpack.c.b16 %v1399, %v1399
  %vm1904 = vcmask 949248
  %v1906 = vsel %vm1904, %v349, 0
  %vm1908 = vcmask 1041408
  %v1910 = vsel %vm1908, %v1648, 0
  %v1913 = vsel %vm1908, %v1649, 0
  %v1916 = vsel %vm1908, %v1650, 0
  %v1919 = vsel %vm1908, %v1651, 0
  %v1922 = vsel %vm1908, %v1652, 0
  %v1925 = vsel %vm1908, %v1653, 0
  %v1928 = vsel %vm1908, %v1654, 0
  %v1931 = vsel %vm1908, %v1655, 0
  %1933 = vmatprep.subr.bf16.mxu0 %v1401
  %1934 = vmatpush1.bf16.msra.mxu0 %v1400
  %1935 = vmatprep.subr.bf16.mxu0 %v1409
  %1936 = vmatpush1.bf16.msra.mxu0 %v1408
  %1937 = vmatprep.subr.bf16.mxu0 %v1417
  %1938 = vmatpush1.bf16.msra.mxu0 %v1416
  %1939 = vmatprep.subr.bf16.mxu0 %v1425
  %1940 = vmatpush1.bf16.msra.mxu0 %v1424
  %1941 = vmatprep.subr.bf16.mxu0 %v1433
  %1942 = vmatpush1.bf16.msra.mxu0 %v1432
  %1943 = vmatprep.subr.bf16.mxu0 %v1441
  %1944 = vmatpush1.bf16.msra.mxu0 %v1440
  %1945 = vmatprep.subr.bf16.mxu0 %v1449
  %1946 = vmatpush1.bf16.msra.mxu0 %v1448
  %1947 = vmatprep.subr.bf16.mxu0 %v1457
  %1948 = vmatpush1.bf16.msra.mxu0 %v1456
  %1949 = vmatprep.subr.bf16.mxu0 %v1465
  %1950 = vmatpush1.bf16.msra.mxu0 %v1464
  %1951 = vmatprep.subr.bf16.mxu0 %v1473
  %1952 = vmatpush1.bf16.msra.mxu0 %v1472
  %1953 = vmatprep.subr.bf16.mxu0 %v1481
  %1954 = vmatpush1.bf16.msra.mxu0 %v1480
  %1955 = vmatprep.subr.bf16.mxu0 %v1489
  %1956 = vmatpush1.bf16.msra.mxu0 %v1488
  %1957 = vmatprep.subr.bf16.mxu0 %v1497
  %1958 = vmatpush1.bf16.msra.mxu0 %v1496
  %1959 = vmatprep.subr.bf16.mxu0 %v1505
  %1960 = vmatpush1.bf16.msra.mxu0 %v1504
  %1961 = vmatprep.subr.bf16.mxu0 %v1513
  %1962 = vmatpush1.bf16.msra.mxu0 %v1512
  %1963 = vmatprep.subr.bf16.mxu0 %v1521
  %1964 = vmatpush1.bf16.msra.mxu0 %v1520
  %1965 = vmatprep.mubr.bf16.mxu0 %v347
  %1966 = vmatmul.mubr.bf16.gmra.mrb[0].mxu0 %v346
  %v1967 = vpop.f32.mrb[0].mxu0
  %v1968 = vadd.f32 %v607, %v1967
  %v1969 = vpop.f32.mrb[0].mxu0
  %v1970 = vadd.f32 %v611, %v1969
  %v1971 = vpop.f32.mrb[0].mxu0
  %v1972 = vadd.f32 %v607, %v1971
  %v1973 = vpop.f32.mrb[0].mxu0
  %v1974 = vadd.f32 %v611, %v1973
  %1975 = vdwg.mxu0
  %1976 = vmatprep.subr.bf16.mxu0 %v1529
  %1977 = vmatpush1.bf16.msra.mxu0 %v1528
  %1978 = vmatprep.subr.bf16.mxu0 %v1537
  %1979 = vmatpush1.bf16.msra.mxu0 %v1536
  %1980 = vmatprep.subr.bf16.mxu0 %v1545
  %1981 = vmatpush1.bf16.msra.mxu0 %v1544
  %1982 = vmatprep.subr.bf16.mxu0 %v1553
  %1983 = vmatpush1.bf16.msra.mxu0 %v1552
  %1984 = vmatprep.subr.bf16.mxu0 %v1561
  %1985 = vmatpush1.bf16.msra.mxu0 %v1560
  %1986 = vmatprep.subr.bf16.mxu0 %v1569
  %1987 = vmatpush1.bf16.msra.mxu0 %v1568
  %1988 = vmatprep.subr.bf16.mxu0 %v1577
  %1989 = vmatpush1.bf16.msra.mxu0 %v1576
  %1990 = vmatprep.subr.bf16.mxu0 %v1585
  %1991 = vmatpush1.bf16.msra.mxu0 %v1584
  %1992 = vmatprep.subr.bf16.mxu0 %v1593
  %1993 = vmatpush1.bf16.msra.mxu0 %v1592
  %1994 = vmatprep.subr.bf16.mxu0 %v1601
  %1995 = vmatpush1.bf16.msra.mxu0 %v1600
  %1996 = vmatprep.subr.bf16.mxu0 %v1609
  %1997 = vmatpush1.bf16.msra.mxu0 %v1608
  %1998 = vmatprep.subr.bf16.mxu0 %v1617
  %1999 = vmatpush1.bf16.msra.mxu0 %v1616
  %2000 = vmatprep.subr.bf16.mxu0 %v1625
  %2001 = vmatpush1.bf16.msra.mxu0 %v1624
  %2002 = vmatprep.subr.bf16.mxu0 %v1633
  %2003 = vmatpush1.bf16.msra.mxu0 %v1632
  %2004 = vmatprep.subr.bf16.mxu0 %v1641
  %2005 = vmatpush1.bf16.msra.mxu0 %v1640
  %2006 = vmatprep.subr.bf16.mxu0 %v1913
  %2007 = vmatpush1.bf16.msra.mxu0 %v1910
  %2008 = vmatprep.mubr.bf16.mxu0 %v1906
  %2009 = vmatmul.mubr.bf16.gmra.mrb[0].mxu0 %v348
  %v2010 = vpop.f32.mrb[0].mxu0
  %v2011 = vadd.f32 %v1968, %v2010
  %v2012 = vpop.f32.mrb[0].mxu0
  %v2013 = vadd.f32 %v1970, %v2012
  %v2014 = vpop.f32.mrb[0].mxu0
  %v2015 = vadd.f32 %v1972, %v2014
  %v2016 = vpop.f32.mrb[0].mxu0
  %v2017 = vadd.f32 %v1974, %v2016
  %2018 = vdwg.mxu0
  %2019 = vmatprep.subr.bf16.mxu0 %v1403
  %2020 = vmatpush1.bf16.msra.mxu0 %v1402
  %2021 = vmatprep.subr.bf16.mxu0 %v1411
  %2022 = vmatpush1.bf16.msra.mxu0 %v1410
  %2023 = vmatprep.subr.bf16.mxu0 %v1419
  %2024 = vmatpush1.bf16.msra.mxu0 %v1418
  %2025 = vmatprep.subr.bf16.mxu0 %v1427
  %2026 = vmatpush1.bf16.msra.mxu0 %v1426
  %2027 = vmatprep.subr.bf16.mxu0 %v1435
  %2028 = vmatpush1.bf16.msra.mxu0 %v1434
  %2029 = vmatprep.subr.bf16.mxu0 %v1443
  %2030 = vmatpush1.bf16.msra.mxu0 %v1442
  %2031 = vmatprep.subr.bf16.mxu0 %v1451
  %2032 = vmatpush1.bf16.msra.mxu0 %v1450
  %2033 = vmatprep.subr.bf16.mxu0 %v1459
  %2034 = vmatpush1.bf16.msra.mxu0 %v1458
  %2035 = vmatprep.subr.bf16.mxu0 %v1467
  %2036 = vmatpush1.bf16.msra.mxu0 %v1466
  %2037 = vmatprep.subr.bf16.mxu0 %v1475
  %2038 = vmatpush1.bf16.msra.mxu0 %v1474
  %2039 = vmatprep.subr.bf16.mxu0 %v1483
  %2040 = vmatpush1.bf16.msra.mxu0 %v1482
  %2041 = vmatprep.subr.bf16.mxu0 %v1491
  %2042 = vmatpush1.bf16.msra.mxu0 %v1490
  %2043 = vmatprep.subr.bf16.mxu0 %v1499
  %2044 = vmatpush1.bf16.msra.mxu0 %v1498
  %2045 = vmatprep.subr.bf16.mxu0 %v1507
  %2046 = vmatpush1.bf16.msra.mxu0 %v1506
  %2047 = vmatprep.subr.bf16.mxu0 %v1515
  %2048 = vmatpush1.bf16.msra.mxu0 %v1514
  %2049 = vmatprep.subr.bf16.mxu0 %v1523
  %2050 = vmatpush1.bf16.msra.mxu0 %v1522
  %2051 = vmatprep.mubr.bf16.mxu0 %v347
  %2052 = vmatmul.mubr.bf16.gmra.mrb[0].mxu0 %v346
  %v2053 = vpop.f32.mrb[0].mxu0
  %v2054 = vadd.f32 %v615, %v2053
  %v2055 = vpop.f32.mrb[0].mxu0
  %v2056 = vadd.f32 %v619, %v2055
  %v2057 = vpop.f32.mrb[0].mxu0
  %v2058 = vadd.f32 %v615, %v2057
  %v2059 = vpop.f32.mrb[0].mxu0
  %v2060 = vadd.f32 %v619, %v2059
  %2061 = vdwg.mxu0
  %2062 = vmatprep.subr.bf16.mxu0 %v1531
  %2063 = vmatpush1.bf16.msra.mxu0 %v1530
  %2064 = vmatprep.subr.bf16.mxu0 %v1539
  %2065 = vmatpush1.bf16.msra.mxu0 %v1538
  %2066 = vmatprep.subr.bf16.mxu0 %v1547
  %2067 = vmatpush1.bf16.msra.mxu0 %v1546
  %2068 = vmatprep.subr.bf16.mxu0 %v1555
  %2069 = vmatpush1.bf16.msra.mxu0 %v1554
  %2070 = vmatprep.subr.bf16.mxu0 %v1563
  %2071 = vmatpush1.bf16.msra.mxu0 %v1562
  %2072 = vmatprep.subr.bf16.mxu0 %v1571
  %2073 = vmatpush1.bf16.msra.mxu0 %v1570
  %2074 = vmatprep.subr.bf16.mxu0 %v1579
  %2075 = vmatpush1.bf16.msra.mxu0 %v1578
  %2076 = vmatprep.subr.bf16.mxu0 %v1587
  %2077 = vmatpush1.bf16.msra.mxu0 %v1586
  %2078 = vmatprep.subr.bf16.mxu0 %v1595
  %2079 = vmatpush1.bf16.msra.mxu0 %v1594
  %2080 = vmatprep.subr.bf16.mxu0 %v1603
  %2081 = vmatpush1.bf16.msra.mxu0 %v1602
  %2082 = vmatprep.subr.bf16.mxu0 %v1611
  %2083 = vmatpush1.bf16.msra.mxu0 %v1610
  %2084 = vmatprep.subr.bf16.mxu0 %v1619
  %2085 = vmatpush1.bf16.msra.mxu0 %v1618
  %2086 = vmatprep.subr.bf16.mxu0 %v1627
  %2087 = vmatpush1.bf16.msra.mxu0 %v1626
  %2088 = vmatprep.subr.bf16.mxu0 %v1635
  %2089 = vmatpush1.bf16.msra.mxu0 %v1634
  %2090 = vmatprep.subr.bf16.mxu0 %v1643
  %2091 = vmatpush1.bf16.msra.mxu0 %v1642
  %2092 = vmatprep.subr.bf16.mxu0 %v1919
  %2093 = vmatpush1.bf16.msra.mxu0 %v1916
  %2094 = vmatprep.mubr.bf16.mxu0 %v1906
  %2095 = vmatmul.mubr.bf16.gmra.mrb[0].mxu0 %v348
  %v2096 = vpop.f32.mrb[0].mxu0
  %v2097 = vadd.f32 %v2054, %v2096
  %v2098 = vpop.f32.mrb[0].mxu0
  %v2099 = vadd.f32 %v2056, %v2098
  %v2100 = vpop.f32.mrb[0].mxu0
  %v2101 = vadd.f32 %v2058, %v2100
  %v2102 = vpop.f32.mrb[0].mxu0
  %v2103 = vadd.f32 %v2060, %v2102
  %2104 = vdwg.mxu0
  %2105 = vmatprep.subr.bf16.mxu0 %v1405
  %2106 = vmatpush1.bf16.msra.mxu0 %v1404
  %2107 = vmatprep.subr.bf16.mxu0 %v1413
  %2108 = vmatpush1.bf16.msra.mxu0 %v1412
  %2109 = vmatprep.subr.bf16.mxu0 %v1421
  %2110 = vmatpush1.bf16.msra.mxu0 %v1420
  %2111 = vmatprep.subr.bf16.mxu0 %v1429
  %2112 = vmatpush1.bf16.msra.mxu0 %v1428
  %2113 = vmatprep.subr.bf16.mxu0 %v1437
  %2114 = vmatpush1.bf16.msra.mxu0 %v1436
  %2115 = vmatprep.subr.bf16.mxu0 %v1445
  %2116 = vmatpush1.bf16.msra.mxu0 %v1444
  %2117 = vmatprep.subr.bf16.mxu0 %v1453
  %2118 = vmatpush1.bf16.msra.mxu0 %v1452
  %2119 = vmatprep.subr.bf16.mxu0 %v1461
  %2120 = vmatpush1.bf16.msra.mxu0 %v1460
  %2121 = vmatprep.subr.bf16.mxu0 %v1469
  %2122 = vmatpush1.bf16.msra.mxu0 %v1468
  %2123 = vmatprep.subr.bf16.mxu0 %v1477
  %2124 = vmatpush1.bf16.msra.mxu0 %v1476
  %2125 = vmatprep.subr.bf16.mxu0 %v1485
  %2126 = vmatpush1.bf16.msra.mxu0 %v1484
  %2127 = vmatprep.subr.bf16.mxu0 %v1493
  %2128 = vmatpush1.bf16.msra.mxu0 %v1492
  %2129 = vmatprep.subr.bf16.mxu0 %v1501
  %2130 = vmatpush1.bf16.msra.mxu0 %v1500
  %2131 = vmatprep.subr.bf16.mxu0 %v1509
  %2132 = vmatpush1.bf16.msra.mxu0 %v1508
  %2133 = vmatprep.subr.bf16.mxu0 %v1517
  %2134 = vmatpush1.bf16.msra.mxu0 %v1516
  %2135 = vmatprep.subr.bf16.mxu0 %v1525
  %2136 = vmatpush1.bf16.msra.mxu0 %v1524
  %2137 = vmatprep.mubr.bf16.mxu0 %v347
  %2138 = vmatmul.mubr.bf16.gmra.mrb[0].mxu0 %v346
  %v2139 = vpop.f32.mrb[0].mxu0
  %v2140 = vadd.f32 %v623, %v2139
  %v2141 = vpop.f32.mrb[0].mxu0
  %v2142 = vadd.f32 %v627, %v2141
  %v2143 = vpop.f32.mrb[0].mxu0
  %v2144 = vadd.f32 %v623, %v2143
  %v2145 = vpop.f32.mrb[0].mxu0
  %v2146 = vadd.f32 %v627, %v2145
  %2147 = vdwg.mxu0
  %2148 = vmatprep.subr.bf16.mxu0 %v1533
  %2149 = vmatpush1.bf16.msra.mxu0 %v1532
  %2150 = vmatprep.subr.bf16.mxu0 %v1541
  %2151 = vmatpush1.bf16.msra.mxu0 %v1540
  %2152 = vmatprep.subr.bf16.mxu0 %v1549
  %2153 = vmatpush1.bf16.msra.mxu0 %v1548
  %2154 = vmatprep.subr.bf16.mxu0 %v1557
  %2155 = vmatpush1.bf16.msra.mxu0 %v1556
  %2156 = vmatprep.subr.bf16.mxu0 %v1565
  %2157 = vmatpush1.bf16.msra.mxu0 %v1564
  %2158 = vmatprep.subr.bf16.mxu0 %v1573
  %2159 = vmatpush1.bf16.msra.mxu0 %v1572
  %2160 = vmatprep.subr.bf16.mxu0 %v1581
  %2161 = vmatpush1.bf16.msra.mxu0 %v1580
  %2162 = vmatprep.subr.bf16.mxu0 %v1589
  %2163 = vmatpush1.bf16.msra.mxu0 %v1588
  %2164 = vmatprep.subr.bf16.mxu0 %v1597
  %2165 = vmatpush1.bf16.msra.mxu0 %v1596
  %2166 = vmatprep.subr.bf16.mxu0 %v1605
  %2167 = vmatpush1.bf16.msra.mxu0 %v1604
  %2168 = vmatprep.subr.bf16.mxu0 %v1613
  %2169 = vmatpush1.bf16.msra.mxu0 %v1612
  %2170 = vmatprep.subr.bf16.mxu0 %v1621
  %2171 = vmatpush1.bf16.msra.mxu0 %v1620
  %2172 = vmatprep.subr.bf16.mxu0 %v1629
  %2173 = vmatpush1.bf16.msra.mxu0 %v1628
  %2174 = vmatprep.subr.bf16.mxu0 %v1637
  %2175 = vmatpush1.bf16.msra.mxu0 %v1636
  %2176 = vmatprep.subr.bf16.mxu0 %v1645
  %2177 = vmatpush1.bf16.msra.mxu0 %v1644
  %2178 = vmatprep.subr.bf16.mxu0 %v1925
  %2179 = vmatpush1.bf16.msra.mxu0 %v1922
  %2180 = vmatprep.mubr.bf16.mxu0 %v1906
  %2181 = vmatmul.mubr.bf16.gmra.mrb[0].mxu0 %v348
  %v2182 = vpop.f32.mrb[0].mxu0
  %v2183 = vadd.f32 %v2140, %v2182
  %v2184 = vpop.f32.mrb[0].mxu0
  %v2185 = vadd.f32 %v2142, %v2184
  %v2186 = vpop.f32.mrb[0].mxu0
  %v2187 = vadd.f32 %v2144, %v2186
  %v2188 = vpop.f32.mrb[0].mxu0
  %v2189 = vadd.f32 %v2146, %v2188
  %2190 = vdwg.mxu0
  %2191 = vmatprep.subr.bf16.mxu0 %v1407
  %2192 = vmatpush1.bf16.msra.mxu0 %v1406
  %2193 = vmatprep.subr.bf16.mxu0 %v1415
  %2194 = vmatpush1.bf16.msra.mxu0 %v1414
  %2195 = vmatprep.subr.bf16.mxu0 %v1423
  %2196 = vmatpush1.bf16.msra.mxu0 %v1422
  %2197 = vmatprep.subr.bf16.mxu0 %v1431
  %2198 = vmatpush1.bf16.msra.mxu0 %v1430
  %2199 = vmatprep.subr.bf16.mxu0 %v1439
  %2200 = vmatpush1.bf16.msra.mxu0 %v1438
  %2201 = vmatprep.subr.bf16.mxu0 %v1447
  %2202 = vmatpush1.bf16.msra.mxu0 %v1446
  %2203 = vmatprep.subr.bf16.mxu0 %v1455
  %2204 = vmatpush1.bf16.msra.mxu0 %v1454
  %2205 = vmatprep.subr.bf16.mxu0 %v1463
  %2206 = vmatpush1.bf16.msra.mxu0 %v1462
  %2207 = vmatprep.subr.bf16.mxu0 %v1471
  %2208 = vmatpush1.bf16.msra.mxu0 %v1470
  %2209 = vmatprep.subr.bf16.mxu0 %v1479
  %2210 = vmatpush1.bf16.msra.mxu0 %v1478
  %2211 = vmatprep.subr.bf16.mxu0 %v1487
  %2212 = vmatpush1.bf16.msra.mxu0 %v1486
  %2213 = vmatprep.subr.bf16.mxu0 %v1495
  %2214 = vmatpush1.bf16.msra.mxu0 %v1494
  %2215 = vmatprep.subr.bf16.mxu0 %v1503
  %2216 = vmatpush1.bf16.msra.mxu0 %v1502
  %2217 = vmatprep.subr.bf16.mxu0 %v1511
  %2218 = vmatpush1.bf16.msra.mxu0 %v1510
  %2219 = vmatprep.subr.bf16.mxu0 %v1519
  %2220 = vmatpush1.bf16.msra.mxu0 %v1518
  %2221 = vmatprep.subr.bf16.mxu0 %v1527
  %2222 = vmatpush1.bf16.msra.mxu0 %v1526
  %2223 = vmatprep.mubr.bf16.mxu0 %v347
  %2224 = vmatmul.mubr.bf16.gmra.mrb[0].mxu0 %v346
  %v2225 = vpop.f32.mrb[0].mxu0
  %v2226 = vadd.f32 %v631, %v2225
  %v2227 = vpop.f32.mrb[0].mxu0
  %v2228 = vadd.f32 %v635, %v2227
  %v2229 = vpop.f32.mrb[0].mxu0
  %v2230 = vadd.f32 %v631, %v2229
  %v2231 = vpop.f32.mrb[0].mxu0
  %v2232 = vadd.f32 %v635, %v2231
  %2233 = vdwg.mxu0
  %2234 = vmatprep.subr.bf16.mxu0 %v1535
  %2235 = vmatpush1.bf16.msra.mxu0 %v1534
  %2236 = vmatprep.subr.bf16.mxu0 %v1543
  %2237 = vmatpush1.bf16.msra.mxu0 %v1542
  %2238 = vmatprep.subr.bf16.mxu0 %v1551
  %2239 = vmatpush1.bf16.msra.mxu0 %v1550
  %2240 = vmatprep.subr.bf16.mxu0 %v1559
  %2241 = vmatpush1.bf16.msra.mxu0 %v1558
  %2242 = vmatprep.subr.bf16.mxu0 %v1567
  %2243 = vmatpush1.bf16.msra.mxu0 %v1566
  %2244 = vmatprep.subr.bf16.mxu0 %v1575
  %2245 = vmatpush1.bf16.msra.mxu0 %v1574
  %2246 = vmatprep.subr.bf16.mxu0 %v1583
  %2247 = vmatpush1.bf16.msra.mxu0 %v1582
  %2248 = vmatprep.subr.bf16.mxu0 %v1591
  %2249 = vmatpush1.bf16.msra.mxu0 %v1590
  %2250 = vmatprep.subr.bf16.mxu0 %v1599
  %2251 = vmatpush1.bf16.msra.mxu0 %v1598
  %2252 = vmatprep.subr.bf16.mxu0 %v1607
  %2253 = vmatpush1.bf16.msra.mxu0 %v1606
  %2254 = vmatprep.subr.bf16.mxu0 %v1615
  %2255 = vmatpush1.bf16.msra.mxu0 %v1614
  %2256 = vmatprep.subr.bf16.mxu0 %v1623
  %2257 = vmatpush1.bf16.msra.mxu0 %v1622
  %2258 = vmatprep.subr.bf16.mxu0 %v1631
  %2259 = vmatpush1.bf16.msra.mxu0 %v1630
  %2260 = vmatprep.subr.bf16.mxu0 %v1639
  %2261 = vmatpush1.bf16.msra.mxu0 %v1638
  %2262 = vmatprep.subr.bf16.mxu0 %v1647
  %2263 = vmatpush1.bf16.msra.mxu0 %v1646
  %2264 = vmatprep.subr.bf16.mxu0 %v1931
  %2265 = vmatpush1.bf16.msra.mxu0 %v1928
  %2266 = vmatprep.mubr.bf16.mxu0 %v1906
  %2267 = vmatmul.mubr.bf16.gmra.mrb[0].mxu0 %v348
  %v2268 = vpop.f32.mrb[0].mxu0
  %v2269 = vadd.f32 %v2226, %v2268
  %v2270 = vpop.f32.mrb[0].mxu0
  %v2271 = vadd.f32 %v2228, %v2270
  %v2272 = vpop.f32.mrb[0].mxu0
  %v2273 = vadd.f32 %v2230, %v2272
  %v2274 = vpop.f32.mrb[0].mxu0
  %v2275 = vadd.f32 %v2232, %v2274
  %2276 = vdwg.mxu0
  %v2277 = vtanh.pop %v2011
  %v2278 = vtanh.pop %v2013
  %v2279 = vtanh.pop %v2097
  %v2280 = vtanh.pop %v2099
  %v2281 = vtanh.pop %v2183
  %v2282 = vtanh.pop %v2185
  %v2283 = vtanh.pop %v2269
  %v2284 = vtanh.pop %v2271
  %v2285 = vtanh.pop %v2015
  %v2286 = vtanh.pop %v2017
  %v2287 = vtanh.pop %v2101
  %v2288 = vtanh.pop %v2103
  %v2289 = vtanh.pop %v2187
  %v2290 = vtanh.pop %v2189
  %v2291 = vtanh.pop %v2273
  %v2292 = vtanh.pop %v2275
  %v2293 = vpack.c.bf16 %v2285, %v2277
  %v2294 = vpack.c.bf16 %v2286, %v2278
  %v2295 = vpack.c.bf16 %v2287, %v2279
  %v2296 = vpack.c.bf16 %v2288, %v2280
  %v2297 = vpack.c.bf16 %v2289, %v2281
  %v2298 = vpack.c.bf16 %v2290, %v2282
  %v2299 = vpack.c.bf16 %v2291, %v2283
  %v2300 = vpack.c.bf16 %v2292, %v2284
  %v2301 = vld [vmem:[%s5] sm:$0xf]
  %v2302 = vld [vmem:[%s5 + $0x4] sm:$0xf]
  %v2303 = vld [vmem:[%s5 + $0x8] sm:$0xf]
  %v2304 = vld [vmem:[%s5 + $0xc] sm:$0xf]
  %v2305 = vld [vmem:[%s5 + $0x10] sm:$0xf]
  %v2306 = vld [vmem:[%s5 + $0x14] sm:$0xf]
  %v2307 = vld [vmem:[%s5 + $0x18] sm:$0xf]
  %v2308 = vld [vmem:[%s5 + $0x1c] sm:$0xf]
  %v2309 = vld [vmem:[%s5 + $0x20] sm:$0xf]
  %v2310 = vld [vmem:[%s5 + $0x24] sm:$0xf]
  %v2311 = vld [vmem:[%s5 + $0x28] sm:$0xf]
  %v2312 = vld [vmem:[%s5 + $0x2c] sm:$0xf]
  %v2313 = vld [vmem:[%s5 + $0x30] sm:$0xf]
  %v2314 = vld [vmem:[%s5 + $0x34] sm:$0xf]
  %v2315 = vld [vmem:[%s5 + $0x38] sm:$0xf]
  %v2316 = vld [vmem:[%s5 + $0x3c] sm:$0xf]
  %v2317 = vld [vmem:[%s5 + $0x40] sm:$0xf]
  %v2318 = vld [vmem:[%s5 + $0x44] sm:$0xf]
  %v2319 = vld [vmem:[%s5 + $0x48] sm:$0xf]
  %v2320 = vld [vmem:[%s5 + $0x4c] sm:$0xf]
  %v2321 = vld [vmem:[%s5 + $0x50] sm:$0xf]
  %v2322 = vld [vmem:[%s5 + $0x54] sm:$0xf]
  %v2323 = vld [vmem:[%s5 + $0x58] sm:$0xf]
  %v2324 = vld [vmem:[%s5 + $0x5c] sm:$0xf]
  %v2325 = vld [vmem:[%s5 + $0x60] sm:$0xf]
  %v2326 = vld [vmem:[%s5 + $0x64] sm:$0xf]
  %v2327 = vld [vmem:[%s5 + $0x68] sm:$0xf]
  %v2328 = vld [vmem:[%s5 + $0x6c] sm:$0xf]
  %v2329 = vld [vmem:[%s5 + $0x70] sm:$0xf]
  %v2330 = vld [vmem:[%s5 + $0x74] sm:$0xf]
  %v2331 = vld [vmem:[%s5 + $0x78] sm:$0xf]
  %v2332 = vld [vmem:[%s5 + $0x7c] sm:$0xf]
  %v2333 = vld [vmem:[%s5 + $0x80] sm:$0xf]
  %v2334 = vld [vmem:[%s5 + $0x84] sm:$0xf]
  %v2335 = vld [vmem:[%s5 + $0x88] sm:$0xf]
  %v2336 = vld [vmem:[%s5 + $0x8c] sm:$0xf]
  %v2337 = vld [vmem:[%s5 + $0x90] sm:$0xf]
  %v2338 = vld [vmem:[%s5 + $0x94] sm:$0xf]
  %v2339 = vld [vmem:[%s5 + $0x98] sm:$0xf]
  %v2340 = vld [vmem:[%s5 + $0x9c] sm:$0xf]
  %v2341 = vld [vmem:[%s5 + $0xa0] sm:$0xf]
  %v2342 = vld [vmem:[%s5 + $0xa4] sm:$0xf]
  %v2343 = vld [vmem:[%s5 + $0xa8] sm:$0xf]
  %v2344 = vld [vmem:[%s5 + $0xac] sm:$0xf]
  %v2345 = vld [vmem:[%s5 + $0xb0] sm:$0xf]
  %v2346 = vld [vmem:[%s5 + $0xb4] sm:$0xf]
  %v2347 = vld [vmem:[%s5 + $0xb8] sm:$0xf]
  %v2348 = vld [vmem:[%s5 + $0xbc] sm:$0xf]
  %v2349 = vld [vmem:[%s5 + $0xc0] sm:$0xf]
  %v2350 = vld [vmem:[%s5 + $0xc4] sm:$0xf]
  %v2351 = vld [vmem:[%s5 + $0xc8] sm:$0xf]
  %v2352 = vld [vmem:[%s5 + $0xcc] sm:$0xf]
  %v2353 = vld [vmem:[%s5 + $0xd0] sm:$0xf]
  %v2354 = vld [vmem:[%s5 + $0xd4] sm:$0xf]
  %v2355 = vld [vmem:[%s5 + $0xd8] sm:$0xf]
  %v2356 = vld [vmem:[%s5 + $0xdc] sm:$0xf]
  %v2357 = vld [vmem:[%s5 + $0xe0] sm:$0xf]
  %v2358 = vld [vmem:[%s5 + $0xe4] sm:$0xf]
  %v2359 = vld [vmem:[%s5 + $0xe8] sm:$0xf]
  %v2360 = vld [vmem:[%s5 + $0xec] sm:$0xf]
  %v2361 = vld [vmem:[%s5 + $0xf0] sm:$0xf]
  %v2362 = vld [vmem:[%s5 + $0xf4] sm:$0xf]
  %v2363 = vld [vmem:[%s5 + $0xf8] sm:$0xf]
  %v2364 = vld [vmem:[%s5 + $0xfc] sm:$0xf]
  %v2365 = vld [vmem:[%s5 + $0x100] sm:$0xf]
  %v2366 = vld [vmem:[%s5 + $0x104] sm:$0xf]
  %v2367 = vld [vmem:[%s5 + $0x108] sm:$0xf]
  %v2368 = vld [vmem:[%s5 + $0x10c] sm:$0xf]
  %v2369 = vld [vmem:[%s5 + $0x110] sm:$0xf]
  %v2370 = vld [vmem:[%s5 + $0x114] sm:$0xf]
  %v2371 = vld [vmem:[%s5 + $0x118] sm:$0xf]
  %v2372 = vld [vmem:[%s5 + $0x11c] sm:$0xf]
  %v2373 = vld [vmem:[%s5 + $0x120] sm:$0xf]
  %v2374 = vld [vmem:[%s5 + $0x124] sm:$0xf]
  %v2375 = vld [vmem:[%s5 + $0x128] sm:$0xf]
  %v2376 = vld [vmem:[%s5 + $0x12c] sm:$0xf]
  %v2377 = vld [vmem:[%s5 + $0x130] sm:$0xf]
  %v2378 = vld [vmem:[%s5 + $0x134] sm:$0xf]
  %v2379 = vld [vmem:[%s5 + $0x138] sm:$0xf]
  %v2380 = vld [vmem:[%s5 + $0x13c] sm:$0xf]
  %v2381 = vld [vmem:[%s5 + $0x140] sm:$0xf]
  %v2382 = vld [vmem:[%s5 + $0x144] sm:$0xf]
  %v2383 = vld [vmem:[%s5 + $0x148] sm:$0xf]
  %v2384 = vld [vmem:[%s5 + $0x14c] sm:$0xf]
  %v2385 = vld [vmem:[%s5 + $0x150] sm:$0xf]
  %v2386 = vld [vmem:[%s5 + $0x154] sm:$0xf]
  %v2387 = vld [vmem:[%s5 + $0x158] sm:$0xf]
  %v2388 = vld [vmem:[%s5 + $0x15c] sm:$0xf]
  %v2389 = vld [vmem:[%s5 + $0x160] sm:$0xf]
  %v2390 = vld [vmem:[%s5 + $0x164] sm:$0xf]
  %v2391 = vld [vmem:[%s5 + $0x168] sm:$0xf]
  %v2392 = vld [vmem:[%s5 + $0x16c] sm:$0xf]
  %v2393 = vld [vmem:[%s5 + $0x170] sm:$0xf]
  %v2394 = vld [vmem:[%s5 + $0x174] sm:$0xf]
  %v2395 = vld [vmem:[%s5 + $0x178] sm:$0xf]
  %v2396 = vld [vmem:[%s5 + $0x17c] sm:$0xf]
  %v2397 = vld [vmem:[%s5 + $0x180] sm:$0xf]
  %v2398 = vld [vmem:[%s5 + $0x184] sm:$0xf]
  %v2399 = vld [vmem:[%s5 + $0x188] sm:$0xf]
  %v2400 = vld [vmem:[%s5 + $0x18c] sm:$0xf]
  %v2401 = vld [vmem:[%s5 + $0x190] sm:$0xf]
  %v2402 = vld [vmem:[%s5 + $0x194] sm:$0xf]
  %v2403 = vld [vmem:[%s5 + $0x198] sm:$0xf]
  %v2404 = vld [vmem:[%s5 + $0x19c] sm:$0xf]
  %v2405 = vld [vmem:[%s5 + $0x1a0] sm:$0xf]
  %v2406 = vld [vmem:[%s5 + $0x1a4] sm:$0xf]
  %v2407 = vld [vmem:[%s5 + $0x1a8] sm:$0xf]
  %v2408 = vld [vmem:[%s5 + $0x1ac] sm:$0xf]
  %v2409 = vld [vmem:[%s5 + $0x1b0] sm:$0xf]
  %v2410 = vld [vmem:[%s5 + $0x1b4] sm:$0xf]
  %v2411 = vld [vmem:[%s5 + $0x1b8] sm:$0xf]
  %v2412 = vld [vmem:[%s5 + $0x1bc] sm:$0xf]
  %v2413 = vld [vmem:[%s5 + $0x1c0] sm:$0xf]
  %v2414 = vld [vmem:[%s5 + $0x1c4] sm:$0xf]
  %v2415 = vld [vmem:[%s5 + $0x1c8] sm:$0xf]
  %v2416 = vld [vmem:[%s5 + $0x1cc] sm:$0xf]
  %v2417 = vld [vmem:[%s5 + $0x1d0] sm:$0xf]
  %v2418 = vld [vmem:[%s5 + $0x1d4] sm:$0xf]
  %v2419 = vld [vmem:[%s5 + $0x1d8] sm:$0xf]
  %v2420 = vld [vmem:[%s5 + $0x1dc] sm:$0xf]
  %v2421 = vld [vmem:[%s5 + $0x1e0] sm:$0xf]
  %v2422 = vld [vmem:[%s5 + $0x1e4] sm:$0xf]
  %v2423 = vld [vmem:[%s5 + $0x1e8] sm:$0xf]
  %v2424 = vld [vmem:[%s5 + $0x1ec] sm:$0xf]
  %v2425 = vld [vmem:[%s5 + $0x1f0] sm:$0xf]
  %v2426 = vld [vmem:[%s6] sm:$0x1]
  %v2428 = vlaneseq
  %v2429 = vshrl.u32 %v2428, 7
  %v2430 = vsub.s32 0, %v2429
  %v2431 = vrot.slane %v2426, %v2430
  %v2558 = vunpack.c.l.b16 %v2301
  %v2559 = vunpack.c.l.b16 %v2302
  %v2560 = vunpack.c.l.b16 %v2303
  %v2561 = vunpack.c.l.b16 %v2304
  %v2562 = vunpack.c.l.b16 %v2305
  %v2563 = vunpack.c.l.b16 %v2306
  %v2564 = vunpack.c.l.b16 %v2307
  %v2565 = vunpack.c.l.b16 %v2308
  %v2566 = vunpack.c.l.b16 %v2309
  %v2567 = vunpack.c.l.b16 %v2310
  %v2568 = vunpack.c.l.b16 %v2311
  %v2569 = vunpack.c.l.b16 %v2312
  %v2570 = vunpack.c.l.b16 %v2313
  %v2571 = vunpack.c.l.b16 %v2314
  %v2572 = vunpack.c.l.b16 %v2315
  %v2573 = vunpack.c.l.b16 %v2316
  %v2574 = vunpack.c.l.b16 %v2317
  %v2575 = vunpack.c.l.b16 %v2318
  %v2576 = vunpack.c.l.b16 %v2319
  %v2577 = vunpack.c.l.b16 %v2320
  %v2578 = vunpack.c.l.b16 %v2321
  %v2579 = vunpack.c.l.b16 %v2322
  %v2580 = vunpack.c.l.b16 %v2323
  %v2581 = vunpack.c.l.b16 %v2324
  %v2582 = vunpack.c.l.b16 %v2325
  %v2583 = vunpack.c.l.b16 %v2326
  %v2584 = vunpack.c.l.b16 %v2327
  %v2585 = vunpack.c.l.b16 %v2328
  %v2586 = vunpack.c.l.b16 %v2329
  %v2587 = vunpack.c.l.b16 %v2330
  %v2588 = vunpack.c.l.b16 %v2331
  %v2589 = vunpack.c.l.b16 %v2332
  %v2590 = vunpack.c.l.b16 %v2333
  %v2591 = vunpack.c.l.b16 %v2334
  %v2592 = vunpack.c.l.b16 %v2335
  %v2593 = vunpack.c.l.b16 %v2336
  %v2594 = vunpack.c.l.b16 %v2337
  %v2595 = vunpack.c.l.b16 %v2338
  %v2596 = vunpack.c.l.b16 %v2339
  %v2597 = vunpack.c.l.b16 %v2340
  %v2598 = vunpack.c.l.b16 %v2341
  %v2599 = vunpack.c.l.b16 %v2342
  %v2600 = vunpack.c.l.b16 %v2343
  %v2601 = vunpack.c.l.b16 %v2344
  %v2602 = vunpack.c.l.b16 %v2345
  %v2603 = vunpack.c.l.b16 %v2346
  %v2604 = vunpack.c.l.b16 %v2347
  %v2605 = vunpack.c.l.b16 %v2348
  %v2606 = vunpack.c.l.b16 %v2349
  %v2607 = vunpack.c.l.b16 %v2350
  %v2608 = vunpack.c.l.b16 %v2351
  %v2609 = vunpack.c.l.b16 %v2352
  %v2610 = vunpack.c.l.b16 %v2353
  %v2611 = vunpack.c.l.b16 %v2354
  %v2612 = vunpack.c.l.b16 %v2355
  %v2613 = vunpack.c.l.b16 %v2356
  %v2614 = vunpack.c.l.b16 %v2357
  %v2615 = vunpack.c.l.b16 %v2358
  %v2616 = vunpack.c.l.b16 %v2359
  %v2617 = vunpack.c.l.b16 %v2360
  %v2618 = vunpack.c.l.b16 %v2361
  %v2619 = vunpack.c.l.b16 %v2362
  %v2620 = vunpack.c.l.b16 %v2363
  %v2621 = vunpack.c.l.b16 %v2364
  %v2622 = vunpack.c.l.b16 %v2365
  %v2623 = vunpack.c.l.b16 %v2366
  %v2624 = vunpack.c.l.b16 %v2367
  %v2625 = vunpack.c.l.b16 %v2368
  %v2626 = vunpack.c.l.b16 %v2369
  %v2627 = vunpack.c.l.b16 %v2370
  %v2628 = vunpack.c.l.b16 %v2371
  %v2629 = vunpack.c.l.b16 %v2372
  %v2630 = vunpack.c.l.b16 %v2373
  %v2631 = vunpack.c.l.b16 %v2374
  %v2632 = vunpack.c.l.b16 %v2375
  %v2633 = vunpack.c.l.b16 %v2376
  %v2634 = vunpack.c.l.b16 %v2377
  %v2635 = vunpack.c.l.b16 %v2378
  %v2636 = vunpack.c.l.b16 %v2379
  %v2637 = vunpack.c.l.b16 %v2380
  %v2638 = vunpack.c.l.b16 %v2381
  %v2639 = vunpack.c.l.b16 %v2382
  %v2640 = vunpack.c.l.b16 %v2383
  %v2641 = vunpack.c.l.b16 %v2384
  %v2642 = vunpack.c.l.b16 %v2385
  %v2643 = vunpack.c.l.b16 %v2386
  %v2644 = vunpack.c.l.b16 %v2387
  %v2645 = vunpack.c.l.b16 %v2388
  %v2646 = vunpack.c.l.b16 %v2389
  %v2647 = vunpack.c.l.b16 %v2390
  %v2648 = vunpack.c.l.b16 %v2391
  %v2649 = vunpack.c.l.b16 %v2392
  %v2650 = vunpack.c.l.b16 %v2393
  %v2651 = vunpack.c.l.b16 %v2394
  %v2652 = vunpack.c.l.b16 %v2395
  %v2653 = vunpack.c.l.b16 %v2396
  %v2654 = vunpack.c.l.b16 %v2397
  %v2655 = vunpack.c.l.b16 %v2398
  %v2656 = vunpack.c.l.b16 %v2399
  %v2657 = vunpack.c.l.b16 %v2400
  %v2658 = vunpack.c.l.b16 %v2401
  %v2659 = vunpack.c.l.b16 %v2402
  %v2660 = vunpack.c.l.b16 %v2403
  %v2661 = vunpack.c.l.b16 %v2404
  %v2662 = vunpack.c.l.b16 %v2405
  %v2663 = vunpack.c.l.b16 %v2406
  %v2664 = vunpack.c.l.b16 %v2407
  %v2665 = vunpack.c.l.b16 %v2408
  %v2666 = vunpack.c.l.b16 %v2409
  %v2667 = vunpack.c.l.b16 %v2410
  %v2668 = vunpack.c.l.b16 %v2411
  %v2669 = vunpack.c.l.b16 %v2412
  %v2670 = vunpack.c.l.b16 %v2413
  %v2671 = vunpack.c.l.b16 %v2414
  %v2672 = vunpack.c.l.b16 %v2415
  %v2673 = vunpack.c.l.b16 %v2416
  %v2674 = vunpack.c.l.b16 %v2417
  %v2675 = vunpack.c.l.b16 %v2418
  %v2676 = vunpack.c.l.b16 %v2419
  %v2677 = vunpack.c.l.b16 %v2420
  %v2678 = vunpack.c.l.b16 %v2421
  %v2679 = vunpack.c.l.b16 %v2422
  %v2680 = vunpack.c.l.b16 %v2423
  %v2681 = vunpack.c.l.b16 %v2424
  %v2682 = vunpack.c.l.b16 %v2425
  %v2683 = vpack.c.b16 %v2559, %v2558
  %v2684 = vpack.c.b16 %v2561, %v2560
  %v2685 = vpack.c.b16 %v2563, %v2562
  %v2686 = vpack.c.b16 %v2565, %v2564
  %v2687 = vpack.c.b16 %v2567, %v2566
  %v2688 = vpack.c.b16 %v2569, %v2568
  %v2689 = vpack.c.b16 %v2571, %v2570
  %v2690 = vpack.c.b16 %v2573, %v2572
  %v2691 = vpack.c.b16 %v2575, %v2574
  %v2692 = vpack.c.b16 %v2577, %v2576
  %v2693 = vpack.c.b16 %v2579, %v2578
  %v2694 = vpack.c.b16 %v2581, %v2580
  %v2695 = vpack.c.b16 %v2583, %v2582
  %v2696 = vpack.c.b16 %v2585, %v2584
  %v2697 = vpack.c.b16 %v2587, %v2586
  %v2698 = vpack.c.b16 %v2589, %v2588
  %v2699 = vpack.c.b16 %v2591, %v2590
  %v2700 = vpack.c.b16 %v2593, %v2592
  %v2701 = vpack.c.b16 %v2595, %v2594
  %v2702 = vpack.c.b16 %v2597, %v2596
  %v2703 = vpack.c.b16 %v2599, %v2598
  %v2704 = vpack.c.b16 %v2601, %v2600
  %v2705 = vpack.c.b16 %v2603, %v2602
  %v2706 = vpack.c.b16 %v2605, %v2604
  %v2707 = vpack.c.b16 %v2607, %v2606
  %v2708 = vpack.c.b16 %v2609, %v2608
  %v2709 = vpack.c.b16 %v2611, %v2610
  %v2710 = vpack.c.b16 %v2613, %v2612
  %v2711 = vpack.c.b16 %v2615, %v2614
  %v2712 = vpack.c.b16 %v2617, %v2616
  %v2713 = vpack.c.b16 %v2619, %v2618
  %v2714 = vpack.c.b16 %v2621, %v2620
  %v2715 = vpack.c.b16 %v2623, %v2622
  %v2716 = vpack.c.b16 %v2625, %v2624
  %v2717 = vpack.c.b16 %v2627, %v2626
  %v2718 = vpack.c.b16 %v2629, %v2628
  %v2719 = vpack.c.b16 %v2631, %v2630
  %v2720 = vpack.c.b16 %v2633, %v2632
  %v2721 = vpack.c.b16 %v2635, %v2634
  %v2722 = vpack.c.b16 %v2637, %v2636
  %v2723 = vpack.c.b16 %v2639, %v2638
  %v2724 = vpack.c.b16 %v2641, %v2640
  %v2725 = vpack.c.b16 %v2643, %v2642
  %v2726 = vpack.c.b16 %v2645, %v2644
  %v2727 = vpack.c.b16 %v2647, %v2646
  %v2728 = vpack.c.b16 %v2649, %v2648
  %v2729 = vpack.c.b16 %v2651, %v2650
  %v2730 = vpack.c.b16 %v2653, %v2652
  %v2731 = vpack.c.b16 %v2655, %v2654
  %v2732 = vpack.c.b16 %v2657, %v2656
  %v2733 = vpack.c.b16 %v2659, %v2658
  %v2734 = vpack.c.b16 %v2661, %v2660
  %v2735 = vpack.c.b16 %v2663, %v2662
  %v2736 = vpack.c.b16 %v2665, %v2664
  %v2737 = vpack.c.b16 %v2667, %v2666
  %v2738 = vpack.c.b16 %v2669, %v2668
  %v2739 = vpack.c.b16 %v2671, %v2670
  %v2740 = vpack.c.b16 %v2673, %v2672
  %v2741 = vpack.c.b16 %v2675, %v2674
  %v2742 = vpack.c.b16 %v2677, %v2676
  %v2743 = vpack.c.b16 %v2679, %v2678
  %v2744 = vpack.c.b16 %v2681, %v2680
  %v2745 = vpack.c.b16 %v2682, %v2682
  %vm2808 = vcmask 850944
  %v2810 = vsel %vm2808, %v2300, 0
  %vm2812 = vcmask 1043456
  %v2814 = vsel %vm2812, %v2745, 0
  %2816 = vmatprep.subr.bf16.mxu0 0
  %2817 = vmatpush1.bf16.msra.mxu0 %v2683
  %2818 = vmatprep.subr.bf16.mxu0 0
  %2819 = vmatpush1.bf16.msra.mxu0 %v2684
  %2820 = vmatprep.subr.bf16.mxu0 0
  %2821 = vmatpush1.bf16.msra.mxu0 %v2685
  %2822 = vmatprep.subr.bf16.mxu0 0
  %2823 = vmatpush1.bf16.msra.mxu0 %v2686
  %2824 = vmatprep.subr.bf16.mxu0 0
  %2825 = vmatpush1.bf16.msra.mxu0 %v2687
  %2826 = vmatprep.subr.bf16.mxu0 0
  %2827 = vmatpush1.bf16.msra.mxu0 %v2688
  %2828 = vmatprep.subr.bf16.mxu0 0
  %2829 = vmatpush1.bf16.msra.mxu0 %v2689
  %2830 = vmatprep.subr.bf16.mxu0 0
  %2831 = vmatpush1.bf16.msra.mxu0 %v2690
  %2832 = vmatprep.subr.bf16.mxu0 0
  %2833 = vmatpush1.bf16.msra.mxu0 %v2691
  %2834 = vmatprep.subr.bf16.mxu0 0
  %2835 = vmatpush1.bf16.msra.mxu0 %v2692
  %2836 = vmatprep.subr.bf16.mxu0 0
  %2837 = vmatpush1.bf16.msra.mxu0 %v2693
  %2838 = vmatprep.subr.bf16.mxu0 0
  %2839 = vmatpush1.bf16.msra.mxu0 %v2694
  %2840 = vmatprep.subr.bf16.mxu0 0
  %2841 = vmatpush1.bf16.msra.mxu0 %v2695
  %2842 = vmatprep.subr.bf16.mxu0 0
  %2843 = vmatpush1.bf16.msra.mxu0 %v2696
  %2844 = vmatprep.subr.bf16.mxu0 0
  %2845 = vmatpush1.bf16.msra.mxu0 %v2697
  %2846 = vmatprep.subr.bf16.mxu0 0
  %2847 = vmatpush1.bf16.msra.mxu0 %v2698
  %2848 = vmatprep.mubr.bf16.mxu0 %v2294
  %2849 = vmatmul.mubr.bf16.gmra.mrb[0].mxu0 %v2293
  %v2850 = vpop.f32.mrb[0].mxu0
  %v2851 = vadd.f32 %v2431, %v2850
  %v2852 = vpop.f32.mrb[0].mxu0
  %v2853 = vpop.f32.mrb[0].mxu0
  %v2854 = vadd.f32 %v2431, %v2853
  %v2855 = vpop.f32.mrb[0].mxu0
  %2856 = vdwg.mxu0
  %2857 = vmatprep.subr.bf16.mxu0 0
  %2858 = vmatpush1.bf16.msra.mxu0 %v2699
  %2859 = vmatprep.subr.bf16.mxu0 0
  %2860 = vmatpush1.bf16.msra.mxu0 %v2700
  %2861 = vmatprep.subr.bf16.mxu0 0
  %2862 = vmatpush1.bf16.msra.mxu0 %v2701
  %2863 = vmatprep.subr.bf16.mxu0 0
  %2864 = vmatpush1.bf16.msra.mxu0 %v2702
  %2865 = vmatprep.subr.bf16.mxu0 0
  %2866 = vmatpush1.bf16.msra.mxu0 %v2703
  %2867 = vmatprep.subr.bf16.mxu0 0
  %2868 = vmatpush1.bf16.msra.mxu0 %v2704
  %2869 = vmatprep.subr.bf16.mxu0 0
  %2870 = vmatpush1.bf16.msra.mxu0 %v2705
  %2871 = vmatprep.subr.bf16.mxu0 0
  %2872 = vmatpush1.bf16.msra.mxu0 %v2706
  %2873 = vmatprep.subr.bf16.mxu0 0
  %2874 = vmatpush1.bf16.msra.mxu0 %v2707
  %2875 = vmatprep.subr.bf16.mxu0 0
  %2876 = vmatpush1.bf16.msra.mxu0 %v2708
  %2877 = vmatprep.subr.bf16.mxu0 0
  %2878 = vmatpush1.bf16.msra.mxu0 %v2709
  %2879 = vmatprep.subr.bf16.mxu0 0
  %2880 = vmatpush1.bf16.msra.mxu0 %v2710
  %2881 = vmatprep.subr.bf16.mxu0 0
  %2882 = vmatpush1.bf16.msra.mxu0 %v2711
  %2883 = vmatprep.subr.bf16.mxu0 0
  %2884 = vmatpush1.bf16.msra.mxu0 %v2712
  %2885 = vmatprep.subr.bf16.mxu0 0
  %2886 = vmatpush1.bf16.msra.mxu0 %v2713
  %2887 = vmatprep.subr.bf16.mxu0 0
  %2888 = vmatpush1.bf16.msra.mxu0 %v2714
  %2889 = vmatprep.mubr.bf16.mxu0 %v2296
  %2890 = vmatmul.mubr.bf16.gmra.mrb[0].mxu0 %v2295
  %v2891 = vpop.f32.mrb[0].mxu0
  %v2892 = vadd.f32 %v2851, %v2891
  %v2893 = vpop.f32.mrb[0].mxu0
  %v2894 = vpop.f32.mrb[0].mxu0
  %v2895 = vadd.f32 %v2854, %v2894
  %v2896 = vpop.f32.mrb[0].mxu0
  %2897 = vdwg.mxu0
  %2898 = vmatprep.subr.bf16.mxu0 0
  %2899 = vmatpush1.bf16.msra.mxu0 %v2715
  %2900 = vmatprep.subr.bf16.mxu0 0
  %2901 = vmatpush1.bf16.msra.mxu0 %v2716
  %2902 = vmatprep.subr.bf16.mxu0 0
  %2903 = vmatpush1.bf16.msra.mxu0 %v2717
  %2904 = vmatprep.subr.bf16.mxu0 0
  %2905 = vmatpush1.bf16.msra.mxu0 %v2718
  %2906 = vmatprep.subr.bf16.mxu0 0
  %2907 = vmatpush1.bf16.msra.mxu0 %v2719
  %2908 = vmatprep.subr.bf16.mxu0 0
  %2909 = vmatpush1.bf16.msra.mxu0 %v2720
  %2910 = vmatprep.subr.bf16.mxu0 0
  %2911 = vmatpush1.bf16.msra.mxu0 %v2721
  %2912 = vmatprep.subr.bf16.mxu0 0
  %2913 = vmatpush1.bf16.msra.mxu0 %v2722
  %2914 = vmatprep.subr.bf16.mxu0 0
  %2915 = vmatpush1.bf16.msra.mxu0 %v2723
  %2916 = vmatprep.subr.bf16.mxu0 0
  %2917 = vmatpush1.bf16.msra.mxu0 %v2724
  %2918 = vmatprep.subr.bf16.mxu0 0
  %2919 = vmatpush1.bf16.msra.mxu0 %v2725
  %2920 = vmatprep.subr.bf16.mxu0 0
  %2921 = vmatpush1.bf16.msra.mxu0 %v2726
  %2922 = vmatprep.subr.bf16.mxu0 0
  %2923 = vmatpush1.bf16.msra.mxu0 %v2727
  %2924 = vmatprep.subr.bf16.mxu0 0
  %2925 = vmatpush1.bf16.msra.mxu0 %v2728
  %2926 = vmatprep.subr.bf16.mxu0 0
  %2927 = vmatpush1.bf16.msra.mxu0 %v2729
  %2928 = vmatprep.subr.bf16.mxu0 0
  %2929 = vmatpush1.bf16.msra.mxu0 %v2730
  %2930 = vmatprep.mubr.bf16.mxu0 %v2298
  %2931 = vmatmul.mubr.bf16.gmra.mrb[0].mxu0 %v2297
  %v2932 = vpop.f32.mrb[0].mxu0
  %v2933 = vadd.f32 %v2892, %v2932
  %v2934 = vpop.f32.mrb[0].mxu0
  %v2935 = vpop.f32.mrb[0].mxu0
  %v2936 = vadd.f32 %v2895, %v2935
  %v2937 = vpop.f32.mrb[0].mxu0
  %2938 = vdwg.mxu0
  %2939 = vmatprep.subr.bf16.mxu0 0
  %2940 = vmatpush1.bf16.msra.mxu0 %v2731
  %2941 = vmatprep.subr.bf16.mxu0 0
  %2942 = vmatpush1.bf16.msra.mxu0 %v2732
  %2943 = vmatprep.subr.bf16.mxu0 0
  %2944 = vmatpush1.bf16.msra.mxu0 %v2733
  %2945 = vmatprep.subr.bf16.mxu0 0
  %2946 = vmatpush1.bf16.msra.mxu0 %v2734
  %2947 = vmatprep.subr.bf16.mxu0 0
  %2948 = vmatpush1.bf16.msra.mxu0 %v2735
  %2949 = vmatprep.subr.bf16.mxu0 0
  %2950 = vmatpush1.bf16.msra.mxu0 %v2736
  %2951 = vmatprep.subr.bf16.mxu0 0
  %2952 = vmatpush1.bf16.msra.mxu0 %v2737
  %2953 = vmatprep.subr.bf16.mxu0 0
  %2954 = vmatpush1.bf16.msra.mxu0 %v2738
  %2955 = vmatprep.subr.bf16.mxu0 0
  %2956 = vmatpush1.bf16.msra.mxu0 %v2739
  %2957 = vmatprep.subr.bf16.mxu0 0
  %2958 = vmatpush1.bf16.msra.mxu0 %v2740
  %2959 = vmatprep.subr.bf16.mxu0 0
  %2960 = vmatpush1.bf16.msra.mxu0 %v2741
  %2961 = vmatprep.subr.bf16.mxu0 0
  %2962 = vmatpush1.bf16.msra.mxu0 %v2742
  %2963 = vmatprep.subr.bf16.mxu0 0
  %2964 = vmatpush1.bf16.msra.mxu0 %v2743
  %2965 = vmatprep.subr.bf16.mxu0 0
  %2966 = vmatpush1.bf16.msra.mxu0 %v2744
  %2967 = vmatprep.subr.bf16.mxu0 0
  %2968 = vmatpush1.bf16.msra.mxu0 %v2814
  %2969 = vmatprep.subr.bf16.mxu0 0
  %2970 = vmatpush1.bf16.msra.mxu0 0
  %2971 = vmatprep.mubr.bf16.mxu0 %v2810
  %2972 = vmatmul.mubr.bf16.gmra.mrb[0].mxu0 %v2299
  %v2973 = vpop.f32.mrb[0].mxu0
  %v2974 = vadd.f32 %v2933, %v2973
  %v2975 = vpop.f32.mrb[0].mxu0
  %v2976 = vpop.f32.mrb[0].mxu0
  %v2977 = vadd.f32 %v2936, %v2976
  %v2978 = vpop.f32.mrb[0].mxu0
  %2979 = vdwg.mxu0
  %v2980 = vtanh.pop %v2974
  %v2981 = vtanh.pop %v2977
  %v2982 = vld [vmem:[%s7] sm:$0x1]
  %v2984 = vlaneseq
  %v2985 = vshrl.u32 %v2984, 7
  %v2986 = vsub.s32 0, %v2985
  %v2987 = vrot.slane %v2982, %v2986
  %v2989 = vmul.f32 %v2980, %v2987
  %v2990 = vmul.f32 %v2981, %v2987
  %2991 = vadd.xlane.f32.xlu0 %v2989
  %v2992 = vpop.xlane.xlu0 %2991
  %2993 = vadd.xlane.f32.xlu0 %v2990
  %v2994 = vpop.xlane.xlu0 %2993
  %v2995 = vld [vmem:[#allocation2] sm:$0x1]
  %v2997 = vlaneseq
  %v2998 = vshrl.u32 %v2997, 7
  %v2999 = vsub.s32 0, %v2998
  %v3000 = vrot.slane %v2995, %v2999
  %v3002 = vadd.f32 %v2992, %v3000
  %v3003 = vadd.f32 %v2994, %v3000
  %vm3004 = vcmask 7168
  %3005 = vst.msk [vmem:[%s9] sm:$0xff] %vm3004, %v3002
  %3006 = vst.msk [vmem:[%s9 + $0x8] sm:$0xff] %vm3004, %v3003
  // Predicated region
  $region38: #{mlp_forward.1} parent=0 // pred_check
    _
  $region39: #{mlp_forward.1} parent=0 // pred_check_branch
    %3008 = sbr.rel (0) target = $region41
  $region40: #{mlp_forward.1} parent=0 // pred_region
    _
  $region41: #{mlp_forward.1} parent=0 // pred_fallthru
    _
  // Predicated region
  $region42: #{mlp_forward.1} parent=0 // pred_check
    _
  $region43: #{mlp_forward.1} parent=0 // pred_check_branch
    %3010 = sbr.rel (0) target = $region45
  $region44: #{mlp_forward.1} parent=0 // pred_region
    _
  $region45: #{mlp_forward.1} parent=0 // pred_fallthru
    _

// kernel: mlp_forward.1
$region0: #{mlp_forward.1}
  #allocation0 [shape = 'u32[]', space=smem, size = 0x4, offset = 0x4, fixed_abs, tag = 'smem constant byte address 0x4 - core index']
  #allocation1 [shape = 'u32[144,128]{1,0:T(1,128)}', space=vmem, size = 0x12000, scoped, tag = 'internal scratch']
  #allocation2 [shape = 'f32[1,1]{1,0:T(1,128)S(1)}', space=vmem, size = 0x200, scoped, tag = 'scoped memory for mlp_forward.1']
  %s0 = inlined_call_operand.vmem [shape: f32[16,128], index: 0, kind: input, shape index: {}]
  %s1 = inlined_call_operand.vmem [shape: bf16[128,500], index: 1, kind: input, shape index: {}]
  %s2 = inlined_call_operand.vmem [shape: f32[1,500], index: 2, kind: input, shape index: {}]
  %s3 = inlined_call_operand.vmem [shape: bf16[500,1000], index: 3, kind: input, shape index: {}]
  %s4 = inlined_call_operand.vmem [shape: f32[1,1000], index: 4, kind: input, shape index: {}]
  %s5 = inlined_call_operand.vmem [shape: bf16[1000,128], index: 5, kind: input, shape index: {}]
  %s6 = inlined_call_operand.vmem [shape: f32[1,128], index: 6, kind: input, shape index: {}]
  %s7 = inlined_call_operand.vmem [shape: f32[1,128], index: 7, kind: input, shape index: {}]
  %s8 = inlined_call_operand.<no memory space> [shape: f32[1,1], index: 8, kind: input, shape index: {}]
  %s9 = inlined_call_operand.vmem [shape: f32[16,1], index: 9, kind: output, shape index: {}]
  %s10 = sld [smem:[#allocation0]]
  $region46: #{mlp_forward.1} parent=0
    _
  %s12 = ssub.s32 1, %s10
  %s13 = scalar_select 0, %s12, %s10
  %v14 = vstv %s8
  %15 = vst [vmem:[#allocation2] sm:$0x1] %v14
  // Predicated region
  $region2: #{mlp_forward.1} parent=0 // pred_check
    _
  $region3: #{mlp_forward.1} parent=0 // pred_check_branch
    %17 = sbr.rel (0) target = $region5
  $region4: #{mlp_forward.1} parent=0 // pred_region
    _
  $region5: #{mlp_forward.1} parent=0 // pred_fallthru
    _
  // Predicated region
  $region6: #{mlp_forward.1} parent=0 // pred_check
    _
  $region7: #{mlp_forward.1} parent=0 // pred_check_branch
    %19 = sbr.rel (0) target = $region9
  $region8: #{mlp_forward.1} parent=0 // pred_region
    _
  $region9: #{mlp_forward.1} parent=0 // pred_fallthru
    _
  // Predicated region
  $region10: #{mlp_forward.1} parent=0 // pred_check
    _
  $region11: #{mlp_forward.1} parent=0 // pred_check_branch
    %21 = sbr.rel (0) target = $region13
  $region12: #{mlp_forward.1} parent=0 // pred_region
    _
  $region13: #{mlp_forward.1} parent=0 // pred_fallthru
    _
  // Predicated region
  $region14: #{mlp_forward.1} parent=0 // pred_check
    _
  $region15: #{mlp_forward.1} parent=0 // pred_check_branch
    %23 = sbr.rel (0) target = $region17
  $region16: #{mlp_forward.1} parent=0 // pred_region
    _
  $region17: #{mlp_forward.1} parent=0 // pred_fallthru
    _
  // Predicated region
  $region18: #{mlp_forward.1} parent=0 // pred_check
    _
  $region19: #{mlp_forward.1} parent=0 // pred_check_branch
    %25 = sbr.rel (0) target = $region21
  $region20: #{mlp_forward.1} parent=0 // pred_region
    _
  $region21: #{mlp_forward.1} parent=0 // pred_fallthru
    _
  // Predicated region
  $region22: #{mlp_forward.1} parent=0 // pred_check
    _
  $region23: #{mlp_forward.1} parent=0 // pred_check_branch
    %27 = sbr.rel (0) target = $region25
  $region24: #{mlp_forward.1} parent=0 // pred_region
    _
  $region25: #{mlp_forward.1} parent=0 // pred_fallthru
    _
  // Predicated region
  $region26: #{mlp_forward.1} parent=0 // pred_check
    _
  $region27: #{mlp_forward.1} parent=0 // pred_check_branch
    %29 = sbr.rel (0) target = $region29
  $region28: #{mlp_forward.1} parent=0 // pred_region
    _
  $region29: #{mlp_forward.1} parent=0 // pred_fallthru
    _
  // Predicated region
  $region30: #{mlp_forward.1} parent=0 // pred_check
    _
  $region31: #{mlp_forward.1} parent=0 // pred_check_branch
    %31 = sbr.rel (0) target = $region33
  $region32: #{mlp_forward.1} parent=0 // pred_region
    _
  $region33: #{mlp_forward.1} parent=0 // pred_fallthru
    _
  // Predicated region
  $region34: #{mlp_forward.1} parent=0 // pred_check
    _
  $region35: #{mlp_forward.1} parent=0 // pred_check_branch
    %33 = sbr.rel (0) target = $region37
  $region36: #{mlp_forward.1} parent=0 // pred_region
    _
  $region37: #{mlp_forward.1} parent=0 // pred_fallthru
    _
  %v35 = vld [vmem:[%s0] sm:$0xff]
  %v36 = vld [vmem:[%s0 + $0x8] sm:$0xff]
  %v37 = vpack.c.bf16 %v36, %v35
  %v38 = vld [vmem:[%s1] sm:$0xff]
  %v39 = vld [vmem:[%s1 + $0x8] sm:$0xff]
  %v40 = vld [vmem:[%s1 + $0x10] sm:$0xff]
  %v41 = vld [vmem:[%s1 + $0x18] sm:$0xff]
  %v42 = vld [vmem:[%s1 + $0x20] sm:$0xff]
  %v43 = vld [vmem:[%s1 + $0x28] sm:$0xff]
  %v44 = vld [vmem:[%s1 + $0x30] sm:$0xff]
  %v45 = vld [vmem:[%s1 + $0x38] sm:$0xff]
  %v46 = vld [vmem:[%s1 + $0x40] sm:$0xff]
  %v47 = vld [vmem:[%s1 + $0x48] sm:$0xff]
  %v48 = vld [vmem:[%s1 + $0x50] sm:$0xff]
  %v49 = vld [vmem:[%s1 + $0x58] sm:$0xff]
  %v50 = vld [vmem:[%s1 + $0x60] sm:$0xff]
  %v51 = vld [vmem:[%s1 + $0x68] sm:$0xff]
  %v52 = vld [vmem:[%s1 + $0x70] sm:$0xff]
  %v53 = vld [vmem:[%s1 + $0x78] sm:$0xff]
  %v54 = vld [vmem:[%s1 + $0x80] sm:$0xff]
  %v55 = vld [vmem:[%s1 + $0x88] sm:$0xff]
  %v56 = vld [vmem:[%s1 + $0x90] sm:$0xff]
  %v57 = vld [vmem:[%s1 + $0x98] sm:$0xff]
  %v58 = vld [vmem:[%s1 + $0xa0] sm:$0xff]
  %v59 = vld [vmem:[%s1 + $0xa8] sm:$0xff]
  %v60 = vld [vmem:[%s1 + $0xb0] sm:$0xff]
  %v61 = vld [vmem:[%s1 + $0xb8] sm:$0xff]
  %v62 = vld [vmem:[%s1 + $0xc0] sm:$0xff]
  %v63 = vld [vmem:[%s1 + $0xc8] sm:$0xff]
  %v64 = vld [vmem:[%s1 + $0xd0] sm:$0xff]
  %v65 = vld [vmem:[%s1 + $0xd8] sm:$0xff]
  %v66 = vld [vmem:[%s1 + $0xe0] sm:$0xff]
  %v67 = vld [vmem:[%s1 + $0xe8] sm:$0xff]
  %v68 = vld [vmem:[%s1 + $0xf0] sm:$0xff]
  %v69 = vld [vmem:[%s1 + $0xf8] sm:$0xff]
  %v70 = vld [vmem:[%s2] sm:$0xf]
  %v72 = vlaneseq
  %v73 = vshrl.u32 %v72, 7
  %v74 = vsub.s32 0, %v73
  %v75 = vrot.slane %v70, %v74
  %v76 = vlaneseq
  %v77 = vshrl.u32 %v76, 7
  %v78 = vsub.s32 1, %v77
  %v79 = vrot.slane %v70, %v78
  %v80 = vlaneseq
  %v81 = vshrl.u32 %v80, 7
  %v82 = vsub.s32 2, %v81
  %v83 = vrot.slane %v70, %v82
  %v84 = vlaneseq
  %v85 = vshrl.u32 %v84, 7
  %v86 = vsub.s32 3, %v85
  %v87 = vrot.slane %v70, %v86
  %v124 = vunpack.c.l.b16 %v38
  %v125 = vunpack.c.h.b16 %v38
  %v126 = vunpack.c.l.b16 %v39
  %v127 = vunpack.c.h.b16 %v39
  %v128 = vunpack.c.l.b16 %v40
  %v129 = vunpack.c.h.b16 %v40
  %v130 = vunpack.c.l.b16 %v41
  %v131 = vunpack.c.h.b16 %v41
  %v132 = vunpack.c.l.b16 %v42
  %v133 = vunpack.c.h.b16 %v42
  %v134 = vunpack.c.l.b16 %v43
  %v135 = vunpack.c.h.b16 %v43
  %v136 = vunpack.c.l.b16 %v44
  %v137 = vunpack.c.h.b16 %v44
  %v138 = vunpack.c.l.b16 %v45
  %v139 = vunpack.c.h.b16 %v45
  %v140 = vunpack.c.l.b16 %v46
  %v141 = vunpack.c.h.b16 %v46
  %v142 = vunpack.c.l.b16 %v47
  %v143 = vunpack.c.h.b16 %v47
  %v144 = vunpack.c.l.b16 %v48
  %v145 = vunpack.c.h.b16 %v48
  %v146 = vunpack.c.l.b16 %v49
  %v147 = vunpack.c.h.b16 %v49
  %v148 = vunpack.c.l.b16 %v50
  %v149 = vunpack.c.h.b16 %v50
  %v150 = vunpack.c.l.b16 %v51
  %v151 = vunpack.c.h.b16 %v51
  %v152 = vunpack.c.l.b16 %v52
  %v153 = vunpack.c.h.b16 %v52
  %v154 = vunpack.c.l.b16 %v53
  %v155 = vunpack.c.h.b16 %v53
  %v156 = vunpack.c.l.b16 %v54
  %v157 = vunpack.c.h.b16 %v54
  %v158 = vunpack.c.l.b16 %v55
  %v159 = vunpack.c.h.b16 %v55
  %v160 = vunpack.c.l.b16 %v56
  %v161 = vunpack.c.h.b16 %v56
  %v162 = vunpack.c.l.b16 %v57
  %v163 = vunpack.c.h.b16 %v57
  %v164 = vunpack.c.l.b16 %v58
  %v165 = vunpack.c.h.b16 %v58
  %v166 = vunpack.c.l.b16 %v59
  %v167 = vunpack.c.h.b16 %v59
  %v168 = vunpack.c.l.b16 %v60
  %v169 = vunpack.c.h.b16 %v60
  %v170 = vunpack.c.l.b16 %v61
  %v171 = vunpack.c.h.b16 %v61
  %v172 = vunpack.c.l.b16 %v62
  %v173 = vunpack.c.h.b16 %v62
  %v174 = vunpack.c.l.b16 %v63
  %v175 = vunpack.c.h.b16 %v63
  %v176 = vunpack.c.l.b16 %v64
  %v177 = vunpack.c.h.b16 %v64
  %v178 = vunpack.c.l.b16 %v65
  %v179 = vunpack.c.h.b16 %v65
  %v180 = vunpack.c.l.b16 %v66
  %v181 = vunpack.c.h.b16 %v66
  %v182 = vunpack.c.l.b16 %v67
  %v183 = vunpack.c.h.b16 %v67
  %v184 = vunpack.c.l.b16 %v68
  %v185 = vunpack.c.h.b16 %v68
  %v186 = vunpack.c.l.b16 %v69
  %v187 = vunpack.c.h.b16 %v69
  %v188 = vpack.c.b16 %v128, %v124
  %v189 = vpack.c.b16 %v129, %v125
  %v190 = vpack.c.b16 %v130, %v126
  %v191 = vpack.c.b16 %v131, %v127
  %v192 = vpack.c.b16 %v136, %v132
  %v193 = vpack.c.b16 %v137, %v133
  %v194 = vpack.c.b16 %v138, %v134
  %v195 = vpack.c.b16 %v139, %v135
  %v196 = vpack.c.b16 %v144, %v140
  %v197 = vpack.c.b16 %v145, %v141
  %v198 = vpack.c.b16 %v146, %v142
  %v199 = vpack.c.b16 %v147, %v143
  %v200 = vpack.c.b16 %v152, %v148
  %v201 = vpack.c.b16 %v153, %v149
  %v202 = vpack.c.b16 %v154, %v150
  %v203 = vpack.c.b16 %v155, %v151
  %v204 = vpack.c.b16 %v160, %v156
  %v205 = vpack.c.b16 %v161, %v157
  %v206 = vpack.c.b16 %v162, %v158
  %v207 = vpack.c.b16 %v163, %v159
  %v208 = vpack.c.b16 %v168, %v164
  %v209 = vpack.c.b16 %v169, %v165
  %v210 = vpack.c.b16 %v170, %v166
  %v211 = vpack.c.b16 %v171, %v167
  %v212 = vpack.c.b16 %v176, %v172
  %v213 = vpack.c.b16 %v177, %v173
  %v214 = vpack.c.b16 %v178, %v174
  %v215 = vpack.c.b16 %v179, %v175
  %v216 = vpack.c.b16 %v184, %v180
  %v217 = vpack.c.b16 %v185, %v181
  %v218 = vpack.c.b16 %v186, %v182
  %v219 = vpack.c.b16 %v187, %v183
  %252 = vmatprep.subr.bf16.mxu0 %v189
  %253 = vmatpush1.bf16.msra.mxu0 %v188
  %254 = vmatprep.subr.bf16.mxu0 %v193
  %255 = vmatpush1.bf16.msra.mxu0 %v192
  %256 = vmatprep.subr.bf16.mxu0 %v197
  %257 = vmatpush1.bf16.msra.mxu0 %v196
  %258 = vmatprep.subr.bf16.mxu0 %v201
  %259 = vmatpush1.bf16.msra.mxu0 %v200
  %260 = vmatprep.subr.bf16.mxu0 %v205
  %261 = vmatpush1.bf16.msra.mxu0 %v204
  %262 = vmatprep.subr.bf16.mxu0 %v209
  %263 = vmatpush1.bf16.msra.mxu0 %v208
  %264 = vmatprep.subr.bf16.mxu0 %v213
  %265 = vmatpush1.bf16.msra.mxu0 %v212
  %266 = vmatprep.subr.bf16.mxu0 %v217
  %267 = vmatpush1.bf16.msra.mxu0 %v216
  %268 = vmatprep.subr.bf16.mxu0 0
  %269 = vmatpush1.bf16.msra.mxu0 0
  %270 = vmatprep.subr.bf16.mxu0 0
  %271 = vmatpush1.bf16.msra.mxu0 0
  %272 = vmatprep.subr.bf16.mxu0 0
  %273 = vmatpush1.bf16.msra.mxu0 0
  %274 = vmatprep.subr.bf16.mxu0 0
  %275 = vmatpush1.bf16.msra.mxu0 0
  %276 = vmatprep.subr.bf16.mxu0 0
  %277 = vmatpush1.bf16.msra.mxu0 0
  %278 = vmatprep.subr.bf16.mxu0 0
  %279 = vmatpush1.bf16.msra.mxu0 0
  %280 = vmatprep.subr.bf16.mxu0 0
  %281 = vmatpush1.bf16.msra.mxu0 0
  %282 = vmatprep.subr.bf16.mxu0 0
  %283 = vmatpush1.bf16.msra.mxu0 0
  %284 = vmatprep.mubr.bf16.mxu0 0
  %285 = vmatmul.mubr.bf16.gmra.mrb[0].mxu0 %v37
  %v286 = vpop.f32.mrb[0].mxu0
  %v287 = vadd.f32 %v75, %v286
  %v288 = vpop.f32.mrb[0].mxu0
  %v289 = vadd.f32 %v79, %v288
  %v290 = vpop.f32.mrb[0].mxu0
  %v291 = vadd.f32 %v75, %v290
  %v292 = vpop.f32.mrb[0].mxu0
  %v293 = vadd.f32 %v79, %v292
  %294 = vdwg.mxu0
  %295 = vmatprep.subr.bf16.mxu0 %v191
  %296 = vmatpush1.bf16.msra.mxu0 %v190
  %297 = vmatprep.subr.bf16.mxu0 %v195
  %298 = vmatpush1.bf16.msra.mxu0 %v194
  %299 = vmatprep.subr.bf16.mxu0 %v199
  %300 = vmatpush1.bf16.msra.mxu0 %v198
  %301 = vmatprep.subr.bf16.mxu0 %v203
  %302 = vmatpush1.bf16.msra.mxu0 %v202
  %303 = vmatprep.subr.bf16.mxu0 %v207
  %304 = vmatpush1.bf16.msra.mxu0 %v206
  %305 = vmatprep.subr.bf16.mxu0 %v211
  %306 = vmatpush1.bf16.msra.mxu0 %v210
  %307 = vmatprep.subr.bf16.mxu0 %v215
  %308 = vmatpush1.bf16.msra.mxu0 %v214
  %309 = vmatprep.subr.bf16.mxu0 %v219
  %310 = vmatpush1.bf16.msra.mxu0 %v218
  %311 = vmatprep.subr.bf16.mxu0 0
  %312 = vmatpush1.bf16.msra.mxu0 0
  %313 = vmatprep.subr.bf16.mxu0 0
  %314 = vmatpush1.bf16.msra.mxu0 0
  %315 = vmatprep.subr.bf16.mxu0 0
  %316 = vmatpush1.bf16.msra.mxu0 0
  %317 = vmatprep.subr.bf16.mxu0 0
  %318 = vmatpush1.bf16.msra.mxu0 0
  %319 = vmatprep.subr.bf16.mxu0 0
  %320 = vmatpush1.bf16.msra.mxu0 0
  %321 = vmatprep.subr.bf16.mxu0 0
  %322 = vmatpush1.bf16.msra.mxu0 0
  %323 = vmatprep.subr.bf16.mxu0 0
  %324 = vmatpush1.bf16.msra.mxu0 0
  %325 = vmatprep.subr.bf16.mxu0 0
  %326 = vmatpush1.bf16.msra.mxu0 0
  %327 = vmatprep.mubr.bf16.mxu0 0
  %328 = vmatmul.mubr.bf16.gmra.mrb[0].mxu0 %v37
  %v329 = vpop.f32.mrb[0].mxu0
  %v330 = vadd.f32 %v83, %v329
  %v331 = vpop.f32.mrb[0].mxu0
  %v332 = vadd.f32 %v87, %v331
  %v333 = vpop.f32.mrb[0].mxu0
  %v334 = vadd.f32 %v83, %v333
  %v335 = vpop.f32.mrb[0].mxu0
  %v336 = vadd.f32 %v87, %v335
  %337 = vdwg.mxu0
  %v338 = vtanh.pop %v287
  %v339 = vtanh.pop %v289
  %v340 = vtanh.pop %v330
  %v341 = vtanh.pop %v332
  %v342 = vtanh.pop %v291
  %v343 = vtanh.pop %v293
  %v344 = vtanh.pop %v334
  %v345 = vtanh.pop %v336
  %v346 = vpack.c.bf16 %v342, %v338
  %v347 = vpack.c.bf16 %v343, %v339
  %v348 = vpack.c.bf16 %v344, %v340
  %v349 = vpack.c.bf16 %v345, %v341
  %v350 = vld [vmem:[%s3] sm:$0xff]
  %v351 = vld [vmem:[%s3 + $0x8] sm:$0xff]
  %v352 = vld [vmem:[%s3 + $0x10] sm:$0xff]
  %v353 = vld [vmem:[%s3 + $0x18] sm:$0xff]
  %v354 = vld [vmem:[%s3 + $0x20] sm:$0xff]
  %v355 = vld [vmem:[%s3 + $0x28] sm:$0xff]
  %v356 = vld [vmem:[%s3 + $0x30] sm:$0xff]
  %v357 = vld [vmem:[%s3 + $0x38] sm:$0xff]
  %v358 = vld [vmem:[%s3 + $0x40] sm:$0xff]
  %v359 = vld [vmem:[%s3 + $0x48] sm:$0xff]
  %v360 = vld [vmem:[%s3 + $0x50] sm:$0xff]
  %v361 = vld [vmem:[%s3 + $0x58] sm:$0xff]
  %v362 = vld [vmem:[%s3 + $0x60] sm:$0xff]
  %v363 = vld [vmem:[%s3 + $0x68] sm:$0xff]
  %v364 = vld [vmem:[%s3 + $0x70] sm:$0xff]
  %v365 = vld [vmem:[%s3 + $0x78] sm:$0xff]
  %v366 = vld [vmem:[%s3 + $0x80] sm:$0xff]
  %v367 = vld [vmem:[%s3 + $0x88] sm:$0xff]
  %v368 = vld [vmem:[%s3 + $0x90] sm:$0xff]
  %v369 = vld [vmem:[%s3 + $0x98] sm:$0xff]
  %v370 = vld [vmem:[%s3 + $0xa0] sm:$0xff]
  %v371 = vld [vmem:[%s3 + $0xa8] sm:$0xff]
  %v372 = vld [vmem:[%s3 + $0xb0] sm:$0xff]
  %v373 = vld [vmem:[%s3 + $0xb8] sm:$0xff]
  %v374 = vld [vmem:[%s3 + $0xc0] sm:$0xff]
  %v375 = vld [vmem:[%s3 + $0xc8] sm:$0xff]
  %v376 = vld [vmem:[%s3 + $0xd0] sm:$0xff]
  %v377 = vld [vmem:[%s3 + $0xd8] sm:$0xff]
  %v378 = vld [vmem:[%s3 + $0xe0] sm:$0xff]
  %v379 = vld [vmem:[%s3 + $0xe8] sm:$0xff]
  %v380 = vld [vmem:[%s3 + $0xf0] sm:$0xff]
  %v381 = vld [vmem:[%s3 + $0xf8] sm:$0xff]
  %v382 = vld [vmem:[%s3 + $0x100] sm:$0xff]
  %v383 = vld [vmem:[%s3 + $0x108] sm:$0xff]
  %v384 = vld [vmem:[%s3 + $0x110] sm:$0xff]
  %v385 = vld [vmem:[%s3 + $0x118] sm:$0xff]
  %v386 = vld [vmem:[%s3 + $0x120] sm:$0xff]
  %v387 = vld [vmem:[%s3 + $0x128] sm:$0xff]
  %v388 = vld [vmem:[%s3 + $0x130] sm:$0xff]
  %v389 = vld [vmem:[%s3 + $0x138] sm:$0xff]
  %v390 = vld [vmem:[%s3 + $0x140] sm:$0xff]
  %v391 = vld [vmem:[%s3 + $0x148] sm:$0xff]
  %v392 = vld [vmem:[%s3 + $0x150] sm:$0xff]
  %v393 = vld [vmem:[%s3 + $0x158] sm:$0xff]
  %v394 = vld [vmem:[%s3 + $0x160] sm:$0xff]
  %v395 = vld [vmem:[%s3 + $0x168] sm:$0xff]
  %v396 = vld [vmem:[%s3 + $0x170] sm:$0xff]
  %v397 = vld [vmem:[%s3 + $0x178] sm:$0xff]
  %v398 = vld [vmem:[%s3 + $0x180] sm:$0xff]
  %v399 = vld [vmem:[%s3 + $0x188] sm:$0xff]
  %v400 = vld [vmem:[%s3 + $0x190] sm:$0xff]
  %v401 = vld [vmem:[%s3 + $0x198] sm:$0xff]
  %v402 = vld [vmem:[%s3 + $0x1a0] sm:$0xff]
  %v403 = vld [vmem:[%s3 + $0x1a8] sm:$0xff]
  %v404 = vld [vmem:[%s3 + $0x1b0] sm:$0xff]
  %v405 = vld [vmem:[%s3 + $0x1b8] sm:$0xff]
  %v406 = vld [vmem:[%s3 + $0x1c0] sm:$0xff]
  %v407 = vld [vmem:[%s3 + $0x1c8] sm:$0xff]
  %v408 = vld [vmem:[%s3 + $0x1d0] sm:$0xff]
  %v409 = vld [vmem:[%s3 + $0x1d8] sm:$0xff]
  %v410 = vld [vmem:[%s3 + $0x1e0] sm:$0xff]
  %v411 = vld [vmem:[%s3 + $0x1e8] sm:$0xff]
  %v412 = vld [vmem:[%s3 + $0x1f0] sm:$0xff]
  %v413 = vld [vmem:[%s3 + $0x1f8] sm:$0xff]
  %v414 = vld [vmem:[%s3 + $0x200] sm:$0xff]
  %v415 = vld [vmem:[%s3 + $0x208] sm:$0xff]
  %v416 = vld [vmem:[%s3 + $0x210] sm:$0xff]
  %v417 = vld [vmem:[%s3 + $0x218] sm:$0xff]
  %v418 = vld [vmem:[%s3 + $0x220] sm:$0xff]
  %v419 = vld [vmem:[%s3 + $0x228] sm:$0xff]
  %v420 = vld [vmem:[%s3 + $0x230] sm:$0xff]
  %v421 = vld [vmem:[%s3 + $0x238] sm:$0xff]
  %v422 = vld [vmem:[%s3 + $0x240] sm:$0xff]
  %v423 = vld [vmem:[%s3 + $0x248] sm:$0xff]
  %v424 = vld [vmem:[%s3 + $0x250] sm:$0xff]
  %v425 = vld [vmem:[%s3 + $0x258] sm:$0xff]
  %v426 = vld [vmem:[%s3 + $0x260] sm:$0xff]
  %v427 = vld [vmem:[%s3 + $0x268] sm:$0xff]
  %v428 = vld [vmem:[%s3 + $0x270] sm:$0xff]
  %v429 = vld [vmem:[%s3 + $0x278] sm:$0xff]
  %v430 = vld [vmem:[%s3 + $0x280] sm:$0xff]
  %v431 = vld [vmem:[%s3 + $0x288] sm:$0xff]
  %v432 = vld [vmem:[%s3 + $0x290] sm:$0xff]
  %v433 = vld [vmem:[%s3 + $0x298] sm:$0xff]
  %v434 = vld [vmem:[%s3 + $0x2a0] sm:$0xff]
  %v435 = vld [vmem:[%s3 + $0x2a8] sm:$0xff]
  %v436 = vld [vmem:[%s3 + $0x2b0] sm:$0xff]
  %v437 = vld [vmem:[%s3 + $0x2b8] sm:$0xff]
  %v438 = vld [vmem:[%s3 + $0x2c0] sm:$0xff]
  %v439 = vld [vmem:[%s3 + $0x2c8] sm:$0xff]
  %v440 = vld [vmem:[%s3 + $0x2d0] sm:$0xff]
  %v441 = vld [vmem:[%s3 + $0x2d8] sm:$0xff]
  %v442 = vld [vmem:[%s3 + $0x2e0] sm:$0xff]
  %v443 = vld [vmem:[%s3 + $0x2e8] sm:$0xff]
  %v444 = vld [vmem:[%s3 + $0x2f0] sm:$0xff]
  %v445 = vld [vmem:[%s3 + $0x2f8] sm:$0xff]
  %v446 = vld [vmem:[%s3 + $0x300] sm:$0xff]
  %v447 = vld [vmem:[%s3 + $0x308] sm:$0xff]
  %v448 = vld [vmem:[%s3 + $0x310] sm:$0xff]
  %v449 = vld [vmem:[%s3 + $0x318] sm:$0xff]
  %v450 = vld [vmem:[%s3 + $0x320] sm:$0xff]
  %v451 = vld [vmem:[%s3 + $0x328] sm:$0xff]
  %v452 = vld [vmem:[%s3 + $0x330] sm:$0xff]
  %v453 = vld [vmem:[%s3 + $0x338] sm:$0xff]
  %v454 = vld [vmem:[%s3 + $0x340] sm:$0xff]
  %v455 = vld [vmem:[%s3 + $0x348] sm:$0xff]
  %v456 = vld [vmem:[%s3 + $0x350] sm:$0xff]
  %v457 = vld [vmem:[%s3 + $0x358] sm:$0xff]
  %v458 = vld [vmem:[%s3 + $0x360] sm:$0xff]
  %v459 = vld [vmem:[%s3 + $0x368] sm:$0xff]
  %v460 = vld [vmem:[%s3 + $0x370] sm:$0xff]
  %v461 = vld [vmem:[%s3 + $0x378] sm:$0xff]
  %v462 = vld [vmem:[%s3 + $0x380] sm:$0xff]
  %v463 = vld [vmem:[%s3 + $0x388] sm:$0xff]
  %v464 = vld [vmem:[%s3 + $0x390] sm:$0xff]
  %v465 = vld [vmem:[%s3 + $0x398] sm:$0xff]
  %v466 = vld [vmem:[%s3 + $0x3a0] sm:$0xff]
  %v467 = vld [vmem:[%s3 + $0x3a8] sm:$0xff]
  %v468 = vld [vmem:[%s3 + $0x3b0] sm:$0xff]
  %v469 = vld [vmem:[%s3 + $0x3b8] sm:$0xff]
  %v470 = vld [vmem:[%s3 + $0x3c0] sm:$0xff]
  %v471 = vld [vmem:[%s3 + $0x3c8] sm:$0xff]
  %v472 = vld [vmem:[%s3 + $0x3d0] sm:$0xff]
  %v473 = vld [vmem:[%s3 + $0x3d8] sm:$0xff]
  %v474 = vld [vmem:[%s3 + $0x3e0] sm:$0xff]
  %v475 = vld [vmem:[%s3 + $0x3e8] sm:$0xff]
  %v476 = vld [vmem:[%s3 + $0x3f0] sm:$0xff]
  %v477 = vld [vmem:[%s3 + $0x3f8] sm:$0xff]
  %v478 = vld [vmem:[%s3 + $0x400] sm:$0xff]
  %v479 = vld [vmem:[%s3 + $0x408] sm:$0xff]
  %v480 = vld [vmem:[%s3 + $0x410] sm:$0xff]
  %v481 = vld [vmem:[%s3 + $0x418] sm:$0xff]
  %v482 = vld [vmem:[%s3 + $0x420] sm:$0xff]
  %v483 = vld [vmem:[%s3 + $0x428] sm:$0xff]
  %v484 = vld [vmem:[%s3 + $0x430] sm:$0xff]
  %v485 = vld [vmem:[%s3 + $0x438] sm:$0xff]
  %v486 = vld [vmem:[%s3 + $0x440] sm:$0xff]
  %v487 = vld [vmem:[%s3 + $0x448] sm:$0xff]
  %v488 = vld [vmem:[%s3 + $0x450] sm:$0xff]
  %v489 = vld [vmem:[%s3 + $0x458] sm:$0xff]
  %v490 = vld [vmem:[%s3 + $0x460] sm:$0xff]
  %v491 = vld [vmem:[%s3 + $0x468] sm:$0xff]
  %v492 = vld [vmem:[%s3 + $0x470] sm:$0xff]
  %v493 = vld [vmem:[%s3 + $0x478] sm:$0xff]
  %v494 = vld [vmem:[%s3 + $0x480] sm:$0xff]
  %v495 = vld [vmem:[%s3 + $0x488] sm:$0xff]
  %v496 = vld [vmem:[%s3 + $0x490] sm:$0xff]
  %v497 = vld [vmem:[%s3 + $0x498] sm:$0xff]
  %v498 = vld [vmem:[%s3 + $0x4a0] sm:$0xff]
  %v499 = vld [vmem:[%s3 + $0x4a8] sm:$0xff]
  %v500 = vld [vmem:[%s3 + $0x4b0] sm:$0xff]
  %v501 = vld [vmem:[%s3 + $0x4b8] sm:$0xff]
  %v502 = vld [vmem:[%s3 + $0x4c0] sm:$0xff]
  %v503 = vld [vmem:[%s3 + $0x4c8] sm:$0xff]
  %v504 = vld [vmem:[%s3 + $0x4d0] sm:$0xff]
  %v505 = vld [vmem:[%s3 + $0x4d8] sm:$0xff]
  %v506 = vld [vmem:[%s3 + $0x4e0] sm:$0xff]
  %v507 = vld [vmem:[%s3 + $0x4e8] sm:$0xff]
  %v508 = vld [vmem:[%s3 + $0x4f0] sm:$0xff]
  %v509 = vld [vmem:[%s3 + $0x4f8] sm:$0xff]
  %v510 = vld [vmem:[%s3 + $0x500] sm:$0xff]
  %v511 = vld [vmem:[%s3 + $0x508] sm:$0xff]
  %v512 = vld [vmem:[%s3 + $0x510] sm:$0xff]
  %v513 = vld [vmem:[%s3 + $0x518] sm:$0xff]
  %v514 = vld [vmem:[%s3 + $0x520] sm:$0xff]
  %v515 = vld [vmem:[%s3 + $0x528] sm:$0xff]
  %v516 = vld [vmem:[%s3 + $0x530] sm:$0xff]
  %v517 = vld [vmem:[%s3 + $0x538] sm:$0xff]
  %v518 = vld [vmem:[%s3 + $0x540] sm:$0xff]
  %v519 = vld [vmem:[%s3 + $0x548] sm:$0xff]
  %v520 = vld [vmem:[%s3 + $0x550] sm:$0xff]
  %v521 = vld [vmem:[%s3 + $0x558] sm:$0xff]
  %v522 = vld [vmem:[%s3 + $0x560] sm:$0xff]
  %v523 = vld [vmem:[%s3 + $0x568] sm:$0xff]
  %v524 = vld [vmem:[%s3 + $0x570] sm:$0xff]
  %v525 = vld [vmem:[%s3 + $0x578] sm:$0xff]
  %v526 = vld [vmem:[%s3 + $0x580] sm:$0xff]
  %v527 = vld [vmem:[%s3 + $0x588] sm:$0xff]
  %v528 = vld [vmem:[%s3 + $0x590] sm:$0xff]
  %v529 = vld [vmem:[%s3 + $0x598] sm:$0xff]
  %v530 = vld [vmem:[%s3 + $0x5a0] sm:$0xff]
  %v531 = vld [vmem:[%s3 + $0x5a8] sm:$0xff]
  %v532 = vld [vmem:[%s3 + $0x5b0] sm:$0xff]
  %v533 = vld [vmem:[%s3 + $0x5b8] sm:$0xff]
  %v534 = vld [vmem:[%s3 + $0x5c0] sm:$0xff]
  %v535 = vld [vmem:[%s3 + $0x5c8] sm:$0xff]
  %v536 = vld [vmem:[%s3 + $0x5d0] sm:$0xff]
  %v537 = vld [vmem:[%s3 + $0x5d8] sm:$0xff]
  %v538 = vld [vmem:[%s3 + $0x5e0] sm:$0xff]
  %v539 = vld [vmem:[%s3 + $0x5e8] sm:$0xff]
  %v540 = vld [vmem:[%s3 + $0x5f0] sm:$0xff]
  %v541 = vld [vmem:[%s3 + $0x5f8] sm:$0xff]
  %v542 = vld [vmem:[%s3 + $0x600] sm:$0xff]
  %v543 = vld [vmem:[%s3 + $0x608] sm:$0xff]
  %v544 = vld [vmem:[%s3 + $0x610] sm:$0xff]
  %v545 = vld [vmem:[%s3 + $0x618] sm:$0xff]
  %v546 = vld [vmem:[%s3 + $0x620] sm:$0xff]
  %v547 = vld [vmem:[%s3 + $0x628] sm:$0xff]
  %v548 = vld [vmem:[%s3 + $0x630] sm:$0xff]
  %v549 = vld [vmem:[%s3 + $0x638] sm:$0xff]
  %v550 = vld [vmem:[%s3 + $0x640] sm:$0xff]
  %v551 = vld [vmem:[%s3 + $0x648] sm:$0xff]
  %v552 = vld [vmem:[%s3 + $0x650] sm:$0xff]
  %v553 = vld [vmem:[%s3 + $0x658] sm:$0xff]
  %v554 = vld [vmem:[%s3 + $0x660] sm:$0xff]
  %v555 = vld [vmem:[%s3 + $0x668] sm:$0xff]
  %v556 = vld [vmem:[%s3 + $0x670] sm:$0xff]
  %v557 = vld [vmem:[%s3 + $0x678] sm:$0xff]
  %v558 = vld [vmem:[%s3 + $0x680] sm:$0xff]
  %v559 = vld [vmem:[%s3 + $0x688] sm:$0xff]
  %v560 = vld [vmem:[%s3 + $0x690] sm:$0xff]
  %v561 = vld [vmem:[%s3 + $0x698] sm:$0xff]
  %v562 = vld [vmem:[%s3 + $0x6a0] sm:$0xff]
  %v563 = vld [vmem:[%s3 + $0x6a8] sm:$0xff]
  %v564 = vld [vmem:[%s3 + $0x6b0] sm:$0xff]
  %v565 = vld [vmem:[%s3 + $0x6b8] sm:$0xff]
  %v566 = vld [vmem:[%s3 + $0x6c0] sm:$0xff]
  %v567 = vld [vmem:[%s3 + $0x6c8] sm:$0xff]
  %v568 = vld [vmem:[%s3 + $0x6d0] sm:$0xff]
  %v569 = vld [vmem:[%s3 + $0x6d8] sm:$0xff]
  %v570 = vld [vmem:[%s3 + $0x6e0] sm:$0xff]
  %v571 = vld [vmem:[%s3 + $0x6e8] sm:$0xff]
  %v572 = vld [vmem:[%s3 + $0x6f0] sm:$0xff]
  %v573 = vld [vmem:[%s3 + $0x6f8] sm:$0xff]
  %v574 = vld [vmem:[%s3 + $0x700] sm:$0xff]
  %v575 = vld [vmem:[%s3 + $0x708] sm:$0xff]
  %v576 = vld [vmem:[%s3 + $0x710] sm:$0xff]
  %v577 = vld [vmem:[%s3 + $0x718] sm:$0xff]
  %v578 = vld [vmem:[%s3 + $0x720] sm:$0xff]
  %v579 = vld [vmem:[%s3 + $0x728] sm:$0xff]
  %v580 = vld [vmem:[%s3 + $0x730] sm:$0xff]
  %v581 = vld [vmem:[%s3 + $0x738] sm:$0xff]
  %v582 = vld [vmem:[%s3 + $0x740] sm:$0xff]
  %v583 = vld [vmem:[%s3 + $0x748] sm:$0xff]
  %v584 = vld [vmem:[%s3 + $0x750] sm:$0xff]
  %v585 = vld [vmem:[%s3 + $0x758] sm:$0xff]
  %v586 = vld [vmem:[%s3 + $0x760] sm:$0xff]
  %v587 = vld [vmem:[%s3 + $0x768] sm:$0xff]
  %v588 = vld [vmem:[%s3 + $0x770] sm:$0xff]
  %v589 = vld [vmem:[%s3 + $0x778] sm:$0xff]
  %v590 = vld [vmem:[%s3 + $0x780] sm:$0xff]
  %v591 = vld [vmem:[%s3 + $0x788] sm:$0xff]
  %v592 = vld [vmem:[%s3 + $0x790] sm:$0xff]
  %v593 = vld [vmem:[%s3 + $0x798] sm:$0xff]
  %v594 = vld [vmem:[%s3 + $0x7a0] sm:$0xff]
  %v595 = vld [vmem:[%s3 + $0x7a8] sm:$0xff]
  %v596 = vld [vmem:[%s3 + $0x7b0] sm:$0xff]
  %v597 = vld [vmem:[%s3 + $0x7b8] sm:$0xff]
  %v598 = vld [vmem:[%s3 + $0x7c0] sm:$0x33]
  %v599 = vld [vmem:[%s3 + $0x7c8] sm:$0x33]
  %v600 = vld [vmem:[%s3 + $0x7d0] sm:$0x33]
  %v601 = vld [vmem:[%s3 + $0x7d8] sm:$0x33]
  %v602 = vld [vmem:[%s4] sm:$0xff]
  %v604 = vlaneseq
  %v605 = vshrl.u32 %v604, 7
  %v606 = vsub.s32 0, %v605
  %v607 = vrot.slane %v602, %v606
  %v608 = vlaneseq
  %v609 = vshrl.u32 %v608, 7
  %v610 = vsub.s32 1, %v609
  %v611 = vrot.slane %v602, %v610
  %v612 = vlaneseq
  %v613 = vshrl.u32 %v612, 7
  %v614 = vsub.s32 2, %v613
  %v615 = vrot.slane %v602, %v614
  %v616 = vlaneseq
  %v617 = vshrl.u32 %v616, 7
  %v618 = vsub.s32 3, %v617
  %v619 = vrot.slane %v602, %v618
  %v620 = vlaneseq
  %v621 = vshrl.u32 %v620, 7
  %v622 = vsub.s32 4, %v621
  %v623 = vrot.slane %v602, %v622
  %v624 = vlaneseq
  %v625 = vshrl.u32 %v624, 7
  %v626 = vsub.s32 5, %v625
  %v627 = vrot.slane %v602, %v626
  %v628 = vlaneseq
  %v629 = vshrl.u32 %v628, 7
  %v630 = vsub.s32 6, %v629
  %v631 = vrot.slane %v602, %v630
  %v632 = vlaneseq
  %v633 = vshrl.u32 %v632, 7
  %v634 = vsub.s32 7, %v633
  %v635 = vrot.slane %v602, %v634
  %v896 = vunpack.c.l.b16 %v350
  %v897 = vunpack.c.h.b16 %v350
  %v898 = vunpack.c.l.b16 %v351
  %v899 = vunpack.c.h.b16 %v351
  %v900 = vunpack.c.l.b16 %v352
  %v901 = vunpack.c.h.b16 %v352
  %v902 = vunpack.c.l.b16 %v353
  %v903 = vunpack.c.h.b16 %v353
  %v904 = vunpack.c.l.b16 %v354
  %v905 = vunpack.c.h.b16 %v354
  %v906 = vunpack.c.l.b16 %v355
  %v907 = vunpack.c.h.b16 %v355
  %v908 = vunpack.c.l.b16 %v356
  %v909 = vunpack.c.h.b16 %v356
  %v910 = vunpack.c.l.b16 %v357
  %v911 = vunpack.c.h.b16 %v357
  %v912 = vunpack.c.l.b16 %v358
  %v913 = vunpack.c.h.b16 %v358
  %v914 = vunpack.c.l.b16 %v359
  %v915 = vunpack.c.h.b16 %v359
  %v916 = vunpack.c.l.b16 %v360
  %v917 = vunpack.c.h.b16 %v360
  %v918 = vunpack.c.l.b16 %v361
  %v919 = vunpack.c.h.b16 %v361
  %v920 = vunpack.c.l.b16 %v362
  %v921 = vunpack.c.h.b16 %v362
  %v922 = vunpack.c.l.b16 %v363
  %v923 = vunpack.c.h.b16 %v363
  %v924 = vunpack.c.l.b16 %v364
  %v925 = vunpack.c.h.b16 %v364
  %v926 = vunpack.c.l.b16 %v365
  %v927 = vunpack.c.h.b16 %v365
  %v928 = vunpack.c.l.b16 %v366
  %v929 = vunpack.c.h.b16 %v366
  %v930 = vunpack.c.l.b16 %v367
  %v931 = vunpack.c.h.b16 %v367
  %v932 = vunpack.c.l.b16 %v368
  %v933 = vunpack.c.h.b16 %v368
  %v934 = vunpack.c.l.b16 %v369
  %v935 = vunpack.c.h.b16 %v369
  %v936 = vunpack.c.l.b16 %v370
  %v937 = vunpack.c.h.b16 %v370
  %v938 = vunpack.c.l.b16 %v371
  %v939 = vunpack.c.h.b16 %v371
  %v940 = vunpack.c.l.b16 %v372
  %v941 = vunpack.c.h.b16 %v372
  %v942 = vunpack.c.l.b16 %v373
  %v943 = vunpack.c.h.b16 %v373
  %v944 = vunpack.c.l.b16 %v374
  %v945 = vunpack.c.h.b16 %v374
  %v946 = vunpack.c.l.b16 %v375
  %v947 = vunpack.c.h.b16 %v375
  %v948 = vunpack.c.l.b16 %v376
  %v949 = vunpack.c.h.b16 %v376
  %v950 = vunpack.c.l.b16 %v377
  %v951 = vunpack.c.h.b16 %v377
  %v952 = vunpack.c.l.b16 %v378
  %v953 = vunpack.c.h.b16 %v378
  %v954 = vunpack.c.l.b16 %v379
  %v955 = vunpack.c.h.b16 %v379
  %v956 = vunpack.c.l.b16 %v380
  %v957 = vunpack.c.h.b16 %v380
  %v958 = vunpack.c.l.b16 %v381
  %v959 = vunpack.c.h.b16 %v381
  %v960 = vunpack.c.l.b16 %v382
  %v961 = vunpack.c.h.b16 %v382
  %v962 = vunpack.c.l.b16 %v383
  %v963 = vunpack.c.h.b16 %v383
  %v964 = vunpack.c.l.b16 %v384
  %v965 = vunpack.c.h.b16 %v384
  %v966 = vunpack.c.l.b16 %v385
  %v967 = vunpack.c.h.b16 %v385
  %v968 = vunpack.c.l.b16 %v386
  %v969 = vunpack.c.h.b16 %v386
  %v970 = vunpack.c.l.b16 %v387
  %v971 = vunpack.c.h.b16 %v387
  %v972 = vunpack.c.l.b16 %v388
  %v973 = vunpack.c.h.b16 %v388
  %v974 = vunpack.c.l.b16 %v389
  %v975 = vunpack.c.h.b16 %v389
  %v976 = vunpack.c.l.b16 %v390
  %v977 = vunpack.c.h.b16 %v390
  %v978 = vunpack.c.l.b16 %v391
  %v979 = vunpack.c.h.b16 %v391
  %v980 = vunpack.c.l.b16 %v392
  %v981 = vunpack.c.h.b16 %v392
  %v982 = vunpack.c.l.b16 %v393
  %v983 = vunpack.c.h.b16 %v393
  %v984 = vunpack.c.l.b16 %v394
  %v985 = vunpack.c.h.b16 %v394
  %v986 = vunpack.c.l.b16 %v395
  %v987 = vunpack.c.h.b16 %v395
  %v988 = vunpack.c.l.b16 %v396
  %v989 = vunpack.c.h.b16 %v396
  %v990 = vunpack.c.l.b16 %v397
  %v991 = vunpack.c.h.b16 %v397
  %v992 = vunpack.c.l.b16 %v398
  %v993 = vunpack.c.h.b16 %v398
  %v994 = vunpack.c.l.b16 %v399
  %v995 = vunpack.c.h.b16 %v399
  %v996 = vunpack.c.l.b16 %v400
  %v997 = vunpack.c.h.b16 %v400
  %v998 = vunpack.c.l.b16 %v401
  %v999 = vunpack.c.h.b16 %v401
  %v1000 = vunpack.c.l.b16 %v402
  %v1001 = vunpack.c.h.b16 %v402
  %v1002 = vunpack.c.l.b16 %v403
  %v1003 = vunpack.c.h.b16 %v403
  %v1004 = vunpack.c.l.b16 %v404
  %v1005 = vunpack.c.h.b16 %v404
  %v1006 = vunpack.c.l.b16 %v405
  %v1007 = vunpack.c.h.b16 %v405
  %v1008 = vunpack.c.l.b16 %v406
  %v1009 = vunpack.c.h.b16 %v406
  %v1010 = vunpack.c.l.b16 %v407
  %v1011 = vunpack.c.h.b16 %v407
  %v1012 = vunpack.c.l.b16 %v408
  %v1013 = vunpack.c.h.b16 %v408
  %v1014 = vunpack.c.l.b16 %v409
  %v1015 = vunpack.c.h.b16 %v409
  %v1016 = vunpack.c.l.b16 %v410
  %v1017 = vunpack.c.h.b16 %v410
  %v1018 = vunpack.c.l.b16 %v411
  %v1019 = vunpack.c.h.b16 %v411
  %v1020 = vunpack.c.l.b16 %v412
  %v1021 = vunpack.c.h.b16 %v412
  %v1022 = vunpack.c.l.b16 %v413
  %v1023 = vunpack.c.h.b16 %v413
  %v1024 = vunpack.c.l.b16 %v414
  %v1025 = vunpack.c.h.b16 %v414
  %v1026 = vunpack.c.l.b16 %v415
  %v1027 = vunpack.c.h.b16 %v415
  %v1028 = vunpack.c.l.b16 %v416
  %v1029 = vunpack.c.h.b16 %v416
  %v1030 = vunpack.c.l.b16 %v417
  %v1031 = vunpack.c.h.b16 %v417
  %v1032 = vunpack.c.l.b16 %v418
  %v1033 = vunpack.c.h.b16 %v418
  %v1034 = vunpack.c.l.b16 %v419
  %v1035 = vunpack.c.h.b16 %v419
  %v1036 = vunpack.c.l.b16 %v420
  %v1037 = vunpack.c.h.b16 %v420
  %v1038 = vunpack.c.l.b16 %v421
  %v1039 = vunpack.c.h.b16 %v421
  %v1040 = vunpack.c.l.b16 %v422
  %v1041 = vunpack.c.h.b16 %v422
  %v1042 = vunpack.c.l.b16 %v423
  %v1043 = vunpack.c.h.b16 %v423
  %v1044 = vunpack.c.l.b16 %v424
  %v1045 = vunpack.c.h.b16 %v424
  %v1046 = vunpack.c.l.b16 %v425
  %v1047 = vunpack.c.h.b16 %v425
  %v1048 = vunpack.c.l.b16 %v426
  %v1049 = vunpack.c.h.b16 %v426
  %v1050 = vunpack.c.l.b16 %v427
  %v1051 = vunpack.c.h.b16 %v427
  %v1052 = vunpack.c.l.b16 %v428
  %v1053 = vunpack.c.h.b16 %v428
  %v1054 = vunpack.c.l.b16 %v429
  %v1055 = vunpack.c.h.b16 %v429
  %v1056 = vunpack.c.l.b16 %v430
  %v1057 = vunpack.c.h.b16 %v430
  %v1058 = vunpack.c.l.b16 %v431
  %v1059 = vunpack.c.h.b16 %v431
  %v1060 = vunpack.c.l.b16 %v432
  %v1061 = vunpack.c.h.b16 %v432
  %v1062 = vunpack.c.l.b16 %v433
  %v1063 = vunpack.c.h.b16 %v433
  %v1064 = vunpack.c.l.b16 %v434
  %v1065 = vunpack.c.h.b16 %v434
  %v1066 = vunpack.c.l.b16 %v435
  %v1067 = vunpack.c.h.b16 %v435
  %v1068 = vunpack.c.l.b16 %v436
  %v1069 = vunpack.c.h.b16 %v436
  %v1070 = vunpack.c.l.b16 %v437
  %v1071 = vunpack.c.h.b16 %v437
  %v1072 = vunpack.c.l.b16 %v438
  %v1073 = vunpack.c.h.b16 %v438
  %v1074 = vunpack.c.l.b16 %v439
  %v1075 = vunpack.c.h.b16 %v439
  %v1076 = vunpack.c.l.b16 %v440
  %v1077 = vunpack.c.h.b16 %v440
  %v1078 = vunpack.c.l.b16 %v441
  %v1079 = vunpack.c.h.b16 %v441
  %v1080 = vunpack.c.l.b16 %v442
  %v1081 = vunpack.c.h.b16 %v442
  %v1082 = vunpack.c.l.b16 %v443
  %v1083 = vunpack.c.h.b16 %v443
  %v1084 = vunpack.c.l.b16 %v444
  %v1085 = vunpack.c.h.b16 %v444
  %v1086 = vunpack.c.l.b16 %v445
  %v1087 = vunpack.c.h.b16 %v445
  %v1088 = vunpack.c.l.b16 %v446
  %v1089 = vunpack.c.h.b16 %v446
  %v1090 = vunpack.c.l.b16 %v447
  %v1091 = vunpack.c.h.b16 %v447
  %v1092 = vunpack.c.l.b16 %v448
  %v1093 = vunpack.c.h.b16 %v448
  %v1094 = vunpack.c.l.b16 %v449
  %v1095 = vunpack.c.h.b16 %v449
  %v1096 = vunpack.c.l.b16 %v450
  %v1097 = vunpack.c.h.b16 %v450
  %v1098 = vunpack.c.l.b16 %v451
  %v1099 = vunpack.c.h.b16 %v451
  %v1100 = vunpack.c.l.b16 %v452
  %v1101 = vunpack.c.h.b16 %v452
  %v1102 = vunpack.c.l.b16 %v453
  %v1103 = vunpack.c.h.b16 %v453
  %v1104 = vunpack.c.l.b16 %v454
  %v1105 = vunpack.c.h.b16 %v454
  %v1106 = vunpack.c.l.b16 %v455
  %v1107 = vunpack.c.h.b16 %v455
  %v1108 = vunpack.c.l.b16 %v456
  %v1109 = vunpack.c.h.b16 %v456
  %v1110 = vunpack.c.l.b16 %v457
  %v1111 = vunpack.c.h.b16 %v457
  %v1112 = vunpack.c.l.b16 %v458
  %v1113 = vunpack.c.h.b16 %v458
  %v1114 = vunpack.c.l.b16 %v459
  %v1115 = vunpack.c.h.b16 %v459
  %v1116 = vunpack.c.l.b16 %v460
  %v1117 = vunpack.c.h.b16 %v460
  %v1118 = vunpack.c.l.b16 %v461
  %v1119 = vunpack.c.h.b16 %v461
  %v1120 = vunpack.c.l.b16 %v462
  %v1121 = vunpack.c.h.b16 %v462
  %v1122 = vunpack.c.l.b16 %v463
  %v1123 = vunpack.c.h.b16 %v463
  %v1124 = vunpack.c.l.b16 %v464
  %v1125 = vunpack.c.h.b16 %v464
  %v1126 = vunpack.c.l.b16 %v465
  %v1127 = vunpack.c.h.b16 %v465
  %v1128 = vunpack.c.l.b16 %v466
  %v1129 = vunpack.c.h.b16 %v466
  %v1130 = vunpack.c.l.b16 %v467
  %v1131 = vunpack.c.h.b16 %v467
  %v1132 = vunpack.c.l.b16 %v468
  %v1133 = vunpack.c.h.b16 %v468
  %v1134 = vunpack.c.l.b16 %v469
  %v1135 = vunpack.c.h.b16 %v469
  %v1136 = vunpack.c.l.b16 %v470
  %v1137 = vunpack.c.h.b16 %v470
  %v1138 = vunpack.c.l.b16 %v471
  %v1139 = vunpack.c.h.b16 %v471
  %v1140 = vunpack.c.l.b16 %v472
  %v1141 = vunpack.c.h.b16 %v472
  %v1142 = vunpack.c.l.b16 %v473
  %v1143 = vunpack.c.h.b16 %v473
  %v1144 = vunpack.c.l.b16 %v474
  %v1145 = vunpack.c.h.b16 %v474
  %v1146 = vunpack.c.l.b16 %v475
  %v1147 = vunpack.c.h.b16 %v475
  %v1148 = vunpack.c.l.b16 %v476
  %v1149 = vunpack.c.h.b16 %v476
  %v1150 = vunpack.c.l.b16 %v477
  %v1151 = vunpack.c.h.b16 %v477
  %v1152 = vunpack.c.l.b16 %v478
  %v1153 = vunpack.c.h.b16 %v478
  %v1154 = vunpack.c.l.b16 %v479
  %v1155 = vunpack.c.h.b16 %v479
  %v1156 = vunpack.c.l.b16 %v480
  %v1157 = vunpack.c.h.b16 %v480
  %v1158 = vunpack.c.l.b16 %v481
  %v1159 = vunpack.c.h.b16 %v481
  %v1160 = vunpack.c.l.b16 %v482
  %v1161 = vunpack.c.h.b16 %v482
  %v1162 = vunpack.c.l.b16 %v483
  %v1163 = vunpack.c.h.b16 %v483
  %v1164 = vunpack.c.l.b16 %v484
  %v1165 = vunpack.c.h.b16 %v484
  %v1166 = vunpack.c.l.b16 %v485
  %v1167 = vunpack.c.h.b16 %v485
  %v1168 = vunpack.c.l.b16 %v486
  %v1169 = vunpack.c.h.b16 %v486
  %v1170 = vunpack.c.l.b16 %v487
  %v1171 = vunpack.c.h.b16 %v487
  %v1172 = vunpack.c.l.b16 %v488
  %v1173 = vunpack.c.h.b16 %v488
  %v1174 = vunpack.c.l.b16 %v489
  %v1175 = vunpack.c.h.b16 %v489
  %v1176 = vunpack.c.l.b16 %v490
  %v1177 = vunpack.c.h.b16 %v490
  %v1178 = vunpack.c.l.b16 %v491
  %v1179 = vunpack.c.h.b16 %v491
  %v1180 = vunpack.c.l.b16 %v492
  %v1181 = vunpack.c.h.b16 %v492
  %v1182 = vunpack.c.l.b16 %v493
  %v1183 = vunpack.c.h.b16 %v493
  %v1184 = vunpack.c.l.b16 %v494
  %v1185 = vunpack.c.h.b16 %v494
  %v1186 = vunpack.c.l.b16 %v495
  %v1187 = vunpack.c.h.b16 %v495
  %v1188 = vunpack.c.l.b16 %v496
  %v1189 = vunpack.c.h.b16 %v496
  %v1190 = vunpack.c.l.b16 %v497
  %v1191 = vunpack.c.h.b16 %v497
  %v1192 = vunpack.c.l.b16 %v498
  %v1193 = vunpack.c.h.b16 %v498
  %v1194 = vunpack.c.l.b16 %v499
  %v1195 = vunpack.c.h.b16 %v499
  %v1196 = vunpack.c.l.b16 %v500
  %v1197 = vunpack.c.h.b16 %v500
  %v1198 = vunpack.c.l.b16 %v501
  %v1199 = vunpack.c.h.b16 %v501
  %v1200 = vunpack.c.l.b16 %v502
  %v1201 = vunpack.c.h.b16 %v502
  %v1202 = vunpack.c.l.b16 %v503
  %v1203 = vunpack.c.h.b16 %v503
  %v1204 = vunpack.c.l.b16 %v504
  %v1205 = vunpack.c.h.b16 %v504
  %v1206 = vunpack.c.l.b16 %v505
  %v1207 = vunpack.c.h.b16 %v505
  %v1208 = vunpack.c.l.b16 %v506
  %v1209 = vunpack.c.h.b16 %v506
  %v1210 = vunpack.c.l.b16 %v507
  %v1211 = vunpack.c.h.b16 %v507
  %v1212 = vunpack.c.l.b16 %v508
  %v1213 = vunpack.c.h.b16 %v508
  %v1214 = vunpack.c.l.b16 %v509
  %v1215 = vunpack.c.h.b16 %v509
  %v1216 = vunpack.c.l.b16 %v510
  %v1217 = vunpack.c.h.b16 %v510
  %v1218 = vunpack.c.l.b16 %v511
  %v1219 = vunpack.c.h.b16 %v511
  %v1220 = vunpack.c.l.b16 %v512
  %v1221 = vunpack.c.h.b16 %v512
  %v1222 = vunpack.c.l.b16 %v513
  %v1223 = vunpack.c.h.b16 %v513
  %v1224 = vunpack.c.l.b16 %v514
  %v1225 = vunpack.c.h.b16 %v514
  %v1226 = vunpack.c.l.b16 %v515
  %v1227 = vunpack.c.h.b16 %v515
  %v1228 = vunpack.c.l.b16 %v516
  %v1229 = vunpack.c.h.b16 %v516
  %v1230 = vunpack.c.l.b16 %v517
  %v1231 = vunpack.c.h.b16 %v517
  %v1232 = vunpack.c.l.b16 %v518
  %v1233 = vunpack.c.h.b16 %v518
  %v1234 = vunpack.c.l.b16 %v519
  %v1235 = vunpack.c.h.b16 %v519
  %v1236 = vunpack.c.l.b16 %v520
  %v1237 = vunpack.c.h.b16 %v520
  %v1238 = vunpack.c.l.b16 %v521
  %v1239 = vunpack.c.h.b16 %v521
  %v1240 = vunpack.c.l.b16 %v522
  %v1241 = vunpack.c.h.b16 %v522
  %v1242 = vunpack.c.l.b16 %v523
  %v1243 = vunpack.c.h.b16 %v523
  %v1244 = vunpack.c.l.b16 %v524
  %v1245 = vunpack.c.h.b16 %v524
  %v1246 = vunpack.c.l.b16 %v525
  %v1247 = vunpack.c.h.b16 %v525
  %v1248 = vunpack.c.l.b16 %v526
  %v1249 = vunpack.c.h.b16 %v526
  %v1250 = vunpack.c.l.b16 %v527
  %v1251 = vunpack.c.h.b16 %v527
  %v1252 = vunpack.c.l.b16 %v528
  %v1253 = vunpack.c.h.b16 %v528
  %v1254 = vunpack.c.l.b16 %v529
  %v1255 = vunpack.c.h.b16 %v529
  %v1256 = vunpack.c.l.b16 %v530
  %v1257 = vunpack.c.h.b16 %v530
  %v1258 = vunpack.c.l.b16 %v531
  %v1259 = vunpack.c.h.b16 %v531
  %v1260 = vunpack.c.l.b16 %v532
  %v1261 = vunpack.c.h.b16 %v532
  %v1262 = vunpack.c.l.b16 %v533
  %v1263 = vunpack.c.h.b16 %v533
  %v1264 = vunpack.c.l.b16 %v534
  %v1265 = vunpack.c.h.b16 %v534
  %v1266 = vunpack.c.l.b16 %v535
  %v1267 = vunpack.c.h.b16 %v535
  %v1268 = vunpack.c.l.b16 %v536
  %v1269 = vunpack.c.h.b16 %v536
  %v1270 = vunpack.c.l.b16 %v537
  %v1271 = vunpack.c.h.b16 %v537
  %v1272 = vunpack.c.l.b16 %v538
  %v1273 = vunpack.c.h.b16 %v538
  %v1274 = vunpack.c.l.b16 %v539
  %v1275 = vunpack.c.h.b16 %v539
  %v1276 = vunpack.c.l.b16 %v540
  %v1277 = vunpack.c.h.b16 %v540
  %v1278 = vunpack.c.l.b16 %v541
  %v1279 = vunpack.c.h.b16 %v541
  %v1280 = vunpack.c.l.b16 %v542
  %v1281 = vunpack.c.h.b16 %v542
  %v1282 = vunpack.c.l.b16 %v543
  %v1283 = vunpack.c.h.b16 %v543
  %v1284 = vunpack.c.l.b16 %v544
  %v1285 = vunpack.c.h.b16 %v544
  %v1286 = vunpack.c.l.b16 %v545
  %v1287 = vunpack.c.h.b16 %v545
  %v1288 = vunpack.c.l.b16 %v546
  %v1289 = vunpack.c.h.b16 %v546
  %v1290 = vunpack.c.l.b16 %v547
  %v1291 = vunpack.c.h.b16 %v547
  %v1292 = vunpack.c.l.b16 %v548
  %v1293 = vunpack.c.h.b16 %v548
  %v1294 = vunpack.c.l.b16 %v549
  %v1295 = vunpack.c.h.b16 %v549
  %v1296 = vunpack.c.l.b16 %v550
  %v1297 = vunpack.c.h.b16 %v550
  %v1298 = vunpack.c.l.b16 %v551
  %v1299 = vunpack.c.h.b16 %v551
  %v1300 = vunpack.c.l.b16 %v552
  %v1301 = vunpack.c.h.b16 %v552
  %v1302 = vunpack.c.l.b16 %v553
  %v1303 = vunpack.c.h.b16 %v553
  %v1304 = vunpack.c.l.b16 %v554
  %v1305 = vunpack.c.h.b16 %v554
  %v1306 = vunpack.c.l.b16 %v555
  %v1307 = vunpack.c.h.b16 %v555
  %v1308 = vunpack.c.l.b16 %v556
  %v1309 = vunpack.c.h.b16 %v556
  %v1310 = vunpack.c.l.b16 %v557
  %v1311 = vunpack.c.h.b16 %v557
  %v1312 = vunpack.c.l.b16 %v558
  %v1313 = vunpack.c.h.b16 %v558
  %v1314 = vunpack.c.l.b16 %v559
  %v1315 = vunpack.c.h.b16 %v559
  %v1316 = vunpack.c.l.b16 %v560
  %v1317 = vunpack.c.h.b16 %v560
  %v1318 = vunpack.c.l.b16 %v561
  %v1319 = vunpack.c.h.b16 %v561
  %v1320 = vunpack.c.l.b16 %v562
  %v1321 = vunpack.c.h.b16 %v562
  %v1322 = vunpack.c.l.b16 %v563
  %v1323 = vunpack.c.h.b16 %v563
  %v1324 = vunpack.c.l.b16 %v564
  %v1325 = vunpack.c.h.b16 %v564
  %v1326 = vunpack.c.l.b16 %v565
  %v1327 = vunpack.c.h.b16 %v565
  %v1328 = vunpack.c.l.b16 %v566
  %v1329 = vunpack.c.h.b16 %v566
  %v1330 = vunpack.c.l.b16 %v567
  %v1331 = vunpack.c.h.b16 %v567
  %v1332 = vunpack.c.l.b16 %v568
  %v1333 = vunpack.c.h.b16 %v568
  %v1334 = vunpack.c.l.b16 %v569
  %v1335 = vunpack.c.h.b16 %v569
  %v1336 = vunpack.c.l.b16 %v570
  %v1337 = vunpack.c.h.b16 %v570
  %v1338 = vunpack.c.l.b16 %v571
  %v1339 = vunpack.c.h.b16 %v571
  %v1340 = vunpack.c.l.b16 %v572
  %v1341 = vunpack.c.h.b16 %v572
  %v1342 = vunpack.c.l.b16 %v573
  %v1343 = vunpack.c.h.b16 %v573
  %v1344 = vunpack.c.l.b16 %v574
  %v1345 = vunpack.c.h.b16 %v574
  %v1346 = vunpack.c.l.b16 %v575
  %v1347 = vunpack.c.h.b16 %v575
  %v1348 = vunpack.c.l.b16 %v576
  %v1349 = vunpack.c.h.b16 %v576
  %v1350 = vunpack.c.l.b16 %v577
  %v1351 = vunpack.c.h.b16 %v577
  %v1352 = vunpack.c.l.b16 %v578
  %v1353 = vunpack.c.h.b16 %v578
  %v1354 = vunpack.c.l.b16 %v579
  %v1355 = vunpack.c.h.b16 %v579
  %v1356 = vunpack.c.l.b16 %v580
  %v1357 = vunpack.c.h.b16 %v580
  %v1358 = vunpack.c.l.b16 %v581
  %v1359 = vunpack.c.h.b16 %v581
  %v1360 = vunpack.c.l.b16 %v582
  %v1361 = vunpack.c.h.b16 %v582
  %v1362 = vunpack.c.l.b16 %v583
  %v1363 = vunpack.c.h.b16 %v583
  %v1364 = vunpack.c.l.b16 %v584
  %v1365 = vunpack.c.h.b16 %v584
  %v1366 = vunpack.c.l.b16 %v585
  %v1367 = vunpack.c.h.b16 %v585
  %v1368 = vunpack.c.l.b16 %v586
  %v1369 = vunpack.c.h.b16 %v586
  %v1370 = vunpack.c.l.b16 %v587
  %v1371 = vunpack.c.h.b16 %v587
  %v1372 = vunpack.c.l.b16 %v588
  %v1373 = vunpack.c.h.b16 %v588
  %v1374 = vunpack.c.l.b16 %v589
  %v1375 = vunpack.c.h.b16 %v589
  %v1376 = vunpack.c.l.b16 %v590
  %v1377 = vunpack.c.h.b16 %v590
  %v1378 = vunpack.c.l.b16 %v591
  %v1379 = vunpack.c.h.b16 %v591
  %v1380 = vunpack.c.l.b16 %v592
  %v1381 = vunpack.c.h.b16 %v592
  %v1382 = vunpack.c.l.b16 %v593
  %v1383 = vunpack.c.h.b16 %v593
  %v1384 = vunpack.c.l.b16 %v594
  %v1385 = vunpack.c.h.b16 %v594
  %v1386 = vunpack.c.l.b16 %v595
  %v1387 = vunpack.c.h.b16 %v595
  %v1388 = vunpack.c.l.b16 %v596
  %v1389 = vunpack.c.h.b16 %v596
  %v1390 = vunpack.c.l.b16 %v597
  %v1391 = vunpack.c.h.b16 %v597
  %v1392 = vunpack.c.l.b16 %v598
  %v1393 = vunpack.c.h.b16 %v598
  %v1394 = vunpack.c.l.b16 %v599
  %v1395 = vunpack.c.h.b16 %v599
  %v1396 = vunpack.c.l.b16 %v600
  %v1397 = vunpack.c.h.b16 %v600
  %v1398 = vunpack.c.l.b16 %v601
  %v1399 = vunpack.c.h.b16 %v601
  %v1400 = vpack.c.b16 %v904, %v896
  %v1401 = vpack.c.b16 %v905, %v897
  %v1402 = vpack.c.b16 %v906, %v898
  %v1403 = vpack.c.b16 %v907, %v899
  %v1404 = vpack.c.b16 %v908, %v900
  %v1405 = vpack.c.b16 %v909, %v901
  %v1406 = vpack.c.b16 %v910, %v902
  %v1407 = vpack.c.b16 %v911, %v903
  %v1408 = vpack.c.b16 %v920, %v912
  %v1409 = vpack.c.b16 %v921, %v913
  %v1410 = vpack.c.b16 %v922, %v914
  %v1411 = vpack.c.b16 %v923, %v915
  %v1412 = vpack.c.b16 %v924, %v916
  %v1413 = vpack.c.b16 %v925, %v917
  %v1414 = vpack.c.b16 %v926, %v918
  %v1415 = vpack.c.b16 %v927, %v919
  %v1416 = vpack.c.b16 %v936, %v928
  %v1417 = vpack.c.b16 %v937, %v929
  %v1418 = vpack.c.b16 %v938, %v930
  %v1419 = vpack.c.b16 %v939, %v931
  %v1420 = vpack.c.b16 %v940, %v932
  %v1421 = vpack.c.b16 %v941, %v933
  %v1422 = vpack.c.b16 %v942, %v934
  %v1423 = vpack.c.b16 %v943, %v935
  %v1424 = vpack.c.b16 %v952, %v944
  %v1425 = vpack.c.b16 %v953, %v945
  %v1426 = vpack.c.b16 %v954, %v946
  %v1427 = vpack.c.b16 %v955, %v947
  %v1428 = vpack.c.b16 %v956, %v948
  %v1429 = vpack.c.b16 %v957, %v949
  %v1430 = vpack.c.b16 %v958, %v950
  %v1431 = vpack.c.b16 %v959, %v951
  %v1432 = vpack.c.b16 %v968, %v960
  %v1433 = vpack.c.b16 %v969, %v961
  %v1434 = vpack.c.b16 %v970, %v962
  %v1435 = vpack.c.b16 %v971, %v963
  %v1436 = vpack.c.b16 %v972, %v964
  %v1437 = vpack.c.b16 %v973, %v965
  %v1438 = vpack.c.b16 %v974, %v966
  %v1439 = vpack.c.b16 %v975, %v967
  %v1440 = vpack.c.b16 %v984, %v976
  %v1441 = vpack.c.b16 %v985, %v977
  %v1442 = vpack.c.b16 %v986, %v978
  %v1443 = vpack.c.b16 %v987, %v979
  %v1444 = vpack.c.b16 %v988, %v980
  %v1445 = vpack.c.b16 %v989, %v981
  %v1446 = vpack.c.b16 %v990, %v982
  %v1447 = vpack.c.b16 %v991, %v983
  %v1448 = vpack.c.b16 %v1000, %v992
  %v1449 = vpack.c.b16 %v1001, %v993
  %v1450 = vpack.c.b16 %v1002, %v994
  %v1451 = vpack.c.b16 %v1003, %v995
  %v1452 = vpack.c.b16 %v1004, %v996
  %v1453 = vpack.c.b16 %v1005, %v997
  %v1454 = vpack.c.b16 %v1006, %v998
  %v1455 = vpack.c.b16 %v1007, %v999
  %v1456 = vpack.c.b16 %v1016, %v1008
  %v1457 = vpack.c.b16 %v1017, %v1009
  %v1458 = vpack.c.b16 %v1018, %v1010
  %v1459 = vpack.c.b16 %v1019, %v1011
  %v1460 = vpack.c.b16 %v1020, %v1012
  %v1461 = vpack.c.b16 %v1021, %v1013
  %v1462 = vpack.c.b16 %v1022, %v1014
  %v1463 = vpack.c.b16 %v1023, %v1015
  %v1464 = vpack.c.b16 %v1032, %v1024
  %v1465 = vpack.c.b16 %v1033, %v1025
  %v1466 = vpack.c.b16 %v1034, %v1026
  %v1467 = vpack.c.b16 %v1035, %v1027
  %v1468 = vpack.c.b16 %v1036, %v1028
  %v1469 = vpack.c.b16 %v1037, %v1029
  %v1470 = vpack.c.b16 %v1038, %v1030
  %v1471 = vpack.c.b16 %v1039, %v1031
  %v1472 = vpack.c.b16 %v1048, %v1040
  %v1473 = vpack.c.b16 %v1049, %v1041
  %v1474 = vpack.c.b16 %v1050, %v1042
  %v1475 = vpack.c.b16 %v1051, %v1043
  %v1476 = vpack.c.b16 %v1052, %v1044
  %v1477 = vpack.c.b16 %v1053, %v1045
  %v1478 = vpack.c.b16 %v1054, %v1046
  %v1479 = vpack.c.b16 %v1055, %v1047
  %v1480 = vpack.c.b16 %v1064, %v1056
  %v1481 = vpack.c.b16 %v1065, %v1057
  %v1482 = vpack.c.b16 %v1066, %v1058
  %v1483 = vpack.c.b16 %v1067, %v1059
  %v1484 = vpack.c.b16 %v1068, %v1060
  %v1485 = vpack.c.b16 %v1069, %v1061
  %v1486 = vpack.c.b16 %v1070, %v1062
  %v1487 = vpack.c.b16 %v1071, %v1063
  %v1488 = vpack.c.b16 %v1080, %v1072
  %v1489 = vpack.c.b16 %v1081, %v1073
  %v1490 = vpack.c.b16 %v1082, %v1074
  %v1491 = vpack.c.b16 %v1083, %v1075
  %v1492 = vpack.c.b16 %v1084, %v1076
  %v1493 = vpack.c.b16 %v1085, %v1077
  %v1494 = vpack.c.b16 %v1086, %v1078
  %v1495 = vpack.c.b16 %v1087, %v1079
  %v1496 = vpack.c.b16 %v1096, %v1088
  %v1497 = vpack.c.b16 %v1097, %v1089
  %v1498 = vpack.c.b16 %v1098, %v1090
  %v1499 = vpack.c.b16 %v1099, %v1091
  %v1500 = vpack.c.b16 %v1100, %v1092
  %v1501 = vpack.c.b16 %v1101, %v1093
  %v1502 = vpack.c.b16 %v1102, %v1094
  %v1503 = vpack.c.b16 %v1103, %v1095
  %v1504 = vpack.c.b16 %v1112, %v1104
  %v1505 = vpack.c.b16 %v1113, %v1105
  %v1506 = vpack.c.b16 %v1114, %v1106
  %v1507 = vpack.c.b16 %v1115, %v1107
  %v1508 = vpack.c.b16 %v1116, %v1108
  %v1509 = vpack.c.b16 %v1117, %v1109
  %v1510 = vpack.c.b16 %v1118, %v1110
  %v1511 = vpack.c.b16 %v1119, %v1111
  %v1512 = vpack.c.b16 %v1128, %v1120
  %v1513 = vpack.c.b16 %v1129, %v1121
  %v1514 = vpack.c.b16 %v1130, %v1122
  %v1515 = vpack.c.b16 %v1131, %v1123
  %v1516 = vpack.c.b16 %v1132, %v1124
  %v1517 = vpack.c.b16 %v1133, %v1125
  %v1518 = vpack.c.b16 %v1134, %v1126
  %v1519 = vpack.c.b16 %v1135, %v1127
  %v1520 = vpack.c.b16 %v1144, %v1136
  %v1521 = vpack.c.b16 %v1145, %v1137
  %v1522 = vpack.c.b16 %v1146, %v1138
  %v1523 = vpack.c.b16 %v1147, %v1139
  %v1524 = vpack.c.b16 %v1148, %v1140
  %v1525 = vpack.c.b16 %v1149, %v1141
  %v1526 = vpack.c.b16 %v1150, %v1142
  %v1527 = vpack.c.b16 %v1151, %v1143
  %v1528 = vpack.c.b16 %v1160, %v1152
  %v1529 = vpack.c.b16 %v1161, %v1153
  %v1530 = vpack.c.b16 %v1162, %v1154
  %v1531 = vpack.c.b16 %v1163, %v1155
  %v1532 = vpack.c.b16 %v1164, %v1156
  %v1533 = vpack.c.b16 %v1165, %v1157
  %v1534 = vpack.c.b16 %v1166, %v1158
  %v1535 = vpack.c.b16 %v1167, %v1159
  %v1536 = vpack.c.b16 %v1176, %v1168
  %v1537 = vpack.c.b16 %v1177, %v1169
  %v1538 = vpack.c.b16 %v1178, %v1170
  %v1539 = vpack.c.b16 %v1179, %v1171
  %v1540 = vpack.c.b16 %v1180, %v1172
  %v1541 = vpack.c.b16 %v1181, %v1173
  %v1542 = vpack.c.b16 %v1182, %v1174
  %v1543 = vpack.c.b16 %v1183, %v1175
  %v1544 = vpack.c.b16 %v1192, %v1184
  %v1545 = vpack.c.b16 %v1193, %v1185
  %v1546 = vpack.c.b16 %v1194, %v1186
  %v1547 = vpack.c.b16 %v1195, %v1187
  %v1548 = vpack.c.b16 %v1196, %v1188
  %v1549 = vpack.c.b16 %v1197, %v1189
  %v1550 = vpack.c.b16 %v1198, %v1190
  %v1551 = vpack.c.b16 %v1199, %v1191
  %v1552 = vpack.c.b16 %v1208, %v1200
  %v1553 = vpack.c.b16 %v1209, %v1201
  %v1554 = vpack.c.b16 %v1210, %v1202
  %v1555 = vpack.c.b16 %v1211, %v1203
  %v1556 = vpack.c.b16 %v1212, %v1204
  %v1557 = vpack.c.b16 %v1213, %v1205
  %v1558 = vpack.c.b16 %v1214, %v1206
  %v1559 = vpack.c.b16 %v1215, %v1207
  %v1560 = vpack.c.b16 %v1224, %v1216
  %v1561 = vpack.c.b16 %v1225, %v1217
  %v1562 = vpack.c.b16 %v1226, %v1218
  %v1563 = vpack.c.b16 %v1227, %v1219
  %v1564 = vpack.c.b16 %v1228, %v1220
  %v1565 = vpack.c.b16 %v1229, %v1221
  %v1566 = vpack.c.b16 %v1230, %v1222
  %v1567 = vpack.c.b16 %v1231, %v1223
  %v1568 = vpack.c.b16 %v1240, %v1232
  %v1569 = vpack.c.b16 %v1241, %v1233
  %v1570 = vpack.c.b16 %v1242, %v1234
  %v1571 = vpack.c.b16 %v1243, %v1235
  %v1572 = vpack.c.b16 %v1244, %v1236
  %v1573 = vpack.c.b16 %v1245, %v1237
  %v1574 = vpack.c.b16 %v1246, %v1238
  %v1575 = vpack.c.b16 %v1247, %v1239
  %v1576 = vpack.c.b16 %v1256, %v1248
  %v1577 = vpack.c.b16 %v1257, %v1249
  %v1578 = vpack.c.b16 %v1258, %v1250
  %v1579 = vpack.c.b16 %v1259, %v1251
  %v1580 = vpack.c.b16 %v1260, %v1252
  %v1581 = vpack.c.b16 %v1261, %v1253
  %v1582 = vpack.c.b16 %v1262, %v1254
  %v1583 = vpack.c.b16 %v1263, %v1255
  %v1584 = vpack.c.b16 %v1272, %v1264
  %v1585 = vpack.c.b16 %v1273, %v1265
  %v1586 = vpack.c.b16 %v1274, %v1266
  %v1587 = vpack.c.b16 %v1275, %v1267
  %v1588 = vpack.c.b16 %v1276, %v1268
  %v1589 = vpack.c.b16 %v1277, %v1269
  %v1590 = vpack.c.b16 %v1278, %v1270
  %v1591 = vpack.c.b16 %v1279, %v1271
  %v1592 = vpack.c.b16 %v1288, %v1280
  %v1593 = vpack.c.b16 %v1289, %v1281
  %v1594 = vpack.c.b16 %v1290, %v1282
  %v1595 = vpack.c.b16 %v1291, %v1283
  %v1596 = vpack.c.b16 %v1292, %v1284
  %v1597 = vpack.c.b16 %v1293, %v1285
  %v1598 = vpack.c.b16 %v1294, %v1286
  %v1599 = vpack.c.b16 %v1295, %v1287
  %v1600 = vpack.c.b16 %v1304, %v1296
  %v1601 = vpack.c.b16 %v1305, %v1297
  %v1602 = vpack.c.b16 %v1306, %v1298
  %v1603 = vpack.c.b16 %v1307, %v1299
  %v1604 = vpack.c.b16 %v1308, %v1300
  %v1605 = vpack.c.b16 %v1309, %v1301
  %v1606 = vpack.c.b16 %v1310, %v1302
  %v1607 = vpack.c.b16 %v1311, %v1303
  %v1608 = vpack.c.b16 %v1320, %v1312
  %v1609 = vpack.c.b16 %v1321, %v1313
  %v1610 = vpack.c.b16 %v1322, %v1314
  %v1611 = vpack.c.b16 %v1323, %v1315
  %v1612 = vpack.c.b16 %v1324, %v1316
  %v1613 = vpack.c.b16 %v1325, %v1317
  %v1614 = vpack.c.b16 %v1326, %v1318
  %v1615 = vpack.c.b16 %v1327, %v1319
  %v1616 = vpack.c.b16 %v1336, %v1328
  %v1617 = vpack.c.b16 %v1337, %v1329
  %v1618 = vpack.c.b16 %v1338, %v1330
  %v1619 = vpack.c.b16 %v1339, %v1331
  %v1620 = vpack.c.b16 %v1340, %v1332
  %v1621 = vpack.c.b16 %v1341, %v1333
  %v1622 = vpack.c.b16 %v1342, %v1334
  %v1623 = vpack.c.b16 %v1343, %v1335
  %v1624 = vpack.c.b16 %v1352, %v1344
  %v1625 = vpack.c.b16 %v1353, %v1345
  %v1626 = vpack.c.b16 %v1354, %v1346
  %v1627 = vpack.c.b16 %v1355, %v1347
  %v1628 = vpack.c.b16 %v1356, %v1348
  %v1629 = vpack.c.b16 %v1357, %v1349
  %v1630 = vpack.c.b16 %v1358, %v1350
  %v1631 = vpack.c.b16 %v1359, %v1351
  %v1632 = vpack.c.b16 %v1368, %v1360
  %v1633 = vpack.c.b16 %v1369, %v1361
  %v1634 = vpack.c.b16 %v1370, %v1362
  %v1635 = vpack.c.b16 %v1371, %v1363
  %v1636 = vpack.c.b16 %v1372, %v1364
  %v1637 = vpack.c.b16 %v1373, %v1365
  %v1638 = vpack.c.b16 %v1374, %v1366
  %v1639 = vpack.c.b16 %v1375, %v1367
  %v1640 = vpack.c.b16 %v1384, %v1376
  %v1641 = vpack.c.b16 %v1385, %v1377
  %v1642 = vpack.c.b16 %v1386, %v1378
  %v1643 = vpack.c.b16 %v1387, %v1379
  %v1644 = vpack.c.b16 %v1388, %v1380
  %v1645 = vpack.c.b16 %v1389, %v1381
  %v1646 = vpack.c.b16 %v1390, %v1382
  %v1647 = vpack.c.b16 %v1391, %v1383
  %v1648 = vpack.c.b16 %v1392, %v1392
  %v1649 = vpack.c.b16 %v1393, %v1393
  %v1650 = vpack.c.b16 %v1394, %v1394
  %v1651 = vpack.c.b16 %v1395, %v1395
  %v1652 = vpack.c.b16 %v1396, %v1396
  %v1653 = vpack.c.b16 %v1397, %v1397
  %v1654 = vpack.c.b16 %v1398, %v1398
  %v1655 = vpack.c.b16 %v1399, %v1399
  %vm1904 = vcmask 949248
  %v1906 = vsel %vm1904, %v349, 0
  %vm1908 = vcmask 1041408
  %v1910 = vsel %vm1908, %v1648, 0
  %v1913 = vsel %vm1908, %v1649, 0
  %v1916 = vsel %vm1908, %v1650, 0
  %v1919 = vsel %vm1908, %v1651, 0
  %v1922 = vsel %vm1908, %v1652, 0
  %v1925 = vsel %vm1908, %v1653, 0
  %v1928 = vsel %vm1908, %v1654, 0
  %v1931 = vsel %vm1908, %v1655, 0
  %1933 = vmatprep.subr.bf16.mxu0 %v1401
  %1934 = vmatpush1.bf16.msra.mxu0 %v1400
  %1935 = vmatprep.subr.bf16.mxu0 %v1409
  %1936 = vmatpush1.bf16.msra.mxu0 %v1408
  %1937 = vmatprep.subr.bf16.mxu0 %v1417
  %1938 = vmatpush1.bf16.msra.mxu0 %v1416
  %1939 = vmatprep.subr.bf16.mxu0 %v1425
  %1940 = vmatpush1.bf16.msra.mxu0 %v1424
  %1941 = vmatprep.subr.bf16.mxu0 %v1433
  %1942 = vmatpush1.bf16.msra.mxu0 %v1432
  %1943 = vmatprep.subr.bf16.mxu0 %v1441
  %1944 = vmatpush1.bf16.msra.mxu0 %v1440
  %1945 = vmatprep.subr.bf16.mxu0 %v1449
  %1946 = vmatpush1.bf16.msra.mxu0 %v1448
  %1947 = vmatprep.subr.bf16.mxu0 %v1457
  %1948 = vmatpush1.bf16.msra.mxu0 %v1456
  %1949 = vmatprep.subr.bf16.mxu0 %v1465
  %1950 = vmatpush1.bf16.msra.mxu0 %v1464
  %1951 = vmatprep.subr.bf16.mxu0 %v1473
  %1952 = vmatpush1.bf16.msra.mxu0 %v1472
  %1953 = vmatprep.subr.bf16.mxu0 %v1481
  %1954 = vmatpush1.bf16.msra.mxu0 %v1480
  %1955 = vmatprep.subr.bf16.mxu0 %v1489
  %1956 = vmatpush1.bf16.msra.mxu0 %v1488
  %1957 = vmatprep.subr.bf16.mxu0 %v1497
  %1958 = vmatpush1.bf16.msra.mxu0 %v1496
  %1959 = vmatprep.subr.bf16.mxu0 %v1505
  %1960 = vmatpush1.bf16.msra.mxu0 %v1504
  %1961 = vmatprep.subr.bf16.mxu0 %v1513
  %1962 = vmatpush1.bf16.msra.mxu0 %v1512
  %1963 = vmatprep.subr.bf16.mxu0 %v1521
  %1964 = vmatpush1.bf16.msra.mxu0 %v1520
  %1965 = vmatprep.mubr.bf16.mxu0 %v347
  %1966 = vmatmul.mubr.bf16.gmra.mrb[0].mxu0 %v346
  %v1967 = vpop.f32.mrb[0].mxu0
  %v1968 = vadd.f32 %v607, %v1967
  %v1969 = vpop.f32.mrb[0].mxu0
  %v1970 = vadd.f32 %v611, %v1969
  %v1971 = vpop.f32.mrb[0].mxu0
  %v1972 = vadd.f32 %v607, %v1971
  %v1973 = vpop.f32.mrb[0].mxu0
  %v1974 = vadd.f32 %v611, %v1973
  %1975 = vdwg.mxu0
  %1976 = vmatprep.subr.bf16.mxu0 %v1529
  %1977 = vmatpush1.bf16.msra.mxu0 %v1528
  %1978 = vmatprep.subr.bf16.mxu0 %v1537
  %1979 = vmatpush1.bf16.msra.mxu0 %v1536
  %1980 = vmatprep.subr.bf16.mxu0 %v1545
  %1981 = vmatpush1.bf16.msra.mxu0 %v1544
  %1982 = vmatprep.subr.bf16.mxu0 %v1553
  %1983 = vmatpush1.bf16.msra.mxu0 %v1552
  %1984 = vmatprep.subr.bf16.mxu0 %v1561
  %1985 = vmatpush1.bf16.msra.mxu0 %v1560
  %1986 = vmatprep.subr.bf16.mxu0 %v1569
  %1987 = vmatpush1.bf16.msra.mxu0 %v1568
  %1988 = vmatprep.subr.bf16.mxu0 %v1577
  %1989 = vmatpush1.bf16.msra.mxu0 %v1576
  %1990 = vmatprep.subr.bf16.mxu0 %v1585
  %1991 = vmatpush1.bf16.msra.mxu0 %v1584
  %1992 = vmatprep.subr.bf16.mxu0 %v1593
  %1993 = vmatpush1.bf16.msra.mxu0 %v1592
  %1994 = vmatprep.subr.bf16.mxu0 %v1601
  %1995 = vmatpush1.bf16.msra.mxu0 %v1600
  %1996 = vmatprep.subr.bf16.mxu0 %v1609
  %1997 = vmatpush1.bf16.msra.mxu0 %v1608
  %1998 = vmatprep.subr.bf16.mxu0 %v1617
  %1999 = vmatpush1.bf16.msra.mxu0 %v1616
  %2000 = vmatprep.subr.bf16.mxu0 %v1625
  %2001 = vmatpush1.bf16.msra.mxu0 %v1624
  %2002 = vmatprep.subr.bf16.mxu0 %v1633
  %2003 = vmatpush1.bf16.msra.mxu0 %v1632
  %2004 = vmatprep.subr.bf16.mxu0 %v1641
  %2005 = vmatpush1.bf16.msra.mxu0 %v1640
  %2006 = vmatprep.subr.bf16.mxu0 %v1913
  %2007 = vmatpush1.bf16.msra.mxu0 %v1910
  %2008 = vmatprep.mubr.bf16.mxu0 %v1906
  %2009 = vmatmul.mubr.bf16.gmra.mrb[0].mxu0 %v348
  %v2010 = vpop.f32.mrb[0].mxu0
  %v2011 = vadd.f32 %v1968, %v2010
  %v2012 = vpop.f32.mrb[0].mxu0
  %v2013 = vadd.f32 %v1970, %v2012
  %v2014 = vpop.f32.mrb[0].mxu0
  %v2015 = vadd.f32 %v1972, %v2014
  %v2016 = vpop.f32.mrb[0].mxu0
  %v2017 = vadd.f32 %v1974, %v2016
  %2018 = vdwg.mxu0
  %2019 = vmatprep.subr.bf16.mxu0 %v1403
  %2020 = vmatpush1.bf16.msra.mxu0 %v1402
  %2021 = vmatprep.subr.bf16.mxu0 %v1411
  %2022 = vmatpush1.bf16.msra.mxu0 %v1410
  %2023 = vmatprep.subr.bf16.mxu0 %v1419
  %2024 = vmatpush1.bf16.msra.mxu0 %v1418
  %2025 = vmatprep.subr.bf16.mxu0 %v1427
  %2026 = vmatpush1.bf16.msra.mxu0 %v1426
  %2027 = vmatprep.subr.bf16.mxu0 %v1435
  %2028 = vmatpush1.bf16.msra.mxu0 %v1434
  %2029 = vmatprep.subr.bf16.mxu0 %v1443
  %2030 = vmatpush1.bf16.msra.mxu0 %v1442
  %2031 = vmatprep.subr.bf16.mxu0 %v1451
  %2032 = vmatpush1.bf16.msra.mxu0 %v1450
  %2033 = vmatprep.subr.bf16.mxu0 %v1459
  %2034 = vmatpush1.bf16.msra.mxu0 %v1458
  %2035 = vmatprep.subr.bf16.mxu0 %v1467
  %2036 = vmatpush1.bf16.msra.mxu0 %v1466
  %2037 = vmatprep.subr.bf16.mxu0 %v1475
  %2038 = vmatpush1.bf16.msra.mxu0 %v1474
  %2039 = vmatprep.subr.bf16.mxu0 %v1483
  %2040 = vmatpush1.bf16.msra.mxu0 %v1482
  %2041 = vmatprep.subr.bf16.mxu0 %v1491
  %2042 = vmatpush1.bf16.msra.mxu0 %v1490
  %2043 = vmatprep.subr.bf16.mxu0 %v1499
  %2044 = vmatpush1.bf16.msra.mxu0 %v1498
  %2045 = vmatprep.subr.bf16.mxu0 %v1507
  %2046 = vmatpush1.bf16.msra.mxu0 %v1506
  %2047 = vmatprep.subr.bf16.mxu0 %v1515
  %2048 = vmatpush1.bf16.msra.mxu0 %v1514
  %2049 = vmatprep.subr.bf16.mxu0 %v1523
  %2050 = vmatpush1.bf16.msra.mxu0 %v1522
  %2051 = vmatprep.mubr.bf16.mxu0 %v347
  %2052 = vmatmul.mubr.bf16.gmra.mrb[0].mxu0 %v346
  %v2053 = vpop.f32.mrb[0].mxu0
  %v2054 = vadd.f32 %v615, %v2053
  %v2055 = vpop.f32.mrb[0].mxu0
  %v2056 = vadd.f32 %v619, %v2055
  %v2057 = vpop.f32.mrb[0].mxu0
  %v2058 = vadd.f32 %v615, %v2057
  %v2059 = vpop.f32.mrb[0].mxu0
  %v2060 = vadd.f32 %v619, %v2059
  %2061 = vdwg.mxu0
  %2062 = vmatprep.subr.bf16.mxu0 %v1531
  %2063 = vmatpush1.bf16.msra.mxu0 %v1530
  %2064 = vmatprep.subr.bf16.mxu0 %v1539
  %2065 = vmatpush1.bf16.msra.mxu0 %v1538
  %2066 = vmatprep.subr.bf16.mxu0 %v1547
  %2067 = vmatpush1.bf16.msra.mxu0 %v1546
  %2068 = vmatprep.subr.bf16.mxu0 %v1555
  %2069 = vmatpush1.bf16.msra.mxu0 %v1554
  %2070 = vmatprep.subr.bf16.mxu0 %v1563
  %2071 = vmatpush1.bf16.msra.mxu0 %v1562
  %2072 = vmatprep.subr.bf16.mxu0 %v1571
  %2073 = vmatpush1.bf16.msra.mxu0 %v1570
  %2074 = vmatprep.subr.bf16.mxu0 %v1579
  %2075 = vmatpush1.bf16.msra.mxu0 %v1578
  %2076 = vmatprep.subr.bf16.mxu0 %v1587
  %2077 = vmatpush1.bf16.msra.mxu0 %v1586
  %2078 = vmatprep.subr.bf16.mxu0 %v1595
  %2079 = vmatpush1.bf16.msra.mxu0 %v1594
  %2080 = vmatprep.subr.bf16.mxu0 %v1603
  %2081 = vmatpush1.bf16.msra.mxu0 %v1602
  %2082 = vmatprep.subr.bf16.mxu0 %v1611
  %2083 = vmatpush1.bf16.msra.mxu0 %v1610
  %2084 = vmatprep.subr.bf16.mxu0 %v1619
  %2085 = vmatpush1.bf16.msra.mxu0 %v1618
  %2086 = vmatprep.subr.bf16.mxu0 %v1627
  %2087 = vmatpush1.bf16.msra.mxu0 %v1626
  %2088 = vmatprep.subr.bf16.mxu0 %v1635
  %2089 = vmatpush1.bf16.msra.mxu0 %v1634
  %2090 = vmatprep.subr.bf16.mxu0 %v1643
  %2091 = vmatpush1.bf16.msra.mxu0 %v1642
  %2092 = vmatprep.subr.bf16.mxu0 %v1919
  %2093 = vmatpush1.bf16.msra.mxu0 %v1916
  %2094 = vmatprep.mubr.bf16.mxu0 %v1906
  %2095 = vmatmul.mubr.bf16.gmra.mrb[0].mxu0 %v348
  %v2096 = vpop.f32.mrb[0].mxu0
  %v2097 = vadd.f32 %v2054, %v2096
  %v2098 = vpop.f32.mrb[0].mxu0
  %v2099 = vadd.f32 %v2056, %v2098
  %v2100 = vpop.f32.mrb[0].mxu0
  %v2101 = vadd.f32 %v2058, %v2100
  %v2102 = vpop.f32.mrb[0].mxu0
  %v2103 = vadd.f32 %v2060, %v2102
  %2104 = vdwg.mxu0
  %2105 = vmatprep.subr.bf16.mxu0 %v1405
  %2106 = vmatpush1.bf16.msra.mxu0 %v1404
  %2107 = vmatprep.subr.bf16.mxu0 %v1413
  %2108 = vmatpush1.bf16.msra.mxu0 %v1412
  %2109 = vmatprep.subr.bf16.mxu0 %v1421
  %2110 = vmatpush1.bf16.msra.mxu0 %v1420
  %2111 = vmatprep.subr.bf16.mxu0 %v1429
  %2112 = vmatpush1.bf16.msra.mxu0 %v1428
  %2113 = vmatprep.subr.bf16.mxu0 %v1437
  %2114 = vmatpush1.bf16.msra.mxu0 %v1436
  %2115 = vmatprep.subr.bf16.mxu0 %v1445
  %2116 = vmatpush1.bf16.msra.mxu0 %v1444
  %2117 = vmatprep.subr.bf16.mxu0 %v1453
  %2118 = vmatpush1.bf16.msra.mxu0 %v1452
  %2119 = vmatprep.subr.bf16.mxu0 %v1461
  %2120 = vmatpush1.bf16.msra.mxu0 %v1460
  %2121 = vmatprep.subr.bf16.mxu0 %v1469
  %2122 = vmatpush1.bf16.msra.mxu0 %v1468
  %2123 = vmatprep.subr.bf16.mxu0 %v1477
  %2124 = vmatpush1.bf16.msra.mxu0 %v1476
  %2125 = vmatprep.subr.bf16.mxu0 %v1485
  %2126 = vmatpush1.bf16.msra.mxu0 %v1484
  %2127 = vmatprep.subr.bf16.mxu0 %v1493
  %2128 = vmatpush1.bf16.msra.mxu0 %v1492
  %2129 = vmatprep.subr.bf16.mxu0 %v1501
  %2130 = vmatpush1.bf16.msra.mxu0 %v1500
  %2131 = vmatprep.subr.bf16.mxu0 %v1509
  %2132 = vmatpush1.bf16.msra.mxu0 %v1508
  %2133 = vmatprep.subr.bf16.mxu0 %v1517
  %2134 = vmatpush1.bf16.msra.mxu0 %v1516
  %2135 = vmatprep.subr.bf16.mxu0 %v1525
  %2136 = vmatpush1.bf16.msra.mxu0 %v1524
  %2137 = vmatprep.mubr.bf16.mxu0 %v347
  %2138 = vmatmul.mubr.bf16.gmra.mrb[0].mxu0 %v346
  %v2139 = vpop.f32.mrb[0].mxu0
  %v2140 = vadd.f32 %v623, %v2139
  %v2141 = vpop.f32.mrb[0].mxu0
  %v2142 = vadd.f32 %v627, %v2141
  %v2143 = vpop.f32.mrb[0].mxu0
  %v2144 = vadd.f32 %v623, %v2143
  %v2145 = vpop.f32.mrb[0].mxu0
  %v2146 = vadd.f32 %v627, %v2145
  %2147 = vdwg.mxu0
  %2148 = vmatprep.subr.bf16.mxu0 %v1533
  %2149 = vmatpush1.bf16.msra.mxu0 %v1532
  %2150 = vmatprep.subr.bf16.mxu0 %v1541
  %2151 = vmatpush1.bf16.msra.mxu0 %v1540
  %2152 = vmatprep.subr.bf16.mxu0 %v1549
  %2153 = vmatpush1.bf16.msra.mxu0 %v1548
  %2154 = vmatprep.subr.bf16.mxu0 %v1557
  %2155 = vmatpush1.bf16.msra.mxu0 %v1556
  %2156 = vmatprep.subr.bf16.mxu0 %v1565
  %2157 = vmatpush1.bf16.msra.mxu0 %v1564
  %2158 = vmatprep.subr.bf16.mxu0 %v1573
  %2159 = vmatpush1.bf16.msra.mxu0 %v1572
  %2160 = vmatprep.subr.bf16.mxu0 %v1581
  %2161 = vmatpush1.bf16.msra.mxu0 %v1580
  %2162 = vmatprep.subr.bf16.mxu0 %v1589
  %2163 = vmatpush1.bf16.msra.mxu0 %v1588
  %2164 = vmatprep.subr.bf16.mxu0 %v1597
  %2165 = vmatpush1.bf16.msra.mxu0 %v1596
  %2166 = vmatprep.subr.bf16.mxu0 %v1605
  %2167 = vmatpush1.bf16.msra.mxu0 %v1604
  %2168 = vmatprep.subr.bf16.mxu0 %v1613
  %2169 = vmatpush1.bf16.msra.mxu0 %v1612
  %2170 = vmatprep.subr.bf16.mxu0 %v1621
  %2171 = vmatpush1.bf16.msra.mxu0 %v1620
  %2172 = vmatprep.subr.bf16.mxu0 %v1629
  %2173 = vmatpush1.bf16.msra.mxu0 %v1628
  %2174 = vmatprep.subr.bf16.mxu0 %v1637
  %2175 = vmatpush1.bf16.msra.mxu0 %v1636
  %2176 = vmatprep.subr.bf16.mxu0 %v1645
  %2177 = vmatpush1.bf16.msra.mxu0 %v1644
  %2178 = vmatprep.subr.bf16.mxu0 %v1925
  %2179 = vmatpush1.bf16.msra.mxu0 %v1922
  %2180 = vmatprep.mubr.bf16.mxu0 %v1906
  %2181 = vmatmul.mubr.bf16.gmra.mrb[0].mxu0 %v348
  %v2182 = vpop.f32.mrb[0].mxu0
  %v2183 = vadd.f32 %v2140, %v2182
  %v2184 = vpop.f32.mrb[0].mxu0
  %v2185 = vadd.f32 %v2142, %v2184
  %v2186 = vpop.f32.mrb[0].mxu0
  %v2187 = vadd.f32 %v2144, %v2186
  %v2188 = vpop.f32.mrb[0].mxu0
  %v2189 = vadd.f32 %v2146, %v2188
  %2190 = vdwg.mxu0
  %2191 = vmatprep.subr.bf16.mxu0 %v1407
  %2192 = vmatpush1.bf16.msra.mxu0 %v1406
  %2193 = vmatprep.subr.bf16.mxu0 %v1415
  %2194 = vmatpush1.bf16.msra.mxu0 %v1414
  %2195 = vmatprep.subr.bf16.mxu0 %v1423
  %2196 = vmatpush1.bf16.msra.mxu0 %v1422
  %2197 = vmatprep.subr.bf16.mxu0 %v1431
  %2198 = vmatpush1.bf16.msra.mxu0 %v1430
  %2199 = vmatprep.subr.bf16.mxu0 %v1439
  %2200 = vmatpush1.bf16.msra.mxu0 %v1438
  %2201 = vmatprep.subr.bf16.mxu0 %v1447
  %2202 = vmatpush1.bf16.msra.mxu0 %v1446
  %2203 = vmatprep.subr.bf16.mxu0 %v1455
  %2204 = vmatpush1.bf16.msra.mxu0 %v1454
  %2205 = vmatprep.subr.bf16.mxu0 %v1463
  %2206 = vmatpush1.bf16.msra.mxu0 %v1462
  %2207 = vmatprep.subr.bf16.mxu0 %v1471
  %2208 = vmatpush1.bf16.msra.mxu0 %v1470
  %2209 = vmatprep.subr.bf16.mxu0 %v1479
  %2210 = vmatpush1.bf16.msra.mxu0 %v1478
  %2211 = vmatprep.subr.bf16.mxu0 %v1487
  %2212 = vmatpush1.bf16.msra.mxu0 %v1486
  %2213 = vmatprep.subr.bf16.mxu0 %v1495
  %2214 = vmatpush1.bf16.msra.mxu0 %v1494
  %2215 = vmatprep.subr.bf16.mxu0 %v1503
  %2216 = vmatpush1.bf16.msra.mxu0 %v1502
  %2217 = vmatprep.subr.bf16.mxu0 %v1511
  %2218 = vmatpush1.bf16.msra.mxu0 %v1510
  %2219 = vmatprep.subr.bf16.mxu0 %v1519
  %2220 = vmatpush1.bf16.msra.mxu0 %v1518
  %2221 = vmatprep.subr.bf16.mxu0 %v1527
  %2222 = vmatpush1.bf16.msra.mxu0 %v1526
  %2223 = vmatprep.mubr.bf16.mxu0 %v347
  %2224 = vmatmul.mubr.bf16.gmra.mrb[0].mxu0 %v346
  %v2225 = vpop.f32.mrb[0].mxu0
  %v2226 = vadd.f32 %v631, %v2225
  %v2227 = vpop.f32.mrb[0].mxu0
  %v2228 = vadd.f32 %v635, %v2227
  %v2229 = vpop.f32.mrb[0].mxu0
  %v2230 = vadd.f32 %v631, %v2229
  %v2231 = vpop.f32.mrb[0].mxu0
  %v2232 = vadd.f32 %v635, %v2231
  %2233 = vdwg.mxu0
  %2234 = vmatprep.subr.bf16.mxu0 %v1535
  %2235 = vmatpush1.bf16.msra.mxu0 %v1534
  %2236 = vmatprep.subr.bf16.mxu0 %v1543
  %2237 = vmatpush1.bf16.msra.mxu0 %v1542
  %2238 = vmatprep.subr.bf16.mxu0 %v1551
  %2239 = vmatpush1.bf16.msra.mxu0 %v1550
  %2240 = vmatprep.subr.bf16.mxu0 %v1559
  %2241 = vmatpush1.bf16.msra.mxu0 %v1558
  %2242 = vmatprep.subr.bf16.mxu0 %v1567
  %2243 = vmatpush1.bf16.msra.mxu0 %v1566
  %2244 = vmatprep.subr.bf16.mxu0 %v1575
  %2245 = vmatpush1.bf16.msra.mxu0 %v1574
  %2246 = vmatprep.subr.bf16.mxu0 %v1583
  %2247 = vmatpush1.bf16.msra.mxu0 %v1582
  %2248 = vmatprep.subr.bf16.mxu0 %v1591
  %2249 = vmatpush1.bf16.msra.mxu0 %v1590
  %2250 = vmatprep.subr.bf16.mxu0 %v1599
  %2251 = vmatpush1.bf16.msra.mxu0 %v1598
  %2252 = vmatprep.subr.bf16.mxu0 %v1607
  %2253 = vmatpush1.bf16.msra.mxu0 %v1606
  %2254 = vmatprep.subr.bf16.mxu0 %v1615
  %2255 = vmatpush1.bf16.msra.mxu0 %v1614
  %2256 = vmatprep.subr.bf16.mxu0 %v1623
  %2257 = vmatpush1.bf16.msra.mxu0 %v1622
  %2258 = vmatprep.subr.bf16.mxu0 %v1631
  %2259 = vmatpush1.bf16.msra.mxu0 %v1630
  %2260 = vmatprep.subr.bf16.mxu0 %v1639
  %2261 = vmatpush1.bf16.msra.mxu0 %v1638
  %2262 = vmatprep.subr.bf16.mxu0 %v1647
  %2263 = vmatpush1.bf16.msra.mxu0 %v1646
  %2264 = vmatprep.subr.bf16.mxu0 %v1931
  %2265 = vmatpush1.bf16.msra.mxu0 %v1928
  %2266 = vmatprep.mubr.bf16.mxu0 %v1906
  %2267 = vmatmul.mubr.bf16.gmra.mrb[0].mxu0 %v348
  %v2268 = vpop.f32.mrb[0].mxu0
  %v2269 = vadd.f32 %v2226, %v2268
  %v2270 = vpop.f32.mrb[0].mxu0
  %v2271 = vadd.f32 %v2228, %v2270
  %v2272 = vpop.f32.mrb[0].mxu0
  %v2273 = vadd.f32 %v2230, %v2272
  %v2274 = vpop.f32.mrb[0].mxu0
  %v2275 = vadd.f32 %v2232, %v2274
  %2276 = vdwg.mxu0
  %v2277 = vtanh.pop %v2011
  %v2278 = vtanh.pop %v2013
  %v2279 = vtanh.pop %v2097
  %v2280 = vtanh.pop %v2099
  %v2281 = vtanh.pop %v2183
  %v2282 = vtanh.pop %v2185
  %v2283 = vtanh.pop %v2269
  %v2284 = vtanh.pop %v2271
  %v2285 = vtanh.pop %v2015
  %v2286 = vtanh.pop %v2017
  %v2287 = vtanh.pop %v2101
  %v2288 = vtanh.pop %v2103
  %v2289 = vtanh.pop %v2187
  %v2290 = vtanh.pop %v2189
  %v2291 = vtanh.pop %v2273
  %v2292 = vtanh.pop %v2275
  %v2293 = vpack.c.bf16 %v2285, %v2277
  %v2294 = vpack.c.bf16 %v2286, %v2278
  %v2295 = vpack.c.bf16 %v2287, %v2279
  %v2296 = vpack.c.bf16 %v2288, %v2280
  %v2297 = vpack.c.bf16 %v2289, %v2281
  %v2298 = vpack.c.bf16 %v2290, %v2282
  %v2299 = vpack.c.bf16 %v2291, %v2283
  %v2300 = vpack.c.bf16 %v2292, %v2284
  %v2301 = vld [vmem:[%s5] sm:$0xf]
  %v2302 = vld [vmem:[%s5 + $0x4] sm:$0xf]
  %v2303 = vld [vmem:[%s5 + $0x8] sm:$0xf]
  %v2304 = vld [vmem:[%s5 + $0xc] sm:$0xf]
  %v2305 = vld [vmem:[%s5 + $0x10] sm:$0xf]
  %v2306 = vld [vmem:[%s5 + $0x14] sm:$0xf]
  %v2307 = vld [vmem:[%s5 + $0x18] sm:$0xf]
  %v2308 = vld [vmem:[%s5 + $0x1c] sm:$0xf]
  %v2309 = vld [vmem:[%s5 + $0x20] sm:$0xf]
  %v2310 = vld [vmem:[%s5 + $0x24] sm:$0xf]
  %v2311 = vld [vmem:[%s5 + $0x28] sm:$0xf]
  %v2312 = vld [vmem:[%s5 + $0x2c] sm:$0xf]
  %v2313 = vld [vmem:[%s5 + $0x30] sm:$0xf]
  %v2314 = vld [vmem:[%s5 + $0x34] sm:$0xf]
  %v2315 = vld [vmem:[%s5 + $0x38] sm:$0xf]
  %v2316 = vld [vmem:[%s5 + $0x3c] sm:$0xf]
  %v2317 = vld [vmem:[%s5 + $0x40] sm:$0xf]
  %v2318 = vld [vmem:[%s5 + $0x44] sm:$0xf]
  %v2319 = vld [vmem:[%s5 + $0x48] sm:$0xf]
  %v2320 = vld [vmem:[%s5 + $0x4c] sm:$0xf]
  %v2321 = vld [vmem:[%s5 + $0x50] sm:$0xf]
  %v2322 = vld [vmem:[%s5 + $0x54] sm:$0xf]
  %v2323 = vld [vmem:[%s5 + $0x58] sm:$0xf]
  %v2324 = vld [vmem:[%s5 + $0x5c] sm:$0xf]
  %v2325 = vld [vmem:[%s5 + $0x60] sm:$0xf]
  %v2326 = vld [vmem:[%s5 + $0x64] sm:$0xf]
  %v2327 = vld [vmem:[%s5 + $0x68] sm:$0xf]
  %v2328 = vld [vmem:[%s5 + $0x6c] sm:$0xf]
  %v2329 = vld [vmem:[%s5 + $0x70] sm:$0xf]
  %v2330 = vld [vmem:[%s5 + $0x74] sm:$0xf]
  %v2331 = vld [vmem:[%s5 + $0x78] sm:$0xf]
  %v2332 = vld [vmem:[%s5 + $0x7c] sm:$0xf]
  %v2333 = vld [vmem:[%s5 + $0x80] sm:$0xf]
  %v2334 = vld [vmem:[%s5 + $0x84] sm:$0xf]
  %v2335 = vld [vmem:[%s5 + $0x88] sm:$0xf]
  %v2336 = vld [vmem:[%s5 + $0x8c] sm:$0xf]
  %v2337 = vld [vmem:[%s5 + $0x90] sm:$0xf]
  %v2338 = vld [vmem:[%s5 + $0x94] sm:$0xf]
  %v2339 = vld [vmem:[%s5 + $0x98] sm:$0xf]
  %v2340 = vld [vmem:[%s5 + $0x9c] sm:$0xf]
  %v2341 = vld [vmem:[%s5 + $0xa0] sm:$0xf]
  %v2342 = vld [vmem:[%s5 + $0xa4] sm:$0xf]
  %v2343 = vld [vmem:[%s5 + $0xa8] sm:$0xf]
  %v2344 = vld [vmem:[%s5 + $0xac] sm:$0xf]
  %v2345 = vld [vmem:[%s5 + $0xb0] sm:$0xf]
  %v2346 = vld [vmem:[%s5 + $0xb4] sm:$0xf]
  %v2347 = vld [vmem:[%s5 + $0xb8] sm:$0xf]
  %v2348 = vld [vmem:[%s5 + $0xbc] sm:$0xf]
  %v2349 = vld [vmem:[%s5 + $0xc0] sm:$0xf]
  %v2350 = vld [vmem:[%s5 + $0xc4] sm:$0xf]
  %v2351 = vld [vmem:[%s5 + $0xc8] sm:$0xf]
  %v2352 = vld [vmem:[%s5 + $0xcc] sm:$0xf]
  %v2353 = vld [vmem:[%s5 + $0xd0] sm:$0xf]
  %v2354 = vld [vmem:[%s5 + $0xd4] sm:$0xf]
  %v2355 = vld [vmem:[%s5 + $0xd8] sm:$0xf]
  %v2356 = vld [vmem:[%s5 + $0xdc] sm:$0xf]
  %v2357 = vld [vmem:[%s5 + $0xe0] sm:$0xf]
  %v2358 = vld [vmem:[%s5 + $0xe4] sm:$0xf]
  %v2359 = vld [vmem:[%s5 + $0xe8] sm:$0xf]
  %v2360 = vld [vmem:[%s5 + $0xec] sm:$0xf]
  %v2361 = vld [vmem:[%s5 + $0xf0] sm:$0xf]
  %v2362 = vld [vmem:[%s5 + $0xf4] sm:$0xf]
  %v2363 = vld [vmem:[%s5 + $0xf8] sm:$0xf]
  %v2364 = vld [vmem:[%s5 + $0xfc] sm:$0xf]
  %v2365 = vld [vmem:[%s5 + $0x100] sm:$0xf]
  %v2366 = vld [vmem:[%s5 + $0x104] sm:$0xf]
  %v2367 = vld [vmem:[%s5 + $0x108] sm:$0xf]
  %v2368 = vld [vmem:[%s5 + $0x10c] sm:$0xf]
  %v2369 = vld [vmem:[%s5 + $0x110] sm:$0xf]
  %v2370 = vld [vmem:[%s5 + $0x114] sm:$0xf]
  %v2371 = vld [vmem:[%s5 + $0x118] sm:$0xf]
  %v2372 = vld [vmem:[%s5 + $0x11c] sm:$0xf]
  %v2373 = vld [vmem:[%s5 + $0x120] sm:$0xf]
  %v2374 = vld [vmem:[%s5 + $0x124] sm:$0xf]
  %v2375 = vld [vmem:[%s5 + $0x128] sm:$0xf]
  %v2376 = vld [vmem:[%s5 + $0x12c] sm:$0xf]
  %v2377 = vld [vmem:[%s5 + $0x130] sm:$0xf]
  %v2378 = vld [vmem:[%s5 + $0x134] sm:$0xf]
  %v2379 = vld [vmem:[%s5 + $0x138] sm:$0xf]
  %v2380 = vld [vmem:[%s5 + $0x13c] sm:$0xf]
  %v2381 = vld [vmem:[%s5 + $0x140] sm:$0xf]
  %v2382 = vld [vmem:[%s5 + $0x144] sm:$0xf]
  %v2383 = vld [vmem:[%s5 + $0x148] sm:$0xf]
  %v2384 = vld [vmem:[%s5 + $0x14c] sm:$0xf]
  %v2385 = vld [vmem:[%s5 + $0x150] sm:$0xf]
  %v2386 = vld [vmem:[%s5 + $0x154] sm:$0xf]
  %v2387 = vld [vmem:[%s5 + $0x158] sm:$0xf]
  %v2388 = vld [vmem:[%s5 + $0x15c] sm:$0xf]
  %v2389 = vld [vmem:[%s5 + $0x160] sm:$0xf]
  %v2390 = vld [vmem:[%s5 + $0x164] sm:$0xf]
  %v2391 = vld [vmem:[%s5 + $0x168] sm:$0xf]
  %v2392 = vld [vmem:[%s5 + $0x16c] sm:$0xf]
  %v2393 = vld [vmem:[%s5 + $0x170] sm:$0xf]
  %v2394 = vld [vmem:[%s5 + $0x174] sm:$0xf]
  %v2395 = vld [vmem:[%s5 + $0x178] sm:$0xf]
  %v2396 = vld [vmem:[%s5 + $0x17c] sm:$0xf]
  %v2397 = vld [vmem:[%s5 + $0x180] sm:$0xf]
  %v2398 = vld [vmem:[%s5 + $0x184] sm:$0xf]
  %v2399 = vld [vmem:[%s5 + $0x188] sm:$0xf]
  %v2400 = vld [vmem:[%s5 + $0x18c] sm:$0xf]
  %v2401 = vld [vmem:[%s5 + $0x190] sm:$0xf]
  %v2402 = vld [vmem:[%s5 + $0x194] sm:$0xf]
  %v2403 = vld [vmem:[%s5 + $0x198] sm:$0xf]
  %v2404 = vld [vmem:[%s5 + $0x19c] sm:$0xf]
  %v2405 = vld [vmem:[%s5 + $0x1a0] sm:$0xf]
  %v2406 = vld [vmem:[%s5 + $0x1a4] sm:$0xf]
  %v2407 = vld [vmem:[%s5 + $0x1a8] sm:$0xf]
  %v2408 = vld [vmem:[%s5 + $0x1ac] sm:$0xf]
  %v2409 = vld [vmem:[%s5 + $0x1b0] sm:$0xf]
  %v2410 = vld [vmem:[%s5 + $0x1b4] sm:$0xf]
  %v2411 = vld [vmem:[%s5 + $0x1b8] sm:$0xf]
  %v2412 = vld [vmem:[%s5 + $0x1bc] sm:$0xf]
  %v2413 = vld [vmem:[%s5 + $0x1c0] sm:$0xf]
  %v2414 = vld [vmem:[%s5 + $0x1c4] sm:$0xf]
  %v2415 = vld [vmem:[%s5 + $0x1c8] sm:$0xf]
  %v2416 = vld [vmem:[%s5 + $0x1cc] sm:$0xf]
  %v2417 = vld [vmem:[%s5 + $0x1d0] sm:$0xf]
  %v2418 = vld [vmem:[%s5 + $0x1d4] sm:$0xf]
  %v2419 = vld [vmem:[%s5 + $0x1d8] sm:$0xf]
  %v2420 = vld [vmem:[%s5 + $0x1dc] sm:$0xf]
  %v2421 = vld [vmem:[%s5 + $0x1e0] sm:$0xf]
  %v2422 = vld [vmem:[%s5 + $0x1e4] sm:$0xf]
  %v2423 = vld [vmem:[%s5 + $0x1e8] sm:$0xf]
  %v2424 = vld [vmem:[%s5 + $0x1ec] sm:$0xf]
  %v2425 = vld [vmem:[%s5 + $0x1f0] sm:$0xf]
  %v2426 = vld [vmem:[%s6] sm:$0x1]
  %v2428 = vlaneseq
  %v2429 = vshrl.u32 %v2428, 7
  %v2430 = vsub.s32 0, %v2429
  %v2431 = vrot.slane %v2426, %v2430
  %v2558 = vunpack.c.l.b16 %v2301
  %v2559 = vunpack.c.l.b16 %v2302
  %v2560 = vunpack.c.l.b16 %v2303
  %v2561 = vunpack.c.l.b16 %v2304
  %v2562 = vunpack.c.l.b16 %v2305
  %v2563 = vunpack.c.l.b16 %v2306
  %v2564 = vunpack.c.l.b16 %v2307
  %v2565 = vunpack.c.l.b16 %v2308
  %v2566 = vunpack.c.l.b16 %v2309
  %v2567 = vunpack.c.l.b16 %v2310
  %v2568 = vunpack.c.l.b16 %v2311
  %v2569 = vunpack.c.l.b16 %v2312
  %v2570 = vunpack.c.l.b16 %v2313
  %v2571 = vunpack.c.l.b16 %v2314
  %v2572 = vunpack.c.l.b16 %v2315
  %v2573 = vunpack.c.l.b16 %v2316
  %v2574 = vunpack.c.l.b16 %v2317
  %v2575 = vunpack.c.l.b16 %v2318
  %v2576 = vunpack.c.l.b16 %v2319
  %v2577 = vunpack.c.l.b16 %v2320
  %v2578 = vunpack.c.l.b16 %v2321
  %v2579 = vunpack.c.l.b16 %v2322
  %v2580 = vunpack.c.l.b16 %v2323
  %v2581 = vunpack.c.l.b16 %v2324
  %v2582 = vunpack.c.l.b16 %v2325
  %v2583 = vunpack.c.l.b16 %v2326
  %v2584 = vunpack.c.l.b16 %v2327
  %v2585 = vunpack.c.l.b16 %v2328
  %v2586 = vunpack.c.l.b16 %v2329
  %v2587 = vunpack.c.l.b16 %v2330
  %v2588 = vunpack.c.l.b16 %v2331
  %v2589 = vunpack.c.l.b16 %v2332
  %v2590 = vunpack.c.l.b16 %v2333
  %v2591 = vunpack.c.l.b16 %v2334
  %v2592 = vunpack.c.l.b16 %v2335
  %v2593 = vunpack.c.l.b16 %v2336
  %v2594 = vunpack.c.l.b16 %v2337
  %v2595 = vunpack.c.l.b16 %v2338
  %v2596 = vunpack.c.l.b16 %v2339
  %v2597 = vunpack.c.l.b16 %v2340
  %v2598 = vunpack.c.l.b16 %v2341
  %v2599 = vunpack.c.l.b16 %v2342
  %v2600 = vunpack.c.l.b16 %v2343
  %v2601 = vunpack.c.l.b16 %v2344
  %v2602 = vunpack.c.l.b16 %v2345
  %v2603 = vunpack.c.l.b16 %v2346
  %v2604 = vunpack.c.l.b16 %v2347
  %v2605 = vunpack.c.l.b16 %v2348
  %v2606 = vunpack.c.l.b16 %v2349
  %v2607 = vunpack.c.l.b16 %v2350
  %v2608 = vunpack.c.l.b16 %v2351
  %v2609 = vunpack.c.l.b16 %v2352
  %v2610 = vunpack.c.l.b16 %v2353
  %v2611 = vunpack.c.l.b16 %v2354
  %v2612 = vunpack.c.l.b16 %v2355
  %v2613 = vunpack.c.l.b16 %v2356
  %v2614 = vunpack.c.l.b16 %v2357
  %v2615 = vunpack.c.l.b16 %v2358
  %v2616 = vunpack.c.l.b16 %v2359
  %v2617 = vunpack.c.l.b16 %v2360
  %v2618 = vunpack.c.l.b16 %v2361
  %v2619 = vunpack.c.l.b16 %v2362
  %v2620 = vunpack.c.l.b16 %v2363
  %v2621 = vunpack.c.l.b16 %v2364
  %v2622 = vunpack.c.l.b16 %v2365
  %v2623 = vunpack.c.l.b16 %v2366
  %v2624 = vunpack.c.l.b16 %v2367
  %v2625 = vunpack.c.l.b16 %v2368
  %v2626 = vunpack.c.l.b16 %v2369
  %v2627 = vunpack.c.l.b16 %v2370
  %v2628 = vunpack.c.l.b16 %v2371
  %v2629 = vunpack.c.l.b16 %v2372
  %v2630 = vunpack.c.l.b16 %v2373
  %v2631 = vunpack.c.l.b16 %v2374
  %v2632 = vunpack.c.l.b16 %v2375
  %v2633 = vunpack.c.l.b16 %v2376
  %v2634 = vunpack.c.l.b16 %v2377
  %v2635 = vunpack.c.l.b16 %v2378
  %v2636 = vunpack.c.l.b16 %v2379
  %v2637 = vunpack.c.l.b16 %v2380
  %v2638 = vunpack.c.l.b16 %v2381
  %v2639 = vunpack.c.l.b16 %v2382
  %v2640 = vunpack.c.l.b16 %v2383
  %v2641 = vunpack.c.l.b16 %v2384
  %v2642 = vunpack.c.l.b16 %v2385
  %v2643 = vunpack.c.l.b16 %v2386
  %v2644 = vunpack.c.l.b16 %v2387
  %v2645 = vunpack.c.l.b16 %v2388
  %v2646 = vunpack.c.l.b16 %v2389
  %v2647 = vunpack.c.l.b16 %v2390
  %v2648 = vunpack.c.l.b16 %v2391
  %v2649 = vunpack.c.l.b16 %v2392
  %v2650 = vunpack.c.l.b16 %v2393
  %v2651 = vunpack.c.l.b16 %v2394
  %v2652 = vunpack.c.l.b16 %v2395
  %v2653 = vunpack.c.l.b16 %v2396
  %v2654 = vunpack.c.l.b16 %v2397
  %v2655 = vunpack.c.l.b16 %v2398
  %v2656 = vunpack.c.l.b16 %v2399
  %v2657 = vunpack.c.l.b16 %v2400
  %v2658 = vunpack.c.l.b16 %v2401
  %v2659 = vunpack.c.l.b16 %v2402
  %v2660 = vunpack.c.l.b16 %v2403
  %v2661 = vunpack.c.l.b16 %v2404
  %v2662 = vunpack.c.l.b16 %v2405
  %v2663 = vunpack.c.l.b16 %v2406
  %v2664 = vunpack.c.l.b16 %v2407
  %v2665 = vunpack.c.l.b16 %v2408
  %v2666 = vunpack.c.l.b16 %v2409
  %v2667 = vunpack.c.l.b16 %v2410
  %v2668 = vunpack.c.l.b16 %v2411
  %v2669 = vunpack.c.l.b16 %v2412
  %v2670 = vunpack.c.l.b16 %v2413
  %v2671 = vunpack.c.l.b16 %v2414
  %v2672 = vunpack.c.l.b16 %v2415
  %v2673 = vunpack.c.l.b16 %v2416
  %v2674 = vunpack.c.l.b16 %v2417
  %v2675 = vunpack.c.l.b16 %v2418
  %v2676 = vunpack.c.l.b16 %v2419
  %v2677 = vunpack.c.l.b16 %v2420
  %v2678 = vunpack.c.l.b16 %v2421
  %v2679 = vunpack.c.l.b16 %v2422
  %v2680 = vunpack.c.l.b16 %v2423
  %v2681 = vunpack.c.l.b16 %v2424
  %v2682 = vunpack.c.l.b16 %v2425
  %v2683 = vpack.c.b16 %v2559, %v2558
  %v2684 = vpack.c.b16 %v2561, %v2560
  %v2685 = vpack.c.b16 %v2563, %v2562
  %v2686 = vpack.c.b16 %v2565, %v2564
  %v2687 = vpack.c.b16 %v2567, %v2566
  %v2688 = vpack.c.b16 %v2569, %v2568
  %v2689 = vpack.c.b16 %v2571, %v2570
  %v2690 = vpack.c.b16 %v2573, %v2572
  %v2691 = vpack.c.b16 %v2575, %v2574
  %v2692 = vpack.c.b16 %v2577, %v2576
  %v2693 = vpack.c.b16 %v2579, %v2578
  %v2694 = vpack.c.b16 %v2581, %v2580
  %v2695 = vpack.c.b16 %v2583, %v2582
  %v2696 = vpack.c.b16 %v2585, %v2584
  %v2697 = vpack.c.b16 %v2587, %v2586
  %v2698 = vpack.c.b16 %v2589, %v2588
  %v2699 = vpack.c.b16 %v2591, %v2590
  %v2700 = vpack.c.b16 %v2593, %v2592
  %v2701 = vpack.c.b16 %v2595, %v2594
  %v2702 = vpack.c.b16 %v2597, %v2596
  %v2703 = vpack.c.b16 %v2599, %v2598
  %v2704 = vpack.c.b16 %v2601, %v2600
  %v2705 = vpack.c.b16 %v2603, %v2602
  %v2706 = vpack.c.b16 %v2605, %v2604
  %v2707 = vpack.c.b16 %v2607, %v2606
  %v2708 = vpack.c.b16 %v2609, %v2608
  %v2709 = vpack.c.b16 %v2611, %v2610
  %v2710 = vpack.c.b16 %v2613, %v2612
  %v2711 = vpack.c.b16 %v2615, %v2614
  %v2712 = vpack.c.b16 %v2617, %v2616
  %v2713 = vpack.c.b16 %v2619, %v2618
  %v2714 = vpack.c.b16 %v2621, %v2620
  %v2715 = vpack.c.b16 %v2623, %v2622
  %v2716 = vpack.c.b16 %v2625, %v2624
  %v2717 = vpack.c.b16 %v2627, %v2626
  %v2718 = vpack.c.b16 %v2629, %v2628
  %v2719 = vpack.c.b16 %v2631, %v2630
  %v2720 = vpack.c.b16 %v2633, %v2632
  %v2721 = vpack.c.b16 %v2635, %v2634
  %v2722 = vpack.c.b16 %v2637, %v2636
  %v2723 = vpack.c.b16 %v2639, %v2638
  %v2724 = vpack.c.b16 %v2641, %v2640
  %v2725 = vpack.c.b16 %v2643, %v2642
  %v2726 = vpack.c.b16 %v2645, %v2644
  %v2727 = vpack.c.b16 %v2647, %v2646
  %v2728 = vpack.c.b16 %v2649, %v2648
  %v2729 = vpack.c.b16 %v2651, %v2650
  %v2730 = vpack.c.b16 %v2653, %v2652
  %v2731 = vpack.c.b16 %v2655, %v2654
  %v2732 = vpack.c.b16 %v2657, %v2656
  %v2733 = vpack.c.b16 %v2659, %v2658
  %v2734 = vpack.c.b16 %v2661, %v2660
  %v2735 = vpack.c.b16 %v2663, %v2662
  %v2736 = vpack.c.b16 %v2665, %v2664
  %v2737 = vpack.c.b16 %v2667, %v2666
  %v2738 = vpack.c.b16 %v2669, %v2668
  %v2739 = vpack.c.b16 %v2671, %v2670
  %v2740 = vpack.c.b16 %v2673, %v2672
  %v2741 = vpack.c.b16 %v2675, %v2674
  %v2742 = vpack.c.b16 %v2677, %v2676
  %v2743 = vpack.c.b16 %v2679, %v2678
  %v2744 = vpack.c.b16 %v2681, %v2680
  %v2745 = vpack.c.b16 %v2682, %v2682
  %vm2808 = vcmask 850944
  %v2810 = vsel %vm2808, %v2300, 0
  %vm2812 = vcmask 1043456
  %v2814 = vsel %vm2812, %v2745, 0
  %2816 = vmatprep.subr.bf16.mxu0 0
  %2817 = vmatpush1.bf16.msra.mxu0 %v2683
  %2818 = vmatprep.subr.bf16.mxu0 0
  %2819 = vmatpush1.bf16.msra.mxu0 %v2684
  %2820 = vmatprep.subr.bf16.mxu0 0
  %2821 = vmatpush1.bf16.msra.mxu0 %v2685
  %2822 = vmatprep.subr.bf16.mxu0 0
  %2823 = vmatpush1.bf16.msra.mxu0 %v2686
  %2824 = vmatprep.subr.bf16.mxu0 0
  %2825 = vmatpush1.bf16.msra.mxu0 %v2687
  %2826 = vmatprep.subr.bf16.mxu0 0
  %2827 = vmatpush1.bf16.msra.mxu0 %v2688
  %2828 = vmatprep.subr.bf16.mxu0 0
  %2829 = vmatpush1.bf16.msra.mxu0 %v2689
  %2830 = vmatprep.subr.bf16.mxu0 0
  %2831 = vmatpush1.bf16.msra.mxu0 %v2690
  %2832 = vmatprep.subr.bf16.mxu0 0
  %2833 = vmatpush1.bf16.msra.mxu0 %v2691
  %2834 = vmatprep.subr.bf16.mxu0 0
  %2835 = vmatpush1.bf16.msra.mxu0 %v2692
  %2836 = vmatprep.subr.bf16.mxu0 0
  %2837 = vmatpush1.bf16.msra.mxu0 %v2693
  %2838 = vmatprep.subr.bf16.mxu0 0
  %2839 = vmatpush1.bf16.msra.mxu0 %v2694
  %2840 = vmatprep.subr.bf16.mxu0 0
  %2841 = vmatpush1.bf16.msra.mxu0 %v2695
  %2842 = vmatprep.subr.bf16.mxu0 0
  %2843 = vmatpush1.bf16.msra.mxu0 %v2696
  %2844 = vmatprep.subr.bf16.mxu0 0
  %2845 = vmatpush1.bf16.msra.mxu0 %v2697
  %2846 = vmatprep.subr.bf16.mxu0 0
  %2847 = vmatpush1.bf16.msra.mxu0 %v2698
  %2848 = vmatprep.mubr.bf16.mxu0 %v2294
  %2849 = vmatmul.mubr.bf16.gmra.mrb[0].mxu0 %v2293
  %v2850 = vpop.f32.mrb[0].mxu0
  %v2851 = vadd.f32 %v2431, %v2850
  %v2852 = vpop.f32.mrb[0].mxu0
  %v2853 = vpop.f32.mrb[0].mxu0
  %v2854 = vadd.f32 %v2431, %v2853
  %v2855 = vpop.f32.mrb[0].mxu0
  %2856 = vdwg.mxu0
  %2857 = vmatprep.subr.bf16.mxu0 0
  %2858 = vmatpush1.bf16.msra.mxu0 %v2699
  %2859 = vmatprep.subr.bf16.mxu0 0
  %2860 = vmatpush1.bf16.msra.mxu0 %v2700
  %2861 = vmatprep.subr.bf16.mxu0 0
  %2862 = vmatpush1.bf16.msra.mxu0 %v2701
  %2863 = vmatprep.subr.bf16.mxu0 0
  %2864 = vmatpush1.bf16.msra.mxu0 %v2702
  %2865 = vmatprep.subr.bf16.mxu0 0
  %2866 = vmatpush1.bf16.msra.mxu0 %v2703
  %2867 = vmatprep.subr.bf16.mxu0 0
  %2868 = vmatpush1.bf16.msra.mxu0 %v2704
  %2869 = vmatprep.subr.bf16.mxu0 0
  %2870 = vmatpush1.bf16.msra.mxu0 %v2705
  %2871 = vmatprep.subr.bf16.mxu0 0
  %2872 = vmatpush1.bf16.msra.mxu0 %v2706
  %2873 = vmatprep.subr.bf16.mxu0 0
  %2874 = vmatpush1.bf16.msra.mxu0 %v2707
  %2875 = vmatprep.subr.bf16.mxu0 0
  %2876 = vmatpush1.bf16.msra.mxu0 %v2708
  %2877 = vmatprep.subr.bf16.mxu0 0
  %2878 = vmatpush1.bf16.msra.mxu0 %v2709
  %2879 = vmatprep.subr.bf16.mxu0 0
  %2880 = vmatpush1.bf16.msra.mxu0 %v2710
  %2881 = vmatprep.subr.bf16.mxu0 0
  %2882 = vmatpush1.bf16.msra.mxu0 %v2711
  %2883 = vmatprep.subr.bf16.mxu0 0
  %2884 = vmatpush1.bf16.msra.mxu0 %v2712
  %2885 = vmatprep.subr.bf16.mxu0 0
  %2886 = vmatpush1.bf16.msra.mxu0 %v2713
  %2887 = vmatprep.subr.bf16.mxu0 0
  %2888 = vmatpush1.bf16.msra.mxu0 %v2714
  %2889 = vmatprep.mubr.bf16.mxu0 %v2296
  %2890 = vmatmul.mubr.bf16.gmra.mrb[0].mxu0 %v2295
  %v2891 = vpop.f32.mrb[0].mxu0
  %v2892 = vadd.f32 %v2851, %v2891
  %v2893 = vpop.f32.mrb[0].mxu0
  %v2894 = vpop.f32.mrb[0].mxu0
  %v2895 = vadd.f32 %v2854, %v2894
  %v2896 = vpop.f32.mrb[0].mxu0
  %2897 = vdwg.mxu0
  %2898 = vmatprep.subr.bf16.mxu0 0
  %2899 = vmatpush1.bf16.msra.mxu0 %v2715
  %2900 = vmatprep.subr.bf16.mxu0 0
  %2901 = vmatpush1.bf16.msra.mxu0 %v2716
  %2902 = vmatprep.subr.bf16.mxu0 0
  %2903 = vmatpush1.bf16.msra.mxu0 %v2717
  %2904 = vmatprep.subr.bf16.mxu0 0
  %2905 = vmatpush1.bf16.msra.mxu0 %v2718
  %2906 = vmatprep.subr.bf16.mxu0 0
  %2907 = vmatpush1.bf16.msra.mxu0 %v2719
  %2908 = vmatprep.subr.bf16.mxu0 0
  %2909 = vmatpush1.bf16.msra.mxu0 %v2720
  %2910 = vmatprep.subr.bf16.mxu0 0
  %2911 = vmatpush1.bf16.msra.mxu0 %v2721
  %2912 = vmatprep.subr.bf16.mxu0 0
  %2913 = vmatpush1.bf16.msra.mxu0 %v2722
  %2914 = vmatprep.subr.bf16.mxu0 0
  %2915 = vmatpush1.bf16.msra.mxu0 %v2723
  %2916 = vmatprep.subr.bf16.mxu0 0
  %2917 = vmatpush1.bf16.msra.mxu0 %v2724
  %2918 = vmatprep.subr.bf16.mxu0 0
  %2919 = vmatpush1.bf16.msra.mxu0 %v2725
  %2920 = vmatprep.subr.bf16.mxu0 0
  %2921 = vmatpush1.bf16.msra.mxu0 %v2726
  %2922 = vmatprep.subr.bf16.mxu0 0
  %2923 = vmatpush1.bf16.msra.mxu0 %v2727
  %2924 = vmatprep.subr.bf16.mxu0 0
  %2925 = vmatpush1.bf16.msra.mxu0 %v2728
  %2926 = vmatprep.subr.bf16.mxu0 0
  %2927 = vmatpush1.bf16.msra.mxu0 %v2729
  %2928 = vmatprep.subr.bf16.mxu0 0
  %2929 = vmatpush1.bf16.msra.mxu0 %v2730
  %2930 = vmatprep.mubr.bf16.mxu0 %v2298
  %2931 = vmatmul.mubr.bf16.gmra.mrb[0].mxu0 %v2297
  %v2932 = vpop.f32.mrb[0].mxu0
  %v2933 = vadd.f32 %v2892, %v2932
  %v2934 = vpop.f32.mrb[0].mxu0
  %v2935 = vpop.f32.mrb[0].mxu0
  %v2936 = vadd.f32 %v2895, %v2935
  %v2937 = vpop.f32.mrb[0].mxu0
  %2938 = vdwg.mxu0
  %2939 = vmatprep.subr.bf16.mxu0 0
  %2940 = vmatpush1.bf16.msra.mxu0 %v2731
  %2941 = vmatprep.subr.bf16.mxu0 0
  %2942 = vmatpush1.bf16.msra.mxu0 %v2732
  %2943 = vmatprep.subr.bf16.mxu0 0
  %2944 = vmatpush1.bf16.msra.mxu0 %v2733
  %2945 = vmatprep.subr.bf16.mxu0 0
  %2946 = vmatpush1.bf16.msra.mxu0 %v2734
  %2947 = vmatprep.subr.bf16.mxu0 0
  %2948 = vmatpush1.bf16.msra.mxu0 %v2735
  %2949 = vmatprep.subr.bf16.mxu0 0
  %2950 = vmatpush1.bf16.msra.mxu0 %v2736
  %2951 = vmatprep.subr.bf16.mxu0 0
  %2952 = vmatpush1.bf16.msra.mxu0 %v2737
  %2953 = vmatprep.subr.bf16.mxu0 0
  %2954 = vmatpush1.bf16.msra.mxu0 %v2738
  %2955 = vmatprep.subr.bf16.mxu0 0
  %2956 = vmatpush1.bf16.msra.mxu0 %v2739
  %2957 = vmatprep.subr.bf16.mxu0 0
  %2958 = vmatpush1.bf16.msra.mxu0 %v2740
  %2959 = vmatprep.subr.bf16.mxu0 0
  %2960 = vmatpush1.bf16.msra.mxu0 %v2741
  %2961 = vmatprep.subr.bf16.mxu0 0
  %2962 = vmatpush1.bf16.msra.mxu0 %v2742
  %2963 = vmatprep.subr.bf16.mxu0 0
  %2964 = vmatpush1.bf16.msra.mxu0 %v2743
  %2965 = vmatprep.subr.bf16.mxu0 0
  %2966 = vmatpush1.bf16.msra.mxu0 %v2744
  %2967 = vmatprep.subr.bf16.mxu0 0
  %2968 = vmatpush1.bf16.msra.mxu0 %v2814
  %2969 = vmatprep.subr.bf16.mxu0 0
  %2970 = vmatpush1.bf16.msra.mxu0 0
  %2971 = vmatprep.mubr.bf16.mxu0 %v2810
  %2972 = vmatmul.mubr.bf16.gmra.mrb[0].mxu0 %v2299
  %v2973 = vpop.f32.mrb[0].mxu0
  %v2974 = vadd.f32 %v2933, %v2973
  %v2975 = vpop.f32.mrb[0].mxu0
  %v2976 = vpop.f32.mrb[0].mxu0
  %v2977 = vadd.f32 %v2936, %v2976
  %v2978 = vpop.f32.mrb[0].mxu0
  %2979 = vdwg.mxu0
  %v2980 = vtanh.pop %v2974
  %v2981 = vtanh.pop %v2977
  %v2982 = vld [vmem:[%s7] sm:$0x1]
  %v2984 = vlaneseq
  %v2985 = vshrl.u32 %v2984, 7
  %v2986 = vsub.s32 0, %v2985
  %v2987 = vrot.slane %v2982, %v2986
  %v2989 = vmul.f32 %v2980, %v2987
  %v2990 = vmul.f32 %v2981, %v2987
  %2991 = vadd.xlane.f32.xlu0 %v2989
  %v2992 = vpop.xlane.xlu0 %2991
  %2993 = vadd.xlane.f32.xlu0 %v2990
  %v2994 = vpop.xlane.xlu0 %2993
  %v2995 = vld [vmem:[#allocation2] sm:$0x1]
  %v2997 = vlaneseq
  %v2998 = vshrl.u32 %v2997, 7
  %v2999 = vsub.s32 0, %v2998
  %v3000 = vrot.slane %v2995, %v2999
  %v3002 = vadd.f32 %v2992, %v3000
  %v3003 = vadd.f32 %v2994, %v3000
  %vm3004 = vcmask 7168
  %3005 = vst.msk [vmem:[%s9] sm:$0xff] %vm3004, %v3002
  %3006 = vst.msk [vmem:[%s9 + $0x8] sm:$0xff] %vm3004, %v3003
  // Predicated region
  $region38: #{mlp_forward.1} parent=0 // pred_check
    _
  $region39: #{mlp_forward.1} parent=0 // pred_check_branch
    %3008 = sbr.rel (0) target = $region41
  $region40: #{mlp_forward.1} parent=0 // pred_region
    _
  $region41: #{mlp_forward.1} parent=0 // pred_fallthru
    _
  // Predicated region
  $region42: #{mlp_forward.1} parent=0 // pred_check
    _
  $region43: #{mlp_forward.1} parent=0 // pred_check_branch
    %3010 = sbr.rel (0) target = $region45
  $region44: #{mlp_forward.1} parent=0 // pred_region
    _
  $region45: #{mlp_forward.1} parent=0 // pred_fallthru
    _

</llo_original>
